<compile_context>
chip_gen: v7x
topology: tpu7x:2x2x1
jax: 0.10.0
libtpu: 0.0.40
codegen_flags: <defaults>
</compile_context>

<pallas_src>
import functools

import jax
import jax.numpy as jnp
from jax import lax
from jax.experimental import pallas as pl
from jax.experimental.pallas import tpu as pltpu


_SQRT_2_OVER_PI = 0.7978845608028654
_INV_SQRT_2 = 0.7071067811865476


def _gelu_tanh(x):
    # tanh-approximate GELU: transcendental on the EUP slot, only a handful of
    # VALU ops remain.
    x3 = x * x * x
    return 0.5 * x * (1.0 + jnp.tanh(_SQRT_2_OVER_PI * (x + 0.044715 * x3)))


def _gelu_erf(x):
    # PyTorch nn.GELU() default (exact erf).  VALU-heavy erf polynomial; use on
    # v5e or when bit-faithful GELU is required.
    return 0.5 * x * (1.0 + lax.erf(x * _INV_SQRT_2))


_GELU = {"tanh": _gelu_tanh, "erf": _gelu_erf}


def _mlp_kernel(x_ref, w1_ref, c1_ref, w2_ref, c2_ref, w3_ref, b3_ref, o_ref,
                *, gelu_fn):
    # In-kernel bf16 cast of the input tile (cheap VPU pass that hides under
    # the MXU); x stays f32 in HBM -> no wrapper-side convert kernel.
    x = x_ref[...].astype(jnp.bfloat16)

    # block 1: Linear (BN folded into w1/c1) -> [Dropout = id] -> GELU
    h = jnp.dot(x, w1_ref[...], preferred_element_type=jnp.float32) + c1_ref[...]
    h = gelu_fn(h)

    # block 2: Linear (BN folded into w2/c2) -> [Dropout = id] -> GELU
    h = jnp.dot(h.astype(jnp.bfloat16), w2_ref[...],
                preferred_element_type=jnp.float32) + c2_ref[...]
    h = gelu_fn(h)

    # head: Linear
    y = jnp.dot(h.astype(jnp.bfloat16), w3_ref[...],
                preferred_element_type=jnp.float32) + b3_ref[...]

    # F.normalize(dim=1): y / max(||y||, 1e-12) == y * rsqrt(max(sum y^2, 1e-24))
    sumsq = jnp.sum(y * y, axis=1, keepdims=True)
    inv = lax.rsqrt(jnp.maximum(sumsq, 1e-24))
    o_ref[...] = (y * inv).astype(o_ref.dtype)


def _round_up(n, m):
    return ((n + m - 1) // m) * m


def _choose_block_b(B, max_block=512):
    """Batch tile: big enough to amortize the ~0.35us/grid-step overhead,
    small enough for VMEM, at least 2 grid blocks whenever possible (v7x has
    2 TensorCores sharing the parallel axis), and no 16x padding waste for
    tiny batches."""
    bb = min(max_block, _round_up(B, 8))
    if B > 8 and pl.cdiv(B, bb) < 2:
        bb = _round_up(pl.cdiv(B, 2), 8)
    return bb


@functools.partial(jax.jit, static_argnames=("block_b", "gelu"))
def net_embed_mlp(x, params, block_b=None, gelu="tanh"):
    """x: (B, input_dim) float32.  params: dict from fold_params()
    (bf16 weights stored as (in, out), f32 fused biases, BN pre-folded)."""
    B, D_in = x.shape
    H = params["w1"].shape[1]
    D_out = params["w3"].shape[1]

    bb = block_b if block_b is not None else _choose_block_b(B)
    num_blocks = pl.cdiv(B, bb)
    Bp = num_blocks * bb
    if Bp != B:
        # Padded zero rows produce finite garbage embeddings that are sliced
        # off below; do not consume `out` before the [:B] slice.
        x = jnp.pad(x, ((0, Bp - B), (0, 0)))

    # Grid-invariant operands: DMA'd once, stay VMEM-resident across the batch grid.
    full = lambda shape: pl.BlockSpec(shape, lambda i: (0, 0))

    grid_spec = pltpu.PrefetchScalarGridSpec(
        num_scalar_prefetch=0,
        grid=(num_blocks,),
        in_specs=[
            pl.BlockSpec((bb, D_in), lambda i: (i, 0)),   # x (batch tiled, f32)
            full((D_in, H)), full((1, H)),                # layer1 (w, fused bias)
            full((H, H)),    full((1, H)),                # layer2 (w, fused bias)
            full((H, D_out)), full((1, D_out)),           # layer3 (w, bias)
        ],
        out_specs=pl.BlockSpec((bb, D_out), lambda i: (i, 0)),
    )

    weight_bytes = 2 * (D_in * H + H * H + H * D_out) + 4 * (2 * H + D_out)
    cost = pl.CostEstimate(
        flops=2 * Bp * (D_in * H + H * H + H * D_out),
        transcendentals=2 * Bp * H,                       # two GELUs
        bytes_accessed=Bp * D_in * 4 + Bp * D_out * 4 + weight_bytes,
    )

    out = pl.pallas_call(
        functools.partial(_mlp_kernel, gelu_fn=_GELU[gelu]),
        out_shape=jax.ShapeDtypeStruct((Bp, D_out), jnp.float32),
        grid_spec=grid_spec,
        compiler_params=pltpu.CompilerParams(
            dimension_semantics=("parallel",),
            vmem_limit_bytes=32 * 1024 * 1024,  # actual footprint ~14 MiB at bb=512
        ),
        cost_estimate=cost,
    )(x,
      params["w1"], params["c1"],
      params["w2"], params["c2"],
      params["w3"], params["b3"])

    return out[:B]


# ----------------------------------------------------------------------------
# Parameter construction (synthetic, deterministic) and offline BN folding.
# ----------------------------------------------------------------------------

def init_raw_params(key, input_dim=1280, hidden_dim=512, out_dim=256):
    """Synthetic eval-mode parameters mirroring the PyTorch module.  Linear
    weights are stored as (in, out); a real torch checkpoint's (out, in)
    weight would be transposed first.  The two BatchNorm1d layers have
    independent (gamma, beta, running_mean, running_var)."""
    ks = jax.random.split(key, 14)

    def lin(kw, kb, fan_in, fan_out):
        bound = float(fan_in) ** -0.5
        w = jax.random.uniform(kw, (fan_in, fan_out), jnp.float32, -bound, bound)
        b = jax.random.uniform(kb, (fan_out,), jnp.float32, -bound, bound)
        return w, b

    def bn(kg, kb, km, kv, n):
        gamma = jax.random.uniform(kg, (n,), jnp.float32, 0.5, 1.5)
        beta = 0.1 * jax.random.normal(kb, (n,), jnp.float32)
        mean = 0.1 * jax.random.normal(km, (n,), jnp.float32)
        var = jax.random.uniform(kv, (n,), jnp.float32, 0.5, 1.5)
        return gamma, beta, mean, var

    w1, b1 = lin(ks[0], ks[1], input_dim, hidden_dim)
    g1, be1, m1, v1 = bn(ks[2], ks[3], ks[4], ks[5], hidden_dim)
    w2, b2 = lin(ks[6], ks[7], hidden_dim, hidden_dim)
    g2, be2, m2, v2 = bn(ks[8], ks[9], ks[10], ks[11], hidden_dim)
    w3, b3 = lin(ks[12], ks[13], hidden_dim, out_dim)

    return dict(w1=w1, b1=b1, g1=g1, be1=be1, m1=m1, v1=v1,
                w2=w2, b2=b2, g2=g2, be2=be2, m2=m2, v2=v2,
                w3=w3, b3=b3)


def fold_params(raw, bn_eps=1e-5):
    """Fold each BatchNorm1d (eval mode) into its preceding Linear, each with
    its OWN statistics.  Weights -> bf16 (in, out); fused biases -> f32."""
    def fold(w, b, g, beta, m, v):
        scale = g / jnp.sqrt(v + bn_eps)
        shift = beta - m * scale
        wf = (w * scale[None, :]).astype(jnp.bfloat16)
        c = (b * scale + shift)[None, :].astype(jnp.float32)
        return wf, c

    w1, c1 = fold(raw["w1"], raw["b1"], raw["g1"], raw["be1"], raw["m1"], raw["v1"])
    w2, c2 = fold(raw["w2"], raw["b2"], raw["g2"], raw["be2"], raw["m2"], raw["v2"])
    w3 = raw["w3"].astype(jnp.bfloat16)
    b3 = raw["b3"][None, :].astype(jnp.float32)
    return dict(w1=w1, c1=c1, w2=w2, c2=c2, w3=w3, b3=b3)


def _reference(x, raw, bn_eps=1e-5):
    """Pure-JAX f32 reference of the PyTorch module's eval-mode forward
    (exact-erf GELU, un-folded per-layer BN, no quantization)."""
    def bn(h, g, beta, m, v):
        return (h - m) / jnp.sqrt(v + bn_eps) * g + beta

    h = x @ raw["w1"] + raw["b1"]
    h = jax.nn.gelu(bn(h, raw["g1"], raw["be1"], raw["m1"], raw["v1"]),
                    approximate=False)
    h = h @ raw["w2"] + raw["b2"]
    h = jax.nn.gelu(bn(h, raw["g2"], raw["be2"], raw["m2"], raw["v2"]),
                    approximate=False)
    y = h @ raw["w3"] + raw["b3"]
    n = jnp.sqrt(jnp.sum(y * y, axis=1, keepdims=True))
    return y / jnp.maximum(n, 1e-12)


if __name__ == "__main__":
    key = jax.random.PRNGKey(0)
    k_x, k_p = jax.random.split(key)

    B, D_IN, HID, D_OUT = 16, 1280, 512, 256
    x = jax.random.normal(k_x, (B, D_IN), jnp.float32)
    raw = init_raw_params(k_p, D_IN, HID, D_OUT)
    params = fold_params(raw)

    ref = _reference(x, raw)

    # Default fast path (tanh-GELU on the EUP) and exact-erf path.
    out = jax.block_until_ready(net_embed_mlp(x, params))
    out_exact = jax.block_until_ready(net_embed_mlp(x, params, gelu="erf"))

    for o in (out, out_exact):
        assert o.shape == (B, D_OUT)
        assert bool(jnp.all(jnp.isfinite(o)))
        # rows must be unit-norm (F.normalize(dim=1))
        assert bool(jnp.allclose(jnp.linalg.norm(o, axis=1), 1.0, atol=1e-3))
        # matches the f32 eval-mode reference up to bf16 weight/activation
        # quantization (+ tanh-GELU approximation on the default path)
        assert bool(jnp.allclose(o, ref, atol=2e-2)), \
            float(jnp.max(jnp.abs(o - ref)))
        cos = jnp.sum(o * ref, axis=1)
        assert bool(jnp.all(cos > 0.999)), float(jnp.min(cos))

    print("KERNEL_OK")
</pallas_src>

<mosaic_0001>
module attributes {stable_mosaic.version = 11 : i64} {
  func.func @_mlp_kernel(%arg0: i32, %arg1: memref<8x1280xf32, #tpu.memory_space<vmem>>, %arg2: memref<1280x512xbf16, #tpu.memory_space<vmem>>, %arg3: memref<1x512xf32, #tpu.memory_space<vmem>>, %arg4: memref<512x512xbf16, #tpu.memory_space<vmem>>, %arg5: memref<1x512xf32, #tpu.memory_space<vmem>>, %arg6: memref<512x256xbf16, #tpu.memory_space<vmem>>, %arg7: memref<1x256xf32, #tpu.memory_space<vmem>>, %arg8: memref<8x256xf32, #tpu.memory_space<vmem>>) attributes {dimension_semantics = [#tpu.dimension_semantics<parallel>], iteration_bounds = array<i64: 2>, scalar_prefetch = 0 : i64, scratch_operands = 0 : i64, tpu.core_type = #tpu.core_type<tc>, window_params = [{transform_indices = @transform_0, window_bounds = array<i64: 8, 1280>}, {pipeline_mode = #tpu.pipeline_mode<synchronous>, transform_indices = @transform_1, window_bounds = array<i64: 1280, 512>}, {pipeline_mode = #tpu.pipeline_mode<synchronous>, transform_indices = @transform_2, window_bounds = array<i64: 1, 512>}, {pipeline_mode = #tpu.pipeline_mode<synchronous>, transform_indices = @transform_3, window_bounds = array<i64: 512, 512>}, {pipeline_mode = #tpu.pipeline_mode<synchronous>, transform_indices = @transform_4, window_bounds = array<i64: 1, 512>}, {pipeline_mode = #tpu.pipeline_mode<synchronous>, transform_indices = @transform_5, window_bounds = array<i64: 512, 256>}, {pipeline_mode = #tpu.pipeline_mode<synchronous>, transform_indices = @transform_6, window_bounds = array<i64: 1, 256>}, {transform_indices = @transform_7, window_bounds = array<i64: 8, 256>}]} {
    %c0 = arith.constant 0 : index
    %c0_0 = arith.constant 0 : index
    %0 = vector.load %arg1[%c0, %c0_0] : memref<8x1280xf32, #tpu.memory_space<vmem>>, vector<8x1280xf32>
    %1 = arith.truncf %0 : vector<8x1280xf32> to vector<8x1280xbf16>
    %c0_1 = arith.constant 0 : index
    %c0_2 = arith.constant 0 : index
    %2 = vector.load %arg2[%c0_1, %c0_2] : memref<1280x512xbf16, #tpu.memory_space<vmem>>, vector<1280x512xbf16>
    %cst = arith.constant dense<0.000000e+00> : vector<8x512xf32>
    %3 = tpu.matmul %1, %2, %cst {dimension_numbers = #tpu.dot_dimension_numbers<[1], [0], [0], [1], [0, 0, 1, 1], [], []>} : vector<8x1280xbf16>, vector<1280x512xbf16>, vector<8x512xf32> -> vector<8x512xf32>
    %c0_3 = arith.constant 0 : index
    %c0_4 = arith.constant 0 : index
    %4 = vector.load %arg3[%c0_3, %c0_4] : memref<1x512xf32, #tpu.memory_space<vmem>>, vector<1x512xf32>
    %5 = vector.broadcast %4 : vector<1x512xf32> to vector<8x512xf32>
    %6 = arith.addf %3, %5 : vector<8x512xf32>
    %7 = arith.mulf %6, %6 : vector<8x512xf32>
    %8 = arith.mulf %7, %6 : vector<8x512xf32>
    %cst_5 = arith.constant 5.000000e-01 : f32
    %9 = vector.broadcast %cst_5 : f32 to vector<8x512xf32>
    %10 = arith.mulf %9, %6 : vector<8x512xf32>
    %cst_6 = arith.constant 4.471500e-02 : f32
    %11 = vector.broadcast %cst_6 : f32 to vector<8x512xf32>
    %12 = arith.mulf %11, %8 : vector<8x512xf32>
    %13 = arith.addf %6, %12 : vector<8x512xf32>
    %cst_7 = arith.constant 0.797884583 : f32
    %14 = vector.broadcast %cst_7 : f32 to vector<8x512xf32>
    %15 = arith.mulf %14, %13 : vector<8x512xf32>
    %16 = math.tanh %15 : vector<8x512xf32>
    %cst_8 = arith.constant 1.000000e+00 : f32
    %17 = vector.broadcast %cst_8 : f32 to vector<8x512xf32>
    %18 = arith.addf %17, %16 : vector<8x512xf32>
    %19 = arith.mulf %10, %18 : vector<8x512xf32>
    %20 = arith.truncf %19 : vector<8x512xf32> to vector<8x512xbf16>
    %c0_9 = arith.constant 0 : index
    %c0_10 = arith.constant 0 : index
    %21 = vector.load %arg4[%c0_9, %c0_10] : memref<512x512xbf16, #tpu.memory_space<vmem>>, vector<512x512xbf16>
    %cst_11 = arith.constant dense<0.000000e+00> : vector<8x512xf32>
    %22 = tpu.matmul %20, %21, %cst_11 {dimension_numbers = #tpu.dot_dimension_numbers<[1], [0], [0], [1], [0, 0, 1, 1], [], []>} : vector<8x512xbf16>, vector<512x512xbf16>, vector<8x512xf32> -> vector<8x512xf32>
    %c0_12 = arith.constant 0 : index
    %c0_13 = arith.constant 0 : index
    %23 = vector.load %arg5[%c0_12, %c0_13] : memref<1x512xf32, #tpu.memory_space<vmem>>, vector<1x512xf32>
    %24 = vector.broadcast %23 : vector<1x512xf32> to vector<8x512xf32>
    %25 = arith.addf %22, %24 : vector<8x512xf32>
    %26 = arith.mulf %25, %25 : vector<8x512xf32>
    %27 = arith.mulf %26, %25 : vector<8x512xf32>
    %cst_14 = arith.constant 5.000000e-01 : f32
    %28 = vector.broadcast %cst_14 : f32 to vector<8x512xf32>
    %29 = arith.mulf %28, %25 : vector<8x512xf32>
    %cst_15 = arith.constant 4.471500e-02 : f32
    %30 = vector.broadcast %cst_15 : f32 to vector<8x512xf32>
    %31 = arith.mulf %30, %27 : vector<8x512xf32>
    %32 = arith.addf %25, %31 : vector<8x512xf32>
    %cst_16 = arith.constant 0.797884583 : f32
    %33 = vector.broadcast %cst_16 : f32 to vector<8x512xf32>
    %34 = arith.mulf %33, %32 : vector<8x512xf32>
    %35 = math.tanh %34 : vector<8x512xf32>
    %cst_17 = arith.constant 1.000000e+00 : f32
    %36 = vector.broadcast %cst_17 : f32 to vector<8x512xf32>
    %37 = arith.addf %36, %35 : vector<8x512xf32>
    %38 = arith.mulf %29, %37 : vector<8x512xf32>
    %39 = arith.truncf %38 : vector<8x512xf32> to vector<8x512xbf16>
    %c0_18 = arith.constant 0 : index
    %c0_19 = arith.constant 0 : index
    %40 = vector.load %arg6[%c0_18, %c0_19] : memref<512x256xbf16, #tpu.memory_space<vmem>>, vector<512x256xbf16>
    %cst_20 = arith.constant dense<0.000000e+00> : vector<8x256xf32>
    %41 = tpu.matmul %39, %40, %cst_20 {dimension_numbers = #tpu.dot_dimension_numbers<[1], [0], [0], [1], [0, 0, 1, 1], [], []>} : vector<8x512xbf16>, vector<512x256xbf16>, vector<8x256xf32> -> vector<8x256xf32>
    %c0_21 = arith.constant 0 : index
    %c0_22 = arith.constant 0 : index
    %42 = vector.load %arg7[%c0_21, %c0_22] : memref<1x256xf32, #tpu.memory_space<vmem>>, vector<1x256xf32>
    %43 = vector.broadcast %42 : vector<1x256xf32> to vector<8x256xf32>
    %44 = arith.addf %41, %43 : vector<8x256xf32>
    %45 = arith.mulf %44, %44 : vector<8x256xf32>
    %cst_23 = arith.constant dense<0.000000e+00> : vector<8xf32>
    %46 = vector.multi_reduction <add>, %45, %cst_23 [1] : vector<8x256xf32> to vector<8xf32>
    %47 = vector.shape_cast %46 : vector<8xf32> to vector<8x1xf32>
    %cst_24 = arith.constant 1.000000e-24 : f32
    %48 = vector.broadcast %cst_24 : f32 to vector<8x1xf32>
    %49 = arith.maximumf %47, %48 : vector<8x1xf32>
    %50 = math.rsqrt %49 : vector<8x1xf32>
    %51 = vector.broadcast %50 : vector<8x1xf32> to vector<8x256xf32>
    %52 = arith.mulf %44, %51 : vector<8x256xf32>
    %c0_25 = arith.constant 0 : index
    %c0_26 = arith.constant 0 : index
    %53 = vector.load %arg8[%c0_25, %c0_26] : memref<8x256xf32, #tpu.memory_space<vmem>>, vector<8x256xf32>
    tpu.vector_store %arg8[%c0_25, %c0_26], %52 {strides = array<i32>} : memref<8x256xf32, #tpu.memory_space<vmem>>, vector<8x256xf32>,
    return
  }
  func.func @transform_0(%arg0: i32) -> (i32, i32) {
    %c0_i32 = arith.constant 0 : i32
    %c0_i32_0 = arith.constant 0 : i32
    return %arg0, %c0_i32 : i32, i32
  }
  func.func @transform_1(%arg0: i32) -> (i32, i32) {
    %c0_i32 = arith.constant 0 : i32
    %c0_i32_0 = arith.constant 0 : i32
    %c0_i32_1 = arith.constant 0 : i32
    return %c0_i32, %c0_i32_0 : i32, i32
  }
  func.func @transform_2(%arg0: i32) -> (i32, i32) {
    %c0_i32 = arith.constant 0 : i32
    %c0_i32_0 = arith.constant 0 : i32
    %c0_i32_1 = arith.constant 0 : i32
    return %c0_i32, %c0_i32_0 : i32, i32
  }
  func.func @transform_3(%arg0: i32) -> (i32, i32) {
    %c0_i32 = arith.constant 0 : i32
    %c0_i32_0 = arith.constant 0 : i32
    %c0_i32_1 = arith.constant 0 : i32
    return %c0_i32, %c0_i32_0 : i32, i32
  }
  func.func @transform_4(%arg0: i32) -> (i32, i32) {
    %c0_i32 = arith.constant 0 : i32
    %c0_i32_0 = arith.constant 0 : i32
    %c0_i32_1 = arith.constant 0 : i32
    return %c0_i32, %c0_i32_0 : i32, i32
  }
  func.func @transform_5(%arg0: i32) -> (i32, i32) {
    %c0_i32 = arith.constant 0 : i32
    %c0_i32_0 = arith.constant 0 : i32
    %c0_i32_1 = arith.constant 0 : i32
    return %c0_i32, %c0_i32_0 : i32, i32
  }
  func.func @transform_6(%arg0: i32) -> (i32, i32) {
    %c0_i32 = arith.constant 0 : i32
    %c0_i32_0 = arith.constant 0 : i32
    %c0_i32_1 = arith.constant 0 : i32
    return %c0_i32, %c0_i32_0 : i32, i32
  }
  func.func @transform_7(%arg0: i32) -> (i32, i32) {
    %c0_i32 = arith.constant 0 : i32
    %c0_i32_0 = arith.constant 0 : i32
    return %arg0, %c0_i32 : i32, i32
  }
}

</mosaic_0001>

<llo_original>
// kernel: net_embed_mlp.1
$region0: #{net_embed_mlp.1}
  #allocation0 [shape = 'u32[]', space=smem, size = 0x4, offset = 0x4, fixed_abs, tag = 'smem constant byte address 0x4 - core index']
  #allocation1 [shape = 'u32[144,128]{1,0:T(1,128)}', space=vmem, size = 0x12000, scoped, tag = 'internal scratch']
  %s0 = inlined_call_operand.hbm [shape: f32[16,1280], index: 0, kind: input, shape index: {}]
  %s1 = inlined_call_operand.hbm [shape: bf16[1280,512], index: 1, kind: input, shape index: {}]
  %s2 = inlined_call_operand.hbm [shape: f32[1,512], index: 2, kind: input, shape index: {}]
  %s3 = inlined_call_operand.hbm [shape: bf16[512,512], index: 3, kind: input, shape index: {}]
  %s4 = inlined_call_operand.hbm [shape: f32[1,512], index: 4, kind: input, shape index: {}]
  %s5 = inlined_call_operand.hbm [shape: bf16[512,256], index: 5, kind: input, shape index: {}]
  %s6 = inlined_call_operand.hbm [shape: f32[1,256], index: 6, kind: input, shape index: {}]
  %s7 = inlined_call_operand.hbm [shape: f32[16,256], index: 7, kind: output, shape index: {}]
  %s8 = sld [smem:[#allocation0]]
  $region89: #{net_embed_mlp.1} parent=0
    _
  %s10 = ssub.s32 1, %s8
  %s11 = scalar_select 0, %s10, %s8
  $region1: #{net_embed_mlp.1} parent=0
    #allocation2 [shape = 'u8[81920]{0}', space=vmem, size = 0x14000, scoped, tag = 'input window, operand 0']
    #allocation3 [shape = 's32[2]{0}', space=sflag, size = 0x8, scoped, tag = 'scoped memory for net_embed_mlp.1']
    #allocation4 [shape = 's32[2]{0}', space=sflag, size = 0x8, scoped, tag = 'scoped memory for net_embed_mlp.1']
    #allocation5 [shape = 'u8[1310720]{0}', space=vmem, size = 0x140000, scoped, tag = 'input window, operand 1, single buffered']
    #allocation6 [shape = 's32[1]{0}', space=sflag, size = 0x4, scoped, tag = 'scoped memory for net_embed_mlp.1']
    #allocation7 [shape = 'u8[2048]{0}', space=vmem, size = 0x800, scoped, tag = 'input window, operand 2, single buffered']
    #allocation8 [shape = 'u8[524288]{0}', space=vmem, size = 0x80000, scoped, tag = 'input window, operand 3, single buffered']
    #allocation9 [shape = 's32[1]{0}', space=sflag, size = 0x4, scoped, tag = 'scoped memory for net_embed_mlp.1']
    #allocation10 [shape = 'u8[2048]{0}', space=vmem, size = 0x800, scoped, tag = 'input window, operand 4, single buffered']
    #allocation11 [shape = 'u8[262144]{0}', space=vmem, size = 0x40000, scoped, tag = 'input window, operand 5, single buffered']
    #allocation12 [shape = 's32[1]{0}', space=sflag, size = 0x4, scoped, tag = 'scoped memory for net_embed_mlp.1']
    #allocation13 [shape = 'u8[1024]{0}', space=vmem, size = 0x400, scoped, tag = 'input window, operand 6, single buffered']
    #allocation14 [shape = 'u8[16384]{0}', space=vmem, size = 0x4000, scoped, tag = 'output window, operand 0']
    %12 = vsyncpa [#allocation3], 0
    %s13 = scalar_lea.sflag [#allocation3], 1
    %14 = vsyncpa %s13, 0
    %15 = vsyncpa [#allocation6], 0
    %16 = vsyncpa [#allocation9], 0
    %17 = vsyncpa [#allocation12], 0
    %18 = vsyncpa [#allocation4], 0
    %s19 = scalar_lea.sflag [#allocation4], 1
    %20 = vsyncpa %s19, 0
    loop: start=0, step=1, limit=4
    $region2: #{net_embed_mlp.1} parent=1 // loop_pre_header
      _
    $region3: #{net_embed_mlp.1} parent=1 // loop_header
      %s22 = sphi 0, %s26
      %p23 = scmp.ge.s32.totalorder %s22, 4
      %s32 = sphi 0, %s34
      %s35 = sphi 0, %s32
      %s36 = sphi 0, %s35
      %s52 = sphi 0, %s36
      %s56 = sphi 0, %s56
      %s58 = sphi 0, %s56
      %s59 = sphi 0, %s58
      %s73 = sphi 0, %s59
      %s77 = sphi 0, %s77
      %s79 = sphi 0, %s77
      %s80 = sphi 0, %s79
      %s94 = sphi 0, %s80
      %s98 = sphi 0, %s98
      %s100 = sphi 0, %s98
      %s101 = sphi 0, %s100
      %s115 = sphi 0, %s101
      %s119 = sphi 0, %s119
      %s121 = sphi 0, %s119
      %s122 = sphi 0, %s121
      %s136 = sphi 0, %s122
      %s140 = sphi 0, %s140
      %s142 = sphi 0, %s140
      %s143 = sphi 0, %s142
      %s157 = sphi 0, %s143
      %s161 = sphi 0, %s161
      %s163 = sphi 0, %s161
      %s164 = sphi 0, %s163
      %s178 = sphi 0, %s164
      %s184 = sphi 0, %s186
      %s187 = sphi 0, %s184
      %s188 = sphi 0, %s187
      %s204 = sphi 0, %s188
    $region4: #{net_embed_mlp.1} parent=1 // loop_header_branch
      %25 = sbr.rel (%p23) target = $region8
    $region5: #{net_embed_mlp.1} parent=1 // loop_body
      %s27 = ssub.s32 %s22, 1
      %s28 = ssub.s32 %s22, 2
      %s29 = sadd.s32 %s22, 1
      %s30 = ssub.s32 %s22, %s29
      %p31 = scmp.eq.s32.totalorder %s30, 0
      %s33 = sadd.s32 %s32, 1
      %s34 = scalar_select %p31, %s32, %s33
      %p37 = pneg %p31
      %p38 = scmp.eq.s32.totalorder %s22, 1
      %p39 = por %p37, %p38
      %p40 = scmp.ne.s32.totalorder %s32, %s35
      %p41 = scmp.eq.s32.totalorder %s22, 0
      %p42 = por %p40, %p41
      %p43 = scmp.ne.s32.totalorder %s32, %s35
      %p44 = scmp.eq.s32.totalorder %s27, 1
      %p45 = por %p43, %p44
      %p46 = scmp.ne.s32.totalorder %s35, %s36
      %p47 = scmp.eq.s32.totalorder %s27, 0
      %p48 = por %p46, %p47
      %p49 = scmp.ne.s32.totalorder %s35, %s36
      %p50 = scmp.eq.s32.totalorder %s28, 1
      %p51 = por %p49, %p50
      %p53 = scmp.ne.s32.totalorder %s36, %s52
      %p54 = scmp.eq.s32.totalorder %s28, 0
      %p55 = por %p53, %p54
      %s57 = sadd.s32 %s56, 1
      %p60 = scmp.eq.s32.totalorder %s22, 1
      %p61 = scmp.ne.s32.totalorder %s56, %s58
      %p62 = scmp.eq.s32.totalorder %s22, 0
      %p63 = por %p61, %p62
      %p64 = scmp.ne.s32.totalorder %s56, %s58
      %p65 = scmp.eq.s32.totalorder %s27, 1
      %p66 = por %p64, %p65
      %p67 = scmp.ne.s32.totalorder %s58, %s59
      %p68 = scmp.eq.s32.totalorder %s27, 0
      %p69 = por %p67, %p68
      %p70 = scmp.ne.s32.totalorder %s58, %s59
      %p71 = scmp.eq.s32.totalorder %s28, 1
      %p72 = por %p70, %p71
      %p74 = scmp.ne.s32.totalorder %s59, %s73
      %p75 = scmp.eq.s32.totalorder %s28, 0
      %p76 = por %p74, %p75
      %s78 = sadd.s32 %s77, 1
      %p81 = scmp.eq.s32.totalorder %s22, 1
      %p82 = scmp.ne.s32.totalorder %s77, %s79
      %p83 = scmp.eq.s32.totalorder %s22, 0
      %p84 = por %p82, %p83
      %p85 = scmp.ne.s32.totalorder %s77, %s79
      %p86 = scmp.eq.s32.totalorder %s27, 1
      %p87 = por %p85, %p86
      %p88 = scmp.ne.s32.totalorder %s79, %s80
      %p89 = scmp.eq.s32.totalorder %s27, 0
      %p90 = por %p88, %p89
      %p91 = scmp.ne.s32.totalorder %s79, %s80
      %p92 = scmp.eq.s32.totalorder %s28, 1
      %p93 = por %p91, %p92
      %p95 = scmp.ne.s32.totalorder %s80, %s94
      %p96 = scmp.eq.s32.totalorder %s28, 0
      %p97 = por %p95, %p96
      %s99 = sadd.s32 %s98, 1
      %p102 = scmp.eq.s32.totalorder %s22, 1
      %p103 = scmp.ne.s32.totalorder %s98, %s100
      %p104 = scmp.eq.s32.totalorder %s22, 0
      %p105 = por %p103, %p104
      %p106 = scmp.ne.s32.totalorder %s98, %s100
      %p107 = scmp.eq.s32.totalorder %s27, 1
      %p108 = por %p106, %p107
      %p109 = scmp.ne.s32.totalorder %s100, %s101
      %p110 = scmp.eq.s32.totalorder %s27, 0
      %p111 = por %p109, %p110
      %p112 = scmp.ne.s32.totalorder %s100, %s101
      %p113 = scmp.eq.s32.totalorder %s28, 1
      %p114 = por %p112, %p113
      %p116 = scmp.ne.s32.totalorder %s101, %s115
      %p117 = scmp.eq.s32.totalorder %s28, 0
      %p118 = por %p116, %p117
      %s120 = sadd.s32 %s119, 1
      %p123 = scmp.eq.s32.totalorder %s22, 1
      %p124 = scmp.ne.s32.totalorder %s119, %s121
      %p125 = scmp.eq.s32.totalorder %s22, 0
      %p126 = por %p124, %p125
      %p127 = scmp.ne.s32.totalorder %s119, %s121
      %p128 = scmp.eq.s32.totalorder %s27, 1
      %p129 = por %p127, %p128
      %p130 = scmp.ne.s32.totalorder %s121, %s122
      %p131 = scmp.eq.s32.totalorder %s27, 0
      %p132 = por %p130, %p131
      %p133 = scmp.ne.s32.totalorder %s121, %s122
      %p134 = scmp.eq.s32.totalorder %s28, 1
      %p135 = por %p133, %p134
      %p137 = scmp.ne.s32.totalorder %s122, %s136
      %p138 = scmp.eq.s32.totalorder %s28, 0
      %p139 = por %p137, %p138
      %s141 = sadd.s32 %s140, 1
      %p144 = scmp.eq.s32.totalorder %s22, 1
      %p145 = scmp.ne.s32.totalorder %s140, %s142
      %p146 = scmp.eq.s32.totalorder %s22, 0
      %p147 = por %p145, %p146
      %p148 = scmp.ne.s32.totalorder %s140, %s142
      %p149 = scmp.eq.s32.totalorder %s27, 1
      %p150 = por %p148, %p149
      %p151 = scmp.ne.s32.totalorder %s142, %s143
      %p152 = scmp.eq.s32.totalorder %s27, 0
      %p153 = por %p151, %p152
      %p154 = scmp.ne.s32.totalorder %s142, %s143
      %p155 = scmp.eq.s32.totalorder %s28, 1
      %p156 = por %p154, %p155
      %p158 = scmp.ne.s32.totalorder %s143, %s157
      %p159 = scmp.eq.s32.totalorder %s28, 0
      %p160 = por %p158, %p159
      %s162 = sadd.s32 %s161, 1
      %p165 = scmp.eq.s32.totalorder %s22, 1
      %p166 = scmp.ne.s32.totalorder %s161, %s163
      %p167 = scmp.eq.s32.totalorder %s22, 0
      %p168 = por %p166, %p167
      %p169 = scmp.ne.s32.totalorder %s161, %s163
      %p170 = scmp.eq.s32.totalorder %s27, 1
      %p171 = por %p169, %p170
      %p172 = scmp.ne.s32.totalorder %s163, %s164
      %p173 = scmp.eq.s32.totalorder %s27, 0
      %p174 = por %p172, %p173
      %p175 = scmp.ne.s32.totalorder %s163, %s164
      %p176 = scmp.eq.s32.totalorder %s28, 1
      %p177 = por %p175, %p176
      %p179 = scmp.ne.s32.totalorder %s164, %s178
      %p180 = scmp.eq.s32.totalorder %s28, 0
      %p181 = por %p179, %p180
      %s182 = ssub.s32 %s22, %s29
      %p183 = scmp.eq.s32.totalorder %s182, 0
      %s185 = sadd.s32 %s184, 1
      %s186 = scalar_select %p183, %s184, %s185
      %p189 = pneg %p183
      %p190 = scmp.eq.s32.totalorder %s22, 1
      %p191 = por %p189, %p190
      %p192 = scmp.ne.s32.totalorder %s184, %s187
      %p193 = scmp.eq.s32.totalorder %s22, 0
      %p194 = por %p192, %p193
      %p195 = scmp.ne.s32.totalorder %s184, %s187
      %p196 = scmp.eq.s32.totalorder %s27, 1
      %p197 = por %p195, %p196
      %p198 = scmp.ne.s32.totalorder %s187, %s188
      %p199 = scmp.eq.s32.totalorder %s27, 0
      %p200 = por %p198, %p199
      %p201 = scmp.ne.s32.totalorder %s187, %s188
      %p202 = scmp.eq.s32.totalorder %s28, 1
      %p203 = por %p201, %p202
      %p205 = scmp.ne.s32.totalorder %s188, %s204
      %p206 = scmp.eq.s32.totalorder %s28, 0
      %p207 = por %p205, %p206
      %p208 = scmp.le.s32.totalorder 1, %s22
      %p209 = scmp.lt.s32.totalorder %s22, 3
      %p210 = pnand %p208, %p209
      %p211 = pneg %p210
      // Predicated region
      $region9: #{net_embed_mlp.1} parent=5 // pred_check
        _
      $region10: #{net_embed_mlp.1} parent=5 // pred_check_branch
        %213 = sbr.rel (%p210) target = $region12
      $region11: #{net_embed_mlp.1} parent=5 // pred_region
        %s214 = ssub.s32 %s22, 1
        // Predicated region
        $region13: #{net_embed_mlp.1} parent=11 // pred_check
          %p215 = pneg %p69
        $region14: #{net_embed_mlp.1} parent=11 // pred_check_branch
          %217 = sbr.rel (%p215) target = $region16
        $region15: #{net_embed_mlp.1} parent=11 // pred_region
          %s219 = ssub.s32 40960, 40960
          %220 = vsyncadd [#allocation6], %s219
          %s221 = sshll.u32 [#allocation5], 4
          %s222 = int_to_ptr.vmem [resolvable:$true] %s221
          %227 = dma.hbm_to_vmem [thread:$0]  %s1, 40960, %s222, [#allocation6], 256, 256, 16
        $region16: #{net_embed_mlp.1} parent=11 // pred_fallthru
          _
        // Predicated region
        $region17: #{net_embed_mlp.1} parent=11 // pred_check
          %p228 = pneg %p90
        $region18: #{net_embed_mlp.1} parent=11 // pred_check_branch
          %230 = sbr.rel (%p228) target = $region20
        $region19: #{net_embed_mlp.1} parent=11 // pred_region
          %s232 = ssub.s32 64, 64
          %233 = vsyncadd [#allocation6], %s232
          %s235 = sshll.u32 [#allocation7], 4
          %s236 = int_to_ptr.vmem [resolvable:$true] %s235
          %238 = dma.hbm_to_vmem [thread:$0]  %s2, 64, %s236, [#allocation6]
        $region20: #{net_embed_mlp.1} parent=11 // pred_fallthru
          _
        // Predicated region
        $region21: #{net_embed_mlp.1} parent=11 // pred_check
          %p239 = pneg %p111
        $region22: #{net_embed_mlp.1} parent=11 // pred_check_branch
          %241 = sbr.rel (%p239) target = $region24
        $region23: #{net_embed_mlp.1} parent=11 // pred_region
          %s243 = ssub.s32 16384, 16384
          %244 = vsyncadd [#allocation9], %s243
          %s245 = sshll.u32 [#allocation8], 4
          %s246 = int_to_ptr.vmem [resolvable:$true] %s245
          %251 = dma.hbm_to_vmem [thread:$0]  %s3, 16384, %s246, [#allocation9], 256, 256, 16
        $region24: #{net_embed_mlp.1} parent=11 // pred_fallthru
          _
        // Predicated region
        $region25: #{net_embed_mlp.1} parent=11 // pred_check
          %p252 = pneg %p132
        $region26: #{net_embed_mlp.1} parent=11 // pred_check_branch
          %254 = sbr.rel (%p252) target = $region28
        $region27: #{net_embed_mlp.1} parent=11 // pred_region
          %s256 = ssub.s32 64, 64
          %257 = vsyncadd [#allocation9], %s256
          %s259 = sshll.u32 [#allocation10], 4
          %s260 = int_to_ptr.vmem [resolvable:$true] %s259
          %262 = dma.hbm_to_vmem [thread:$0]  %s4, 64, %s260, [#allocation9]
        $region28: #{net_embed_mlp.1} parent=11 // pred_fallthru
          _
        // Predicated region
        $region29: #{net_embed_mlp.1} parent=11 // pred_check
          %p263 = pneg %p153
        $region30: #{net_embed_mlp.1} parent=11 // pred_check_branch
          %265 = sbr.rel (%p263) target = $region32
        $region31: #{net_embed_mlp.1} parent=11 // pred_region
          %s267 = ssub.s32 8192, 8192
          %268 = vsyncadd [#allocation12], %s267
          %s269 = sshll.u32 [#allocation11], 4
          %s270 = int_to_ptr.vmem [resolvable:$true] %s269
          %275 = dma.hbm_to_vmem [thread:$0]  %s5, 8192, %s270, [#allocation12], 128, 128, 8
        $region32: #{net_embed_mlp.1} parent=11 // pred_fallthru
          _
        // Predicated region
        $region33: #{net_embed_mlp.1} parent=11 // pred_check
          %p276 = pneg %p174
        $region34: #{net_embed_mlp.1} parent=11 // pred_check_branch
          %278 = sbr.rel (%p276) target = $region36
        $region35: #{net_embed_mlp.1} parent=11 // pred_region
          %s280 = ssub.s32 32, 32
          %281 = vsyncadd [#allocation12], %s280
          %s283 = sshll.u32 [#allocation13], 4
          %s284 = int_to_ptr.vmem [resolvable:$true] %s283
          %286 = dma.hbm_to_vmem [thread:$0]  %s6, 32, %s284, [#allocation12]
        $region36: #{net_embed_mlp.1} parent=11 // pred_fallthru
          _
      $region12: #{net_embed_mlp.1} parent=5 // pred_fallthru
        _
      %p287 = scmp.lt.s32.totalorder %s22, 2
      // Predicated region
      $region37: #{net_embed_mlp.1} parent=5 // pred_check
        %p288 = pneg %p287
      $region38: #{net_embed_mlp.1} parent=5 // pred_check_branch
        %290 = sbr.rel (%p288) target = $region40
      $region39: #{net_embed_mlp.1} parent=5 // pred_region
        // Predicated region
        $region41: #{net_embed_mlp.1} parent=39 // pred_check
          %p291 = pneg %p42
        $region42: #{net_embed_mlp.1} parent=39 // pred_check_branch
          %293 = sbr.rel (%p291) target = $region44
        $region43: #{net_embed_mlp.1} parent=39 // pred_region
          %s294 = sand.u32 %s32, 1
          %s295 = scalar_lea.sflag [#allocation3], %s294
          %s296 = sand.u32 %s32, 1
          %s297 = smul.addr %s296, 80
          %s298 = scalar_lea.vmem [#allocation2], %s297
          %s300 = ssub.s32 1280, 1280
          %301 = vsyncadd %s295, %s300
          %s302 = smul.addr %s22, 10
          %s303 = smul.addr %s302, 128
          %s304 = scalar_lea.hbm %s0, %s303
          %s306 = sshll.u32 %s298, 4
          %s307 = int_to_ptr.vmem [resolvable:$true] %s306
          %309 = dma.hbm_to_vmem [thread:$0]  %s304, 1280, %s307, %s295
        $region44: #{net_embed_mlp.1} parent=39 // pred_fallthru
          _
      $region40: #{net_embed_mlp.1} parent=5 // pred_fallthru
        _
      %p310 = scmp.le.s32.totalorder 1, %s22
      %p311 = scmp.lt.s32.totalorder %s22, 3
      %p312 = pnand %p310, %p311
      %p313 = pneg %p312
      // Predicated region
      $region45: #{net_embed_mlp.1} parent=5 // pred_check
        _
      $region46: #{net_embed_mlp.1} parent=5 // pred_check_branch
        %315 = sbr.rel (%p312) target = $region48
      $region47: #{net_embed_mlp.1} parent=5 // pred_region
        %s316 = ssub.s32 %s22, 1
        %s317 = sand.u32 %s35, 1
        %s318 = scalar_lea.sflag [#allocation3], %s317
        %s319 = sand.u32 %s35, 1
        %s320 = smul.addr %s319, 80
        %s321 = scalar_lea.vmem [#allocation2], %s320
        // Predicated region
        $region49: #{net_embed_mlp.1} parent=47 // pred_check
          %p322 = pneg %p48
        $region50: #{net_embed_mlp.1} parent=47 // pred_check_branch
          %324 = sbr.rel (%p322) target = $region52
        $region51: #{net_embed_mlp.1} parent=47 // pred_region
          %325 = dma.done %s318, 1280
        $region52: #{net_embed_mlp.1} parent=47 // pred_fallthru
          _
        // Predicated region
        $region53: #{net_embed_mlp.1} parent=47 // pred_check
          %p326 = pneg %p69
        $region54: #{net_embed_mlp.1} parent=47 // pred_check_branch
          %328 = sbr.rel (%p326) target = $region56
        $region55: #{net_embed_mlp.1} parent=47 // pred_region
          %329 = dma.done [#allocation6], 40960
        $region56: #{net_embed_mlp.1} parent=47 // pred_fallthru
          _
        // Predicated region
        $region57: #{net_embed_mlp.1} parent=47 // pred_check
          %p330 = pneg %p90
        $region58: #{net_embed_mlp.1} parent=47 // pred_check_branch
          %332 = sbr.rel (%p330) target = $region60
        $region59: #{net_embed_mlp.1} parent=47 // pred_region
          %333 = dma.done [#allocation6], 64
        $region60: #{net_embed_mlp.1} parent=47 // pred_fallthru
          _
        // Predicated region
        $region61: #{net_embed_mlp.1} parent=47 // pred_check
          %p334 = pneg %p111
        $region62: #{net_embed_mlp.1} parent=47 // pred_check_branch
          %336 = sbr.rel (%p334) target = $region64
        $region63: #{net_embed_mlp.1} parent=47 // pred_region
          %337 = dma.done [#allocation9], 16384
        $region64: #{net_embed_mlp.1} parent=47 // pred_fallthru
          _
        // Predicated region
        $region65: #{net_embed_mlp.1} parent=47 // pred_check
          %p338 = pneg %p132
        $region66: #{net_embed_mlp.1} parent=47 // pred_check_branch
          %340 = sbr.rel (%p338) target = $region68
        $region67: #{net_embed_mlp.1} parent=47 // pred_region
          %341 = dma.done [#allocation9], 64
        $region68: #{net_embed_mlp.1} parent=47 // pred_fallthru
          _
        // Predicated region
        $region69: #{net_embed_mlp.1} parent=47 // pred_check
          %p342 = pneg %p153
        $region70: #{net_embed_mlp.1} parent=47 // pred_check_branch
          %344 = sbr.rel (%p342) target = $region72
        $region71: #{net_embed_mlp.1} parent=47 // pred_region
          %345 = dma.done [#allocation12], 8192
        $region72: #{net_embed_mlp.1} parent=47 // pred_fallthru
          _
        // Predicated region
        $region73: #{net_embed_mlp.1} parent=47 // pred_check
          %p346 = pneg %p174
        $region74: #{net_embed_mlp.1} parent=47 // pred_check_branch
          %348 = sbr.rel (%p346) target = $region76
        $region75: #{net_embed_mlp.1} parent=47 // pred_region
          %349 = dma.done [#allocation12], 32
        $region76: #{net_embed_mlp.1} parent=47 // pred_fallthru
          _
        %s350 = sand.u32 %s35, 1
        %s351 = scalar_lea.sflag [#allocation3], %s350
        %s352 = sand.u32 %s35, 1
        %s353 = smul.addr %s352, 80
        %s354 = scalar_lea.vmem [#allocation2], %s353
        %p355 = pneg %p48
        %p356 = pneg %p45
        %p357 = pneg %p69
        %p358 = pneg %p66
        %p359 = pneg %p90
        %p360 = pneg %p87
        %p361 = pneg %p111
        %p362 = pneg %p108
        %p363 = pneg %p132
        %p364 = pneg %p129
        %p365 = pneg %p153
        %p366 = pneg %p150
        %p367 = pneg %p174
        %p368 = pneg %p171
        %p369 = pneg %p200
        %p370 = pneg %p197
        %s371 = sand.u32 %s187, 1
        %s372 = scalar_lea.sflag [#allocation4], %s371
        %s373 = sand.u32 %s187, 1
        %s374 = smul.addr %s373, 16
        %s375 = scalar_lea.vmem [#allocation14], %s374
        %v376 = vld [vmem:[%s321] sm:$0xff]
        %v377 = vld [vmem:[%s321 + $0x8] sm:$0xff]
        %v378 = vld [vmem:[%s321 + $0x10] sm:$0xff]
        %v379 = vld [vmem:[%s321 + $0x18] sm:$0xff]
        %v380 = vld [vmem:[%s321 + $0x20] sm:$0xff]
        %v381 = vld [vmem:[%s321 + $0x28] sm:$0xff]
        %v382 = vld [vmem:[%s321 + $0x30] sm:$0xff]
        %v383 = vld [vmem:[%s321 + $0x38] sm:$0xff]
        %v384 = vld [vmem:[%s321 + $0x40] sm:$0xff]
        %v385 = vld [vmem:[%s321 + $0x48] sm:$0xff]
        %v386 = vpack.c.bf16 %v376, %v376
        %v387 = vpack.c.bf16 %v377, %v377
        %v388 = vpack.c.bf16 %v378, %v378
        %v389 = vpack.c.bf16 %v379, %v379
        %v390 = vpack.c.bf16 %v380, %v380
        %v391 = vpack.c.bf16 %v381, %v381
        %v392 = vpack.c.bf16 %v382, %v382
        %v393 = vpack.c.bf16 %v383, %v383
        %v394 = vpack.c.bf16 %v384, %v384
        %v395 = vpack.c.bf16 %v385, %v385
        %v396 = vld [vmem:[#allocation5] sm:$0xff]
        %v397 = vld [vmem:[#allocation5 + $0x8] sm:$0xff]
        %v398 = vld [vmem:[#allocation5 + $0x10] sm:$0xff]
        %v399 = vld [vmem:[#allocation5 + $0x18] sm:$0xff]
        %v400 = vld [vmem:[#allocation5 + $0x20] sm:$0xff]
        %v401 = vld [vmem:[#allocation5 + $0x28] sm:$0xff]
        %v402 = vld [vmem:[#allocation5 + $0x30] sm:$0xff]
        %v403 = vld [vmem:[#allocation5 + $0x38] sm:$0xff]
        %v404 = vld [vmem:[#allocation5 + $0x40] sm:$0xff]
        %v405 = vld [vmem:[#allocation5 + $0x48] sm:$0xff]
        %v406 = vld [vmem:[#allocation5 + $0x50] sm:$0xff]
        %v407 = vld [vmem:[#allocation5 + $0x58] sm:$0xff]
        %v408 = vld [vmem:[#allocation5 + $0x60] sm:$0xff]
        %v409 = vld [vmem:[#allocation5 + $0x68] sm:$0xff]
        %v410 = vld [vmem:[#allocation5 + $0x70] sm:$0xff]
        %v411 = vld [vmem:[#allocation5 + $0x78] sm:$0xff]
        %v412 = vld [vmem:[#allocation5 + $0x80] sm:$0xff]
        %v413 = vld [vmem:[#allocation5 + $0x88] sm:$0xff]
        %v414 = vld [vmem:[#allocation5 + $0x90] sm:$0xff]
        %v415 = vld [vmem:[#allocation5 + $0x98] sm:$0xff]
        %v416 = vld [vmem:[#allocation5 + $0xa0] sm:$0xff]
        %v417 = vld [vmem:[#allocation5 + $0xa8] sm:$0xff]
        %v418 = vld [vmem:[#allocation5 + $0xb0] sm:$0xff]
        %v419 = vld [vmem:[#allocation5 + $0xb8] sm:$0xff]
        %v420 = vld [vmem:[#allocation5 + $0xc0] sm:$0xff]
        %v421 = vld [vmem:[#allocation5 + $0xc8] sm:$0xff]
        %v422 = vld [vmem:[#allocation5 + $0xd0] sm:$0xff]
        %v423 = vld [vmem:[#allocation5 + $0xd8] sm:$0xff]
        %v424 = vld [vmem:[#allocation5 + $0xe0] sm:$0xff]
        %v425 = vld [vmem:[#allocation5 + $0xe8] sm:$0xff]
        %v426 = vld [vmem:[#allocation5 + $0xf0] sm:$0xff]
        %v427 = vld [vmem:[#allocation5 + $0xf8] sm:$0xff]
        %v428 = vld [vmem:[#allocation5 + $0x100] sm:$0xff]
        %v429 = vld [vmem:[#allocation5 + $0x108] sm:$0xff]
        %v430 = vld [vmem:[#allocation5 + $0x110] sm:$0xff]
        %v431 = vld [vmem:[#allocation5 + $0x118] sm:$0xff]
        %v432 = vld [vmem:[#allocation5 + $0x120] sm:$0xff]
        %v433 = vld [vmem:[#allocation5 + $0x128] sm:$0xff]
        %v434 = vld [vmem:[#allocation5 + $0x130] sm:$0xff]
        %v435 = vld [vmem:[#allocation5 + $0x138] sm:$0xff]
        %v436 = vld [vmem:[#allocation5 + $0x140] sm:$0xff]
        %v437 = vld [vmem:[#allocation5 + $0x148] sm:$0xff]
        %v438 = vld [vmem:[#allocation5 + $0x150] sm:$0xff]
        %v439 = vld [vmem:[#allocation5 + $0x158] sm:$0xff]
        %v440 = vld [vmem:[#allocation5 + $0x160] sm:$0xff]
        %v441 = vld [vmem:[#allocation5 + $0x168] sm:$0xff]
        %v442 = vld [vmem:[#allocation5 + $0x170] sm:$0xff]
        %v443 = vld [vmem:[#allocation5 + $0x178] sm:$0xff]
        %v444 = vld [vmem:[#allocation5 + $0x180] sm:$0xff]
        %v445 = vld [vmem:[#allocation5 + $0x188] sm:$0xff]
        %v446 = vld [vmem:[#allocation5 + $0x190] sm:$0xff]
        %v447 = vld [vmem:[#allocation5 + $0x198] sm:$0xff]
        %v448 = vld [vmem:[#allocation5 + $0x1a0] sm:$0xff]
        %v449 = vld [vmem:[#allocation5 + $0x1a8] sm:$0xff]
        %v450 = vld [vmem:[#allocation5 + $0x1b0] sm:$0xff]
        %v451 = vld [vmem:[#allocation5 + $0x1b8] sm:$0xff]
        %v452 = vld [vmem:[#allocation5 + $0x1c0] sm:$0xff]
        %v453 = vld [vmem:[#allocation5 + $0x1c8] sm:$0xff]
        %v454 = vld [vmem:[#allocation5 + $0x1d0] sm:$0xff]
        %v455 = vld [vmem:[#allocation5 + $0x1d8] sm:$0xff]
        %v456 = vld [vmem:[#allocation5 + $0x1e0] sm:$0xff]
        %v457 = vld [vmem:[#allocation5 + $0x1e8] sm:$0xff]
        %v458 = vld [vmem:[#allocation5 + $0x1f0] sm:$0xff]
        %v459 = vld [vmem:[#allocation5 + $0x1f8] sm:$0xff]
        %v460 = vld [vmem:[#allocation5 + $0x200] sm:$0xff]
        %v461 = vld [vmem:[#allocation5 + $0x208] sm:$0xff]
        %v462 = vld [vmem:[#allocation5 + $0x210] sm:$0xff]
        %v463 = vld [vmem:[#allocation5 + $0x218] sm:$0xff]
        %v464 = vld [vmem:[#allocation5 + $0x220] sm:$0xff]
        %v465 = vld [vmem:[#allocation5 + $0x228] sm:$0xff]
        %v466 = vld [vmem:[#allocation5 + $0x230] sm:$0xff]
        %v467 = vld [vmem:[#allocation5 + $0x238] sm:$0xff]
        %v468 = vld [vmem:[#allocation5 + $0x240] sm:$0xff]
        %v469 = vld [vmem:[#allocation5 + $0x248] sm:$0xff]
        %v470 = vld [vmem:[#allocation5 + $0x250] sm:$0xff]
        %v471 = vld [vmem:[#allocation5 + $0x258] sm:$0xff]
        %v472 = vld [vmem:[#allocation5 + $0x260] sm:$0xff]
        %v473 = vld [vmem:[#allocation5 + $0x268] sm:$0xff]
        %v474 = vld [vmem:[#allocation5 + $0x270] sm:$0xff]
        %v475 = vld [vmem:[#allocation5 + $0x278] sm:$0xff]
        %v476 = vld [vmem:[#allocation5 + $0x280] sm:$0xff]
        %v477 = vld [vmem:[#allocation5 + $0x288] sm:$0xff]
        %v478 = vld [vmem:[#allocation5 + $0x290] sm:$0xff]
        %v479 = vld [vmem:[#allocation5 + $0x298] sm:$0xff]
        %v480 = vld [vmem:[#allocation5 + $0x2a0] sm:$0xff]
        %v481 = vld [vmem:[#allocation5 + $0x2a8] sm:$0xff]
        %v482 = vld [vmem:[#allocation5 + $0x2b0] sm:$0xff]
        %v483 = vld [vmem:[#allocation5 + $0x2b8] sm:$0xff]
        %v484 = vld [vmem:[#allocation5 + $0x2c0] sm:$0xff]
        %v485 = vld [vmem:[#allocation5 + $0x2c8] sm:$0xff]
        %v486 = vld [vmem:[#allocation5 + $0x2d0] sm:$0xff]
        %v487 = vld [vmem:[#allocation5 + $0x2d8] sm:$0xff]
        %v488 = vld [vmem:[#allocation5 + $0x2e0] sm:$0xff]
        %v489 = vld [vmem:[#allocation5 + $0x2e8] sm:$0xff]
        %v490 = vld [vmem:[#allocation5 + $0x2f0] sm:$0xff]
        %v491 = vld [vmem:[#allocation5 + $0x2f8] sm:$0xff]
        %v492 = vld [vmem:[#allocation5 + $0x300] sm:$0xff]
        %v493 = vld [vmem:[#allocation5 + $0x308] sm:$0xff]
        %v494 = vld [vmem:[#allocation5 + $0x310] sm:$0xff]
        %v495 = vld [vmem:[#allocation5 + $0x318] sm:$0xff]
        %v496 = vld [vmem:[#allocation5 + $0x320] sm:$0xff]
        %v497 = vld [vmem:[#allocation5 + $0x328] sm:$0xff]
        %v498 = vld [vmem:[#allocation5 + $0x330] sm:$0xff]
        %v499 = vld [vmem:[#allocation5 + $0x338] sm:$0xff]
        %v500 = vld [vmem:[#allocation5 + $0x340] sm:$0xff]
        %v501 = vld [vmem:[#allocation5 + $0x348] sm:$0xff]
        %v502 = vld [vmem:[#allocation5 + $0x350] sm:$0xff]
        %v503 = vld [vmem:[#allocation5 + $0x358] sm:$0xff]
        %v504 = vld [vmem:[#allocation5 + $0x360] sm:$0xff]
        %v505 = vld [vmem:[#allocation5 + $0x368] sm:$0xff]
        %v506 = vld [vmem:[#allocation5 + $0x370] sm:$0xff]
        %v507 = vld [vmem:[#allocation5 + $0x378] sm:$0xff]
        %v508 = vld [vmem:[#allocation5 + $0x380] sm:$0xff]
        %v509 = vld [vmem:[#allocation5 + $0x388] sm:$0xff]
        %v510 = vld [vmem:[#allocation5 + $0x390] sm:$0xff]
        %v511 = vld [vmem:[#allocation5 + $0x398] sm:$0xff]
        %v512 = vld [vmem:[#allocation5 + $0x3a0] sm:$0xff]
        %v513 = vld [vmem:[#allocation5 + $0x3a8] sm:$0xff]
        %v514 = vld [vmem:[#allocation5 + $0x3b0] sm:$0xff]
        %v515 = vld [vmem:[#allocation5 + $0x3b8] sm:$0xff]
        %v516 = vld [vmem:[#allocation5 + $0x3c0] sm:$0xff]
        %v517 = vld [vmem:[#allocation5 + $0x3c8] sm:$0xff]
        %v518 = vld [vmem:[#allocation5 + $0x3d0] sm:$0xff]
        %v519 = vld [vmem:[#allocation5 + $0x3d8] sm:$0xff]
        %v520 = vld [vmem:[#allocation5 + $0x3e0] sm:$0xff]
        %v521 = vld [vmem:[#allocation5 + $0x3e8] sm:$0xff]
        %v522 = vld [vmem:[#allocation5 + $0x3f0] sm:$0xff]
        %v523 = vld [vmem:[#allocation5 + $0x3f8] sm:$0xff]
        %v524 = vld [vmem:[#allocation5 + $0x400] sm:$0xff]
        %v525 = vld [vmem:[#allocation5 + $0x408] sm:$0xff]
        %v526 = vld [vmem:[#allocation5 + $0x410] sm:$0xff]
        %v527 = vld [vmem:[#allocation5 + $0x418] sm:$0xff]
        %v528 = vld [vmem:[#allocation5 + $0x420] sm:$0xff]
        %v529 = vld [vmem:[#allocation5 + $0x428] sm:$0xff]
        %v530 = vld [vmem:[#allocation5 + $0x430] sm:$0xff]
        %v531 = vld [vmem:[#allocation5 + $0x438] sm:$0xff]
        %v532 = vld [vmem:[#allocation5 + $0x440] sm:$0xff]
        %v533 = vld [vmem:[#allocation5 + $0x448] sm:$0xff]
        %v534 = vld [vmem:[#allocation5 + $0x450] sm:$0xff]
        %v535 = vld [vmem:[#allocation5 + $0x458] sm:$0xff]
        %v536 = vld [vmem:[#allocation5 + $0x460] sm:$0xff]
        %v537 = vld [vmem:[#allocation5 + $0x468] sm:$0xff]
        %v538 = vld [vmem:[#allocation5 + $0x470] sm:$0xff]
        %v539 = vld [vmem:[#allocation5 + $0x478] sm:$0xff]
        %v540 = vld [vmem:[#allocation5 + $0x480] sm:$0xff]
        %v541 = vld [vmem:[#allocation5 + $0x488] sm:$0xff]
        %v542 = vld [vmem:[#allocation5 + $0x490] sm:$0xff]
        %v543 = vld [vmem:[#allocation5 + $0x498] sm:$0xff]
        %v544 = vld [vmem:[#allocation5 + $0x4a0] sm:$0xff]
        %v545 = vld [vmem:[#allocation5 + $0x4a8] sm:$0xff]
        %v546 = vld [vmem:[#allocation5 + $0x4b0] sm:$0xff]
        %v547 = vld [vmem:[#allocation5 + $0x4b8] sm:$0xff]
        %v548 = vld [vmem:[#allocation5 + $0x4c0] sm:$0xff]
        %v549 = vld [vmem:[#allocation5 + $0x4c8] sm:$0xff]
        %v550 = vld [vmem:[#allocation5 + $0x4d0] sm:$0xff]
        %v551 = vld [vmem:[#allocation5 + $0x4d8] sm:$0xff]
        %v552 = vld [vmem:[#allocation5 + $0x4e0] sm:$0xff]
        %v553 = vld [vmem:[#allocation5 + $0x4e8] sm:$0xff]
        %v554 = vld [vmem:[#allocation5 + $0x4f0] sm:$0xff]
        %v555 = vld [vmem:[#allocation5 + $0x4f8] sm:$0xff]
        %v556 = vld [vmem:[#allocation5 + $0x500] sm:$0xff]
        %v557 = vld [vmem:[#allocation5 + $0x508] sm:$0xff]
        %v558 = vld [vmem:[#allocation5 + $0x510] sm:$0xff]
        %v559 = vld [vmem:[#allocation5 + $0x518] sm:$0xff]
        %v560 = vld [vmem:[#allocation5 + $0x520] sm:$0xff]
        %v561 = vld [vmem:[#allocation5 + $0x528] sm:$0xff]
        %v562 = vld [vmem:[#allocation5 + $0x530] sm:$0xff]
        %v563 = vld [vmem:[#allocation5 + $0x538] sm:$0xff]
        %v564 = vld [vmem:[#allocation5 + $0x540] sm:$0xff]
        %v565 = vld [vmem:[#allocation5 + $0x548] sm:$0xff]
        %v566 = vld [vmem:[#allocation5 + $0x550] sm:$0xff]
        %v567 = vld [vmem:[#allocation5 + $0x558] sm:$0xff]
        %v568 = vld [vmem:[#allocation5 + $0x560] sm:$0xff]
        %v569 = vld [vmem:[#allocation5 + $0x568] sm:$0xff]
        %v570 = vld [vmem:[#allocation5 + $0x570] sm:$0xff]
        %v571 = vld [vmem:[#allocation5 + $0x578] sm:$0xff]
        %v572 = vld [vmem:[#allocation5 + $0x580] sm:$0xff]
        %v573 = vld [vmem:[#allocation5 + $0x588] sm:$0xff]
        %v574 = vld [vmem:[#allocation5 + $0x590] sm:$0xff]
        %v575 = vld [vmem:[#allocation5 + $0x598] sm:$0xff]
        %v576 = vld [vmem:[#allocation5 + $0x5a0] sm:$0xff]
        %v577 = vld [vmem:[#allocation5 + $0x5a8] sm:$0xff]
        %v578 = vld [vmem:[#allocation5 + $0x5b0] sm:$0xff]
        %v579 = vld [vmem:[#allocation5 + $0x5b8] sm:$0xff]
        %v580 = vld [vmem:[#allocation5 + $0x5c0] sm:$0xff]
        %v581 = vld [vmem:[#allocation5 + $0x5c8] sm:$0xff]
        %v582 = vld [vmem:[#allocation5 + $0x5d0] sm:$0xff]
        %v583 = vld [vmem:[#allocation5 + $0x5d8] sm:$0xff]
        %v584 = vld [vmem:[#allocation5 + $0x5e0] sm:$0xff]
        %v585 = vld [vmem:[#allocation5 + $0x5e8] sm:$0xff]
        %v586 = vld [vmem:[#allocation5 + $0x5f0] sm:$0xff]
        %v587 = vld [vmem:[#allocation5 + $0x5f8] sm:$0xff]
        %v588 = vld [vmem:[#allocation5 + $0x600] sm:$0xff]
        %v589 = vld [vmem:[#allocation5 + $0x608] sm:$0xff]
        %v590 = vld [vmem:[#allocation5 + $0x610] sm:$0xff]
        %v591 = vld [vmem:[#allocation5 + $0x618] sm:$0xff]
        %v592 = vld [vmem:[#allocation5 + $0x620] sm:$0xff]
        %v593 = vld [vmem:[#allocation5 + $0x628] sm:$0xff]
        %v594 = vld [vmem:[#allocation5 + $0x630] sm:$0xff]
        %v595 = vld [vmem:[#allocation5 + $0x638] sm:$0xff]
        %v596 = vld [vmem:[#allocation5 + $0x640] sm:$0xff]
        %v597 = vld [vmem:[#allocation5 + $0x648] sm:$0xff]
        %v598 = vld [vmem:[#allocation5 + $0x650] sm:$0xff]
        %v599 = vld [vmem:[#allocation5 + $0x658] sm:$0xff]
        %v600 = vld [vmem:[#allocation5 + $0x660] sm:$0xff]
        %v601 = vld [vmem:[#allocation5 + $0x668] sm:$0xff]
        %v602 = vld [vmem:[#allocation5 + $0x670] sm:$0xff]
        %v603 = vld [vmem:[#allocation5 + $0x678] sm:$0xff]
        %v604 = vld [vmem:[#allocation5 + $0x680] sm:$0xff]
        %v605 = vld [vmem:[#allocation5 + $0x688] sm:$0xff]
        %v606 = vld [vmem:[#allocation5 + $0x690] sm:$0xff]
        %v607 = vld [vmem:[#allocation5 + $0x698] sm:$0xff]
        %v608 = vld [vmem:[#allocation5 + $0x6a0] sm:$0xff]
        %v609 = vld [vmem:[#allocation5 + $0x6a8] sm:$0xff]
        %v610 = vld [vmem:[#allocation5 + $0x6b0] sm:$0xff]
        %v611 = vld [vmem:[#allocation5 + $0x6b8] sm:$0xff]
        %v612 = vld [vmem:[#allocation5 + $0x6c0] sm:$0xff]
        %v613 = vld [vmem:[#allocation5 + $0x6c8] sm:$0xff]
        %v614 = vld [vmem:[#allocation5 + $0x6d0] sm:$0xff]
        %v615 = vld [vmem:[#allocation5 + $0x6d8] sm:$0xff]
        %v616 = vld [vmem:[#allocation5 + $0x6e0] sm:$0xff]
        %v617 = vld [vmem:[#allocation5 + $0x6e8] sm:$0xff]
        %v618 = vld [vmem:[#allocation5 + $0x6f0] sm:$0xff]
        %v619 = vld [vmem:[#allocation5 + $0x6f8] sm:$0xff]
        %v620 = vld [vmem:[#allocation5 + $0x700] sm:$0xff]
        %v621 = vld [vmem:[#allocation5 + $0x708] sm:$0xff]
        %v622 = vld [vmem:[#allocation5 + $0x710] sm:$0xff]
        %v623 = vld [vmem:[#allocation5 + $0x718] sm:$0xff]
        %v624 = vld [vmem:[#allocation5 + $0x720] sm:$0xff]
        %v625 = vld [vmem:[#allocation5 + $0x728] sm:$0xff]
        %v626 = vld [vmem:[#allocation5 + $0x730] sm:$0xff]
        %v627 = vld [vmem:[#allocation5 + $0x738] sm:$0xff]
        %v628 = vld [vmem:[#allocation5 + $0x740] sm:$0xff]
        %v629 = vld [vmem:[#allocation5 + $0x748] sm:$0xff]
        %v630 = vld [vmem:[#allocation5 + $0x750] sm:$0xff]
        %v631 = vld [vmem:[#allocation5 + $0x758] sm:$0xff]
        %v632 = vld [vmem:[#allocation5 + $0x760] sm:$0xff]
        %v633 = vld [vmem:[#allocation5 + $0x768] sm:$0xff]
        %v634 = vld [vmem:[#allocation5 + $0x770] sm:$0xff]
        %v635 = vld [vmem:[#allocation5 + $0x778] sm:$0xff]
        %v636 = vld [vmem:[#allocation5 + $0x780] sm:$0xff]
        %v637 = vld [vmem:[#allocation5 + $0x788] sm:$0xff]
        %v638 = vld [vmem:[#allocation5 + $0x790] sm:$0xff]
        %v639 = vld [vmem:[#allocation5 + $0x798] sm:$0xff]
        %v640 = vld [vmem:[#allocation5 + $0x7a0] sm:$0xff]
        %v641 = vld [vmem:[#allocation5 + $0x7a8] sm:$0xff]
        %v642 = vld [vmem:[#allocation5 + $0x7b0] sm:$0xff]
        %v643 = vld [vmem:[#allocation5 + $0x7b8] sm:$0xff]
        %v644 = vld [vmem:[#allocation5 + $0x7c0] sm:$0xff]
        %v645 = vld [vmem:[#allocation5 + $0x7c8] sm:$0xff]
        %v646 = vld [vmem:[#allocation5 + $0x7d0] sm:$0xff]
        %v647 = vld [vmem:[#allocation5 + $0x7d8] sm:$0xff]
        %v648 = vld [vmem:[#allocation5 + $0x7e0] sm:$0xff]
        %v649 = vld [vmem:[#allocation5 + $0x7e8] sm:$0xff]
        %v650 = vld [vmem:[#allocation5 + $0x7f0] sm:$0xff]
        %v651 = vld [vmem:[#allocation5 + $0x7f8] sm:$0xff]
        %v652 = vld [vmem:[#allocation5 + $0x800] sm:$0xff]
        %v653 = vld [vmem:[#allocation5 + $0x808] sm:$0xff]
        %v654 = vld [vmem:[#allocation5 + $0x810] sm:$0xff]
        %v655 = vld [vmem:[#allocation5 + $0x818] sm:$0xff]
        %v656 = vld [vmem:[#allocation5 + $0x820] sm:$0xff]
        %v657 = vld [vmem:[#allocation5 + $0x828] sm:$0xff]
        %v658 = vld [vmem:[#allocation5 + $0x830] sm:$0xff]
        %v659 = vld [vmem:[#allocation5 + $0x838] sm:$0xff]
        %v660 = vld [vmem:[#allocation5 + $0x840] sm:$0xff]
        %v661 = vld [vmem:[#allocation5 + $0x848] sm:$0xff]
        %v662 = vld [vmem:[#allocation5 + $0x850] sm:$0xff]
        %v663 = vld [vmem:[#allocation5 + $0x858] sm:$0xff]
        %v664 = vld [vmem:[#allocation5 + $0x860] sm:$0xff]
        %v665 = vld [vmem:[#allocation5 + $0x868] sm:$0xff]
        %v666 = vld [vmem:[#allocation5 + $0x870] sm:$0xff]
        %v667 = vld [vmem:[#allocation5 + $0x878] sm:$0xff]
        %v668 = vld [vmem:[#allocation5 + $0x880] sm:$0xff]
        %v669 = vld [vmem:[#allocation5 + $0x888] sm:$0xff]
        %v670 = vld [vmem:[#allocation5 + $0x890] sm:$0xff]
        %v671 = vld [vmem:[#allocation5 + $0x898] sm:$0xff]
        %v672 = vld [vmem:[#allocation5 + $0x8a0] sm:$0xff]
        %v673 = vld [vmem:[#allocation5 + $0x8a8] sm:$0xff]
        %v674 = vld [vmem:[#allocation5 + $0x8b0] sm:$0xff]
        %v675 = vld [vmem:[#allocation5 + $0x8b8] sm:$0xff]
        %v676 = vld [vmem:[#allocation5 + $0x8c0] sm:$0xff]
        %v677 = vld [vmem:[#allocation5 + $0x8c8] sm:$0xff]
        %v678 = vld [vmem:[#allocation5 + $0x8d0] sm:$0xff]
        %v679 = vld [vmem:[#allocation5 + $0x8d8] sm:$0xff]
        %v680 = vld [vmem:[#allocation5 + $0x8e0] sm:$0xff]
        %v681 = vld [vmem:[#allocation5 + $0x8e8] sm:$0xff]
        %v682 = vld [vmem:[#allocation5 + $0x8f0] sm:$0xff]
        %v683 = vld [vmem:[#allocation5 + $0x8f8] sm:$0xff]
        %v684 = vld [vmem:[#allocation5 + $0x900] sm:$0xff]
        %v685 = vld [vmem:[#allocation5 + $0x908] sm:$0xff]
        %v686 = vld [vmem:[#allocation5 + $0x910] sm:$0xff]
        %v687 = vld [vmem:[#allocation5 + $0x918] sm:$0xff]
        %v688 = vld [vmem:[#allocation5 + $0x920] sm:$0xff]
        %v689 = vld [vmem:[#allocation5 + $0x928] sm:$0xff]
        %v690 = vld [vmem:[#allocation5 + $0x930] sm:$0xff]
        %v691 = vld [vmem:[#allocation5 + $0x938] sm:$0xff]
        %v692 = vld [vmem:[#allocation5 + $0x940] sm:$0xff]
        %v693 = vld [vmem:[#allocation5 + $0x948] sm:$0xff]
        %v694 = vld [vmem:[#allocation5 + $0x950] sm:$0xff]
        %v695 = vld [vmem:[#allocation5 + $0x958] sm:$0xff]
        %v696 = vld [vmem:[#allocation5 + $0x960] sm:$0xff]
        %v697 = vld [vmem:[#allocation5 + $0x968] sm:$0xff]
        %v698 = vld [vmem:[#allocation5 + $0x970] sm:$0xff]
        %v699 = vld [vmem:[#allocation5 + $0x978] sm:$0xff]
        %v700 = vld [vmem:[#allocation5 + $0x980] sm:$0xff]
        %v701 = vld [vmem:[#allocation5 + $0x988] sm:$0xff]
        %v702 = vld [vmem:[#allocation5 + $0x990] sm:$0xff]
        %v703 = vld [vmem:[#allocation5 + $0x998] sm:$0xff]
        %v704 = vld [vmem:[#allocation5 + $0x9a0] sm:$0xff]
        %v705 = vld [vmem:[#allocation5 + $0x9a8] sm:$0xff]
        %v706 = vld [vmem:[#allocation5 + $0x9b0] sm:$0xff]
        %v707 = vld [vmem:[#allocation5 + $0x9b8] sm:$0xff]
        %v708 = vld [vmem:[#allocation5 + $0x9c0] sm:$0xff]
        %v709 = vld [vmem:[#allocation5 + $0x9c8] sm:$0xff]
        %v710 = vld [vmem:[#allocation5 + $0x9d0] sm:$0xff]
        %v711 = vld [vmem:[#allocation5 + $0x9d8] sm:$0xff]
        %v712 = vld [vmem:[#allocation5 + $0x9e0] sm:$0xff]
        %v713 = vld [vmem:[#allocation5 + $0x9e8] sm:$0xff]
        %v714 = vld [vmem:[#allocation5 + $0x9f0] sm:$0xff]
        %v715 = vld [vmem:[#allocation5 + $0x9f8] sm:$0xff]
        %v716 = vld [vmem:[#allocation7] sm:$0xf]
        %v718 = vlaneseq
        %v719 = vshrl.u32 %v718, 7
        %v720 = vsub.s32 0, %v719
        %v721 = vrot.slane %v716, %v720
        %v722 = vlaneseq
        %v723 = vshrl.u32 %v722, 7
        %v724 = vsub.s32 1, %v723
        %v725 = vrot.slane %v716, %v724
        %v726 = vlaneseq
        %v727 = vshrl.u32 %v726, 7
        %v728 = vsub.s32 2, %v727
        %v729 = vrot.slane %v716, %v728
        %v730 = vlaneseq
        %v731 = vshrl.u32 %v730, 7
        %v732 = vsub.s32 3, %v731
        %v733 = vrot.slane %v716, %v732
        %v1058 = vunpack.c.l.b16 %v396
        %v1059 = vunpack.c.h.b16 %v396
        %v1060 = vunpack.c.l.b16 %v397
        %v1061 = vunpack.c.h.b16 %v397
        %v1062 = vunpack.c.l.b16 %v398
        %v1063 = vunpack.c.h.b16 %v398
        %v1064 = vunpack.c.l.b16 %v399
        %v1065 = vunpack.c.h.b16 %v399
        %v1066 = vunpack.c.l.b16 %v400
        %v1067 = vunpack.c.h.b16 %v400
        %v1068 = vunpack.c.l.b16 %v401
        %v1069 = vunpack.c.h.b16 %v401
        %v1070 = vunpack.c.l.b16 %v402
        %v1071 = vunpack.c.h.b16 %v402
        %v1072 = vunpack.c.l.b16 %v403
        %v1073 = vunpack.c.h.b16 %v403
        %v1074 = vunpack.c.l.b16 %v404
        %v1075 = vunpack.c.h.b16 %v404
        %v1076 = vunpack.c.l.b16 %v405
        %v1077 = vunpack.c.h.b16 %v405
        %v1078 = vunpack.c.l.b16 %v406
        %v1079 = vunpack.c.h.b16 %v406
        %v1080 = vunpack.c.l.b16 %v407
        %v1081 = vunpack.c.h.b16 %v407
        %v1082 = vunpack.c.l.b16 %v408
        %v1083 = vunpack.c.h.b16 %v408
        %v1084 = vunpack.c.l.b16 %v409
        %v1085 = vunpack.c.h.b16 %v409
        %v1086 = vunpack.c.l.b16 %v410
        %v1087 = vunpack.c.h.b16 %v410
        %v1088 = vunpack.c.l.b16 %v411
        %v1089 = vunpack.c.h.b16 %v411
        %v1090 = vunpack.c.l.b16 %v412
        %v1091 = vunpack.c.h.b16 %v412
        %v1092 = vunpack.c.l.b16 %v413
        %v1093 = vunpack.c.h.b16 %v413
        %v1094 = vunpack.c.l.b16 %v414
        %v1095 = vunpack.c.h.b16 %v414
        %v1096 = vunpack.c.l.b16 %v415
        %v1097 = vunpack.c.h.b16 %v415
        %v1098 = vunpack.c.l.b16 %v416
        %v1099 = vunpack.c.h.b16 %v416
        %v1100 = vunpack.c.l.b16 %v417
        %v1101 = vunpack.c.h.b16 %v417
        %v1102 = vunpack.c.l.b16 %v418
        %v1103 = vunpack.c.h.b16 %v418
        %v1104 = vunpack.c.l.b16 %v419
        %v1105 = vunpack.c.h.b16 %v419
        %v1106 = vunpack.c.l.b16 %v420
        %v1107 = vunpack.c.h.b16 %v420
        %v1108 = vunpack.c.l.b16 %v421
        %v1109 = vunpack.c.h.b16 %v421
        %v1110 = vunpack.c.l.b16 %v422
        %v1111 = vunpack.c.h.b16 %v422
        %v1112 = vunpack.c.l.b16 %v423
        %v1113 = vunpack.c.h.b16 %v423
        %v1114 = vunpack.c.l.b16 %v424
        %v1115 = vunpack.c.h.b16 %v424
        %v1116 = vunpack.c.l.b16 %v425
        %v1117 = vunpack.c.h.b16 %v425
        %v1118 = vunpack.c.l.b16 %v426
        %v1119 = vunpack.c.h.b16 %v426
        %v1120 = vunpack.c.l.b16 %v427
        %v1121 = vunpack.c.h.b16 %v427
        %v1122 = vunpack.c.l.b16 %v428
        %v1123 = vunpack.c.h.b16 %v428
        %v1124 = vunpack.c.l.b16 %v429
        %v1125 = vunpack.c.h.b16 %v429
        %v1126 = vunpack.c.l.b16 %v430
        %v1127 = vunpack.c.h.b16 %v430
        %v1128 = vunpack.c.l.b16 %v431
        %v1129 = vunpack.c.h.b16 %v431
        %v1130 = vunpack.c.l.b16 %v432
        %v1131 = vunpack.c.h.b16 %v432
        %v1132 = vunpack.c.l.b16 %v433
        %v1133 = vunpack.c.h.b16 %v433
        %v1134 = vunpack.c.l.b16 %v434
        %v1135 = vunpack.c.h.b16 %v434
        %v1136 = vunpack.c.l.b16 %v435
        %v1137 = vunpack.c.h.b16 %v435
        %v1138 = vunpack.c.l.b16 %v436
        %v1139 = vunpack.c.h.b16 %v436
        %v1140 = vunpack.c.l.b16 %v437
        %v1141 = vunpack.c.h.b16 %v437
        %v1142 = vunpack.c.l.b16 %v438
        %v1143 = vunpack.c.h.b16 %v438
        %v1144 = vunpack.c.l.b16 %v439
        %v1145 = vunpack.c.h.b16 %v439
        %v1146 = vunpack.c.l.b16 %v440
        %v1147 = vunpack.c.h.b16 %v440
        %v1148 = vunpack.c.l.b16 %v441
        %v1149 = vunpack.c.h.b16 %v441
        %v1150 = vunpack.c.l.b16 %v442
        %v1151 = vunpack.c.h.b16 %v442
        %v1152 = vunpack.c.l.b16 %v443
        %v1153 = vunpack.c.h.b16 %v443
        %v1154 = vunpack.c.l.b16 %v444
        %v1155 = vunpack.c.h.b16 %v444
        %v1156 = vunpack.c.l.b16 %v445
        %v1157 = vunpack.c.h.b16 %v445
        %v1158 = vunpack.c.l.b16 %v446
        %v1159 = vunpack.c.h.b16 %v446
        %v1160 = vunpack.c.l.b16 %v447
        %v1161 = vunpack.c.h.b16 %v447
        %v1162 = vunpack.c.l.b16 %v448
        %v1163 = vunpack.c.h.b16 %v448
        %v1164 = vunpack.c.l.b16 %v449
        %v1165 = vunpack.c.h.b16 %v449
        %v1166 = vunpack.c.l.b16 %v450
        %v1167 = vunpack.c.h.b16 %v450
        %v1168 = vunpack.c.l.b16 %v451
        %v1169 = vunpack.c.h.b16 %v451
        %v1170 = vunpack.c.l.b16 %v452
        %v1171 = vunpack.c.h.b16 %v452
        %v1172 = vunpack.c.l.b16 %v453
        %v1173 = vunpack.c.h.b16 %v453
        %v1174 = vunpack.c.l.b16 %v454
        %v1175 = vunpack.c.h.b16 %v454
        %v1176 = vunpack.c.l.b16 %v455
        %v1177 = vunpack.c.h.b16 %v455
        %v1178 = vunpack.c.l.b16 %v456
        %v1179 = vunpack.c.h.b16 %v456
        %v1180 = vunpack.c.l.b16 %v457
        %v1181 = vunpack.c.h.b16 %v457
        %v1182 = vunpack.c.l.b16 %v458
        %v1183 = vunpack.c.h.b16 %v458
        %v1184 = vunpack.c.l.b16 %v459
        %v1185 = vunpack.c.h.b16 %v459
        %v1186 = vunpack.c.l.b16 %v460
        %v1187 = vunpack.c.h.b16 %v460
        %v1188 = vunpack.c.l.b16 %v461
        %v1189 = vunpack.c.h.b16 %v461
        %v1190 = vunpack.c.l.b16 %v462
        %v1191 = vunpack.c.h.b16 %v462
        %v1192 = vunpack.c.l.b16 %v463
        %v1193 = vunpack.c.h.b16 %v463
        %v1194 = vunpack.c.l.b16 %v464
        %v1195 = vunpack.c.h.b16 %v464
        %v1196 = vunpack.c.l.b16 %v465
        %v1197 = vunpack.c.h.b16 %v465
        %v1198 = vunpack.c.l.b16 %v466
        %v1199 = vunpack.c.h.b16 %v466
        %v1200 = vunpack.c.l.b16 %v467
        %v1201 = vunpack.c.h.b16 %v467
        %v1202 = vunpack.c.l.b16 %v468
        %v1203 = vunpack.c.h.b16 %v468
        %v1204 = vunpack.c.l.b16 %v469
        %v1205 = vunpack.c.h.b16 %v469
        %v1206 = vunpack.c.l.b16 %v470
        %v1207 = vunpack.c.h.b16 %v470
        %v1208 = vunpack.c.l.b16 %v471
        %v1209 = vunpack.c.h.b16 %v471
        %v1210 = vunpack.c.l.b16 %v472
        %v1211 = vunpack.c.h.b16 %v472
        %v1212 = vunpack.c.l.b16 %v473
        %v1213 = vunpack.c.h.b16 %v473
        %v1214 = vunpack.c.l.b16 %v474
        %v1215 = vunpack.c.h.b16 %v474
        %v1216 = vunpack.c.l.b16 %v475
        %v1217 = vunpack.c.h.b16 %v475
        %v1218 = vunpack.c.l.b16 %v476
        %v1219 = vunpack.c.h.b16 %v476
        %v1220 = vunpack.c.l.b16 %v477
        %v1221 = vunpack.c.h.b16 %v477
        %v1222 = vunpack.c.l.b16 %v478
        %v1223 = vunpack.c.h.b16 %v478
        %v1224 = vunpack.c.l.b16 %v479
        %v1225 = vunpack.c.h.b16 %v479
        %v1226 = vunpack.c.l.b16 %v480
        %v1227 = vunpack.c.h.b16 %v480
        %v1228 = vunpack.c.l.b16 %v481
        %v1229 = vunpack.c.h.b16 %v481
        %v1230 = vunpack.c.l.b16 %v482
        %v1231 = vunpack.c.h.b16 %v482
        %v1232 = vunpack.c.l.b16 %v483
        %v1233 = vunpack.c.h.b16 %v483
        %v1234 = vunpack.c.l.b16 %v484
        %v1235 = vunpack.c.h.b16 %v484
        %v1236 = vunpack.c.l.b16 %v485
        %v1237 = vunpack.c.h.b16 %v485
        %v1238 = vunpack.c.l.b16 %v486
        %v1239 = vunpack.c.h.b16 %v486
        %v1240 = vunpack.c.l.b16 %v487
        %v1241 = vunpack.c.h.b16 %v487
        %v1242 = vunpack.c.l.b16 %v488
        %v1243 = vunpack.c.h.b16 %v488
        %v1244 = vunpack.c.l.b16 %v489
        %v1245 = vunpack.c.h.b16 %v489
        %v1246 = vunpack.c.l.b16 %v490
        %v1247 = vunpack.c.h.b16 %v490
        %v1248 = vunpack.c.l.b16 %v491
        %v1249 = vunpack.c.h.b16 %v491
        %v1250 = vunpack.c.l.b16 %v492
        %v1251 = vunpack.c.h.b16 %v492
        %v1252 = vunpack.c.l.b16 %v493
        %v1253 = vunpack.c.h.b16 %v493
        %v1254 = vunpack.c.l.b16 %v494
        %v1255 = vunpack.c.h.b16 %v494
        %v1256 = vunpack.c.l.b16 %v495
        %v1257 = vunpack.c.h.b16 %v495
        %v1258 = vunpack.c.l.b16 %v496
        %v1259 = vunpack.c.h.b16 %v496
        %v1260 = vunpack.c.l.b16 %v497
        %v1261 = vunpack.c.h.b16 %v497
        %v1262 = vunpack.c.l.b16 %v498
        %v1263 = vunpack.c.h.b16 %v498
        %v1264 = vunpack.c.l.b16 %v499
        %v1265 = vunpack.c.h.b16 %v499
        %v1266 = vunpack.c.l.b16 %v500
        %v1267 = vunpack.c.h.b16 %v500
        %v1268 = vunpack.c.l.b16 %v501
        %v1269 = vunpack.c.h.b16 %v501
        %v1270 = vunpack.c.l.b16 %v502
        %v1271 = vunpack.c.h.b16 %v502
        %v1272 = vunpack.c.l.b16 %v503
        %v1273 = vunpack.c.h.b16 %v503
        %v1274 = vunpack.c.l.b16 %v504
        %v1275 = vunpack.c.h.b16 %v504
        %v1276 = vunpack.c.l.b16 %v505
        %v1277 = vunpack.c.h.b16 %v505
        %v1278 = vunpack.c.l.b16 %v506
        %v1279 = vunpack.c.h.b16 %v506
        %v1280 = vunpack.c.l.b16 %v507
        %v1281 = vunpack.c.h.b16 %v507
        %v1282 = vunpack.c.l.b16 %v508
        %v1283 = vunpack.c.h.b16 %v508
        %v1284 = vunpack.c.l.b16 %v509
        %v1285 = vunpack.c.h.b16 %v509
        %v1286 = vunpack.c.l.b16 %v510
        %v1287 = vunpack.c.h.b16 %v510
        %v1288 = vunpack.c.l.b16 %v511
        %v1289 = vunpack.c.h.b16 %v511
        %v1290 = vunpack.c.l.b16 %v512
        %v1291 = vunpack.c.h.b16 %v512
        %v1292 = vunpack.c.l.b16 %v513
        %v1293 = vunpack.c.h.b16 %v513
        %v1294 = vunpack.c.l.b16 %v514
        %v1295 = vunpack.c.h.b16 %v514
        %v1296 = vunpack.c.l.b16 %v515
        %v1297 = vunpack.c.h.b16 %v515
        %v1298 = vunpack.c.l.b16 %v516
        %v1299 = vunpack.c.h.b16 %v516
        %v1300 = vunpack.c.l.b16 %v517
        %v1301 = vunpack.c.h.b16 %v517
        %v1302 = vunpack.c.l.b16 %v518
        %v1303 = vunpack.c.h.b16 %v518
        %v1304 = vunpack.c.l.b16 %v519
        %v1305 = vunpack.c.h.b16 %v519
        %v1306 = vunpack.c.l.b16 %v520
        %v1307 = vunpack.c.h.b16 %v520
        %v1308 = vunpack.c.l.b16 %v521
        %v1309 = vunpack.c.h.b16 %v521
        %v1310 = vunpack.c.l.b16 %v522
        %v1311 = vunpack.c.h.b16 %v522
        %v1312 = vunpack.c.l.b16 %v523
        %v1313 = vunpack.c.h.b16 %v523
        %v1314 = vunpack.c.l.b16 %v524
        %v1315 = vunpack.c.h.b16 %v524
        %v1316 = vunpack.c.l.b16 %v525
        %v1317 = vunpack.c.h.b16 %v525
        %v1318 = vunpack.c.l.b16 %v526
        %v1319 = vunpack.c.h.b16 %v526
        %v1320 = vunpack.c.l.b16 %v527
        %v1321 = vunpack.c.h.b16 %v527
        %v1322 = vunpack.c.l.b16 %v528
        %v1323 = vunpack.c.h.b16 %v528
        %v1324 = vunpack.c.l.b16 %v529
        %v1325 = vunpack.c.h.b16 %v529
        %v1326 = vunpack.c.l.b16 %v530
        %v1327 = vunpack.c.h.b16 %v530
        %v1328 = vunpack.c.l.b16 %v531
        %v1329 = vunpack.c.h.b16 %v531
        %v1330 = vunpack.c.l.b16 %v532
        %v1331 = vunpack.c.h.b16 %v532
        %v1332 = vunpack.c.l.b16 %v533
        %v1333 = vunpack.c.h.b16 %v533
        %v1334 = vunpack.c.l.b16 %v534
        %v1335 = vunpack.c.h.b16 %v534
        %v1336 = vunpack.c.l.b16 %v535
        %v1337 = vunpack.c.h.b16 %v535
        %v1338 = vunpack.c.l.b16 %v536
        %v1339 = vunpack.c.h.b16 %v536
        %v1340 = vunpack.c.l.b16 %v537
        %v1341 = vunpack.c.h.b16 %v537
        %v1342 = vunpack.c.l.b16 %v538
        %v1343 = vunpack.c.h.b16 %v538
        %v1344 = vunpack.c.l.b16 %v539
        %v1345 = vunpack.c.h.b16 %v539
        %v1346 = vunpack.c.l.b16 %v540
        %v1347 = vunpack.c.h.b16 %v540
        %v1348 = vunpack.c.l.b16 %v541
        %v1349 = vunpack.c.h.b16 %v541
        %v1350 = vunpack.c.l.b16 %v542
        %v1351 = vunpack.c.h.b16 %v542
        %v1352 = vunpack.c.l.b16 %v543
        %v1353 = vunpack.c.h.b16 %v543
        %v1354 = vunpack.c.l.b16 %v544
        %v1355 = vunpack.c.h.b16 %v544
        %v1356 = vunpack.c.l.b16 %v545
        %v1357 = vunpack.c.h.b16 %v545
        %v1358 = vunpack.c.l.b16 %v546
        %v1359 = vunpack.c.h.b16 %v546
        %v1360 = vunpack.c.l.b16 %v547
        %v1361 = vunpack.c.h.b16 %v547
        %v1362 = vunpack.c.l.b16 %v548
        %v1363 = vunpack.c.h.b16 %v548
        %v1364 = vunpack.c.l.b16 %v549
        %v1365 = vunpack.c.h.b16 %v549
        %v1366 = vunpack.c.l.b16 %v550
        %v1367 = vunpack.c.h.b16 %v550
        %v1368 = vunpack.c.l.b16 %v551
        %v1369 = vunpack.c.h.b16 %v551
        %v1370 = vunpack.c.l.b16 %v552
        %v1371 = vunpack.c.h.b16 %v552
        %v1372 = vunpack.c.l.b16 %v553
        %v1373 = vunpack.c.h.b16 %v553
        %v1374 = vunpack.c.l.b16 %v554
        %v1375 = vunpack.c.h.b16 %v554
        %v1376 = vunpack.c.l.b16 %v555
        %v1377 = vunpack.c.h.b16 %v555
        %v1378 = vunpack.c.l.b16 %v556
        %v1379 = vunpack.c.h.b16 %v556
        %v1380 = vunpack.c.l.b16 %v557
        %v1381 = vunpack.c.h.b16 %v557
        %v1382 = vunpack.c.l.b16 %v558
        %v1383 = vunpack.c.h.b16 %v558
        %v1384 = vunpack.c.l.b16 %v559
        %v1385 = vunpack.c.h.b16 %v559
        %v1386 = vunpack.c.l.b16 %v560
        %v1387 = vunpack.c.h.b16 %v560
        %v1388 = vunpack.c.l.b16 %v561
        %v1389 = vunpack.c.h.b16 %v561
        %v1390 = vunpack.c.l.b16 %v562
        %v1391 = vunpack.c.h.b16 %v562
        %v1392 = vunpack.c.l.b16 %v563
        %v1393 = vunpack.c.h.b16 %v563
        %v1394 = vunpack.c.l.b16 %v564
        %v1395 = vunpack.c.h.b16 %v564
        %v1396 = vunpack.c.l.b16 %v565
        %v1397 = vunpack.c.h.b16 %v565
        %v1398 = vunpack.c.l.b16 %v566
        %v1399 = vunpack.c.h.b16 %v566
        %v1400 = vunpack.c.l.b16 %v567
        %v1401 = vunpack.c.h.b16 %v567
        %v1402 = vunpack.c.l.b16 %v568
        %v1403 = vunpack.c.h.b16 %v568
        %v1404 = vunpack.c.l.b16 %v569
        %v1405 = vunpack.c.h.b16 %v569
        %v1406 = vunpack.c.l.b16 %v570
        %v1407 = vunpack.c.h.b16 %v570
        %v1408 = vunpack.c.l.b16 %v571
        %v1409 = vunpack.c.h.b16 %v571
        %v1410 = vunpack.c.l.b16 %v572
        %v1411 = vunpack.c.h.b16 %v572
        %v1412 = vunpack.c.l.b16 %v573
        %v1413 = vunpack.c.h.b16 %v573
        %v1414 = vunpack.c.l.b16 %v574
        %v1415 = vunpack.c.h.b16 %v574
        %v1416 = vunpack.c.l.b16 %v575
        %v1417 = vunpack.c.h.b16 %v575
        %v1418 = vunpack.c.l.b16 %v576
        %v1419 = vunpack.c.h.b16 %v576
        %v1420 = vunpack.c.l.b16 %v577
        %v1421 = vunpack.c.h.b16 %v577
        %v1422 = vunpack.c.l.b16 %v578
        %v1423 = vunpack.c.h.b16 %v578
        %v1424 = vunpack.c.l.b16 %v579
        %v1425 = vunpack.c.h.b16 %v579
        %v1426 = vunpack.c.l.b16 %v580
        %v1427 = vunpack.c.h.b16 %v580
        %v1428 = vunpack.c.l.b16 %v581
        %v1429 = vunpack.c.h.b16 %v581
        %v1430 = vunpack.c.l.b16 %v582
        %v1431 = vunpack.c.h.b16 %v582
        %v1432 = vunpack.c.l.b16 %v583
        %v1433 = vunpack.c.h.b16 %v583
        %v1434 = vunpack.c.l.b16 %v584
        %v1435 = vunpack.c.h.b16 %v584
        %v1436 = vunpack.c.l.b16 %v585
        %v1437 = vunpack.c.h.b16 %v585
        %v1438 = vunpack.c.l.b16 %v586
        %v1439 = vunpack.c.h.b16 %v586
        %v1440 = vunpack.c.l.b16 %v587
        %v1441 = vunpack.c.h.b16 %v587
        %v1442 = vunpack.c.l.b16 %v588
        %v1443 = vunpack.c.h.b16 %v588
        %v1444 = vunpack.c.l.b16 %v589
        %v1445 = vunpack.c.h.b16 %v589
        %v1446 = vunpack.c.l.b16 %v590
        %v1447 = vunpack.c.h.b16 %v590
        %v1448 = vunpack.c.l.b16 %v591
        %v1449 = vunpack.c.h.b16 %v591
        %v1450 = vunpack.c.l.b16 %v592
        %v1451 = vunpack.c.h.b16 %v592
        %v1452 = vunpack.c.l.b16 %v593
        %v1453 = vunpack.c.h.b16 %v593
        %v1454 = vunpack.c.l.b16 %v594
        %v1455 = vunpack.c.h.b16 %v594
        %v1456 = vunpack.c.l.b16 %v595
        %v1457 = vunpack.c.h.b16 %v595
        %v1458 = vunpack.c.l.b16 %v596
        %v1459 = vunpack.c.h.b16 %v596
        %v1460 = vunpack.c.l.b16 %v597
        %v1461 = vunpack.c.h.b16 %v597
        %v1462 = vunpack.c.l.b16 %v598
        %v1463 = vunpack.c.h.b16 %v598
        %v1464 = vunpack.c.l.b16 %v599
        %v1465 = vunpack.c.h.b16 %v599
        %v1466 = vunpack.c.l.b16 %v600
        %v1467 = vunpack.c.h.b16 %v600
        %v1468 = vunpack.c.l.b16 %v601
        %v1469 = vunpack.c.h.b16 %v601
        %v1470 = vunpack.c.l.b16 %v602
        %v1471 = vunpack.c.h.b16 %v602
        %v1472 = vunpack.c.l.b16 %v603
        %v1473 = vunpack.c.h.b16 %v603
        %v1474 = vunpack.c.l.b16 %v604
        %v1475 = vunpack.c.h.b16 %v604
        %v1476 = vunpack.c.l.b16 %v605
        %v1477 = vunpack.c.h.b16 %v605
        %v1478 = vunpack.c.l.b16 %v606
        %v1479 = vunpack.c.h.b16 %v606
        %v1480 = vunpack.c.l.b16 %v607
        %v1481 = vunpack.c.h.b16 %v607
        %v1482 = vunpack.c.l.b16 %v608
        %v1483 = vunpack.c.h.b16 %v608
        %v1484 = vunpack.c.l.b16 %v609
        %v1485 = vunpack.c.h.b16 %v609
        %v1486 = vunpack.c.l.b16 %v610
        %v1487 = vunpack.c.h.b16 %v610
        %v1488 = vunpack.c.l.b16 %v611
        %v1489 = vunpack.c.h.b16 %v611
        %v1490 = vunpack.c.l.b16 %v612
        %v1491 = vunpack.c.h.b16 %v612
        %v1492 = vunpack.c.l.b16 %v613
        %v1493 = vunpack.c.h.b16 %v613
        %v1494 = vunpack.c.l.b16 %v614
        %v1495 = vunpack.c.h.b16 %v614
        %v1496 = vunpack.c.l.b16 %v615
        %v1497 = vunpack.c.h.b16 %v615
        %v1498 = vunpack.c.l.b16 %v616
        %v1499 = vunpack.c.h.b16 %v616
        %v1500 = vunpack.c.l.b16 %v617
        %v1501 = vunpack.c.h.b16 %v617
        %v1502 = vunpack.c.l.b16 %v618
        %v1503 = vunpack.c.h.b16 %v618
        %v1504 = vunpack.c.l.b16 %v619
        %v1505 = vunpack.c.h.b16 %v619
        %v1506 = vunpack.c.l.b16 %v620
        %v1507 = vunpack.c.h.b16 %v620
        %v1508 = vunpack.c.l.b16 %v621
        %v1509 = vunpack.c.h.b16 %v621
        %v1510 = vunpack.c.l.b16 %v622
        %v1511 = vunpack.c.h.b16 %v622
        %v1512 = vunpack.c.l.b16 %v623
        %v1513 = vunpack.c.h.b16 %v623
        %v1514 = vunpack.c.l.b16 %v624
        %v1515 = vunpack.c.h.b16 %v624
        %v1516 = vunpack.c.l.b16 %v625
        %v1517 = vunpack.c.h.b16 %v625
        %v1518 = vunpack.c.l.b16 %v626
        %v1519 = vunpack.c.h.b16 %v626
        %v1520 = vunpack.c.l.b16 %v627
        %v1521 = vunpack.c.h.b16 %v627
        %v1522 = vunpack.c.l.b16 %v628
        %v1523 = vunpack.c.h.b16 %v628
        %v1524 = vunpack.c.l.b16 %v629
        %v1525 = vunpack.c.h.b16 %v629
        %v1526 = vunpack.c.l.b16 %v630
        %v1527 = vunpack.c.h.b16 %v630
        %v1528 = vunpack.c.l.b16 %v631
        %v1529 = vunpack.c.h.b16 %v631
        %v1530 = vunpack.c.l.b16 %v632
        %v1531 = vunpack.c.h.b16 %v632
        %v1532 = vunpack.c.l.b16 %v633
        %v1533 = vunpack.c.h.b16 %v633
        %v1534 = vunpack.c.l.b16 %v634
        %v1535 = vunpack.c.h.b16 %v634
        %v1536 = vunpack.c.l.b16 %v635
        %v1537 = vunpack.c.h.b16 %v635
        %v1538 = vunpack.c.l.b16 %v636
        %v1539 = vunpack.c.h.b16 %v636
        %v1540 = vunpack.c.l.b16 %v637
        %v1541 = vunpack.c.h.b16 %v637
        %v1542 = vunpack.c.l.b16 %v638
        %v1543 = vunpack.c.h.b16 %v638
        %v1544 = vunpack.c.l.b16 %v639
        %v1545 = vunpack.c.h.b16 %v639
        %v1546 = vunpack.c.l.b16 %v640
        %v1547 = vunpack.c.h.b16 %v640
        %v1548 = vunpack.c.l.b16 %v641
        %v1549 = vunpack.c.h.b16 %v641
        %v1550 = vunpack.c.l.b16 %v642
        %v1551 = vunpack.c.h.b16 %v642
        %v1552 = vunpack.c.l.b16 %v643
        %v1553 = vunpack.c.h.b16 %v643
        %v1554 = vunpack.c.l.b16 %v644
        %v1555 = vunpack.c.h.b16 %v644
        %v1556 = vunpack.c.l.b16 %v645
        %v1557 = vunpack.c.h.b16 %v645
        %v1558 = vunpack.c.l.b16 %v646
        %v1559 = vunpack.c.h.b16 %v646
        %v1560 = vunpack.c.l.b16 %v647
        %v1561 = vunpack.c.h.b16 %v647
        %v1562 = vunpack.c.l.b16 %v648
        %v1563 = vunpack.c.h.b16 %v648
        %v1564 = vunpack.c.l.b16 %v649
        %v1565 = vunpack.c.h.b16 %v649
        %v1566 = vunpack.c.l.b16 %v650
        %v1567 = vunpack.c.h.b16 %v650
        %v1568 = vunpack.c.l.b16 %v651
        %v1569 = vunpack.c.h.b16 %v651
        %v1570 = vunpack.c.l.b16 %v652
        %v1571 = vunpack.c.h.b16 %v652
        %v1572 = vunpack.c.l.b16 %v653
        %v1573 = vunpack.c.h.b16 %v653
        %v1574 = vunpack.c.l.b16 %v654
        %v1575 = vunpack.c.h.b16 %v654
        %v1576 = vunpack.c.l.b16 %v655
        %v1577 = vunpack.c.h.b16 %v655
        %v1578 = vunpack.c.l.b16 %v656
        %v1579 = vunpack.c.h.b16 %v656
        %v1580 = vunpack.c.l.b16 %v657
        %v1581 = vunpack.c.h.b16 %v657
        %v1582 = vunpack.c.l.b16 %v658
        %v1583 = vunpack.c.h.b16 %v658
        %v1584 = vunpack.c.l.b16 %v659
        %v1585 = vunpack.c.h.b16 %v659
        %v1586 = vunpack.c.l.b16 %v660
        %v1587 = vunpack.c.h.b16 %v660
        %v1588 = vunpack.c.l.b16 %v661
        %v1589 = vunpack.c.h.b16 %v661
        %v1590 = vunpack.c.l.b16 %v662
        %v1591 = vunpack.c.h.b16 %v662
        %v1592 = vunpack.c.l.b16 %v663
        %v1593 = vunpack.c.h.b16 %v663
        %v1594 = vunpack.c.l.b16 %v664
        %v1595 = vunpack.c.h.b16 %v664
        %v1596 = vunpack.c.l.b16 %v665
        %v1597 = vunpack.c.h.b16 %v665
        %v1598 = vunpack.c.l.b16 %v666
        %v1599 = vunpack.c.h.b16 %v666
        %v1600 = vunpack.c.l.b16 %v667
        %v1601 = vunpack.c.h.b16 %v667
        %v1602 = vunpack.c.l.b16 %v668
        %v1603 = vunpack.c.h.b16 %v668
        %v1604 = vunpack.c.l.b16 %v669
        %v1605 = vunpack.c.h.b16 %v669
        %v1606 = vunpack.c.l.b16 %v670
        %v1607 = vunpack.c.h.b16 %v670
        %v1608 = vunpack.c.l.b16 %v671
        %v1609 = vunpack.c.h.b16 %v671
        %v1610 = vunpack.c.l.b16 %v672
        %v1611 = vunpack.c.h.b16 %v672
        %v1612 = vunpack.c.l.b16 %v673
        %v1613 = vunpack.c.h.b16 %v673
        %v1614 = vunpack.c.l.b16 %v674
        %v1615 = vunpack.c.h.b16 %v674
        %v1616 = vunpack.c.l.b16 %v675
        %v1617 = vunpack.c.h.b16 %v675
        %v1618 = vunpack.c.l.b16 %v676
        %v1619 = vunpack.c.h.b16 %v676
        %v1620 = vunpack.c.l.b16 %v677
        %v1621 = vunpack.c.h.b16 %v677
        %v1622 = vunpack.c.l.b16 %v678
        %v1623 = vunpack.c.h.b16 %v678
        %v1624 = vunpack.c.l.b16 %v679
        %v1625 = vunpack.c.h.b16 %v679
        %v1626 = vunpack.c.l.b16 %v680
        %v1627 = vunpack.c.h.b16 %v680
        %v1628 = vunpack.c.l.b16 %v681
        %v1629 = vunpack.c.h.b16 %v681
        %v1630 = vunpack.c.l.b16 %v682
        %v1631 = vunpack.c.h.b16 %v682
        %v1632 = vunpack.c.l.b16 %v683
        %v1633 = vunpack.c.h.b16 %v683
        %v1634 = vunpack.c.l.b16 %v684
        %v1635 = vunpack.c.h.b16 %v684
        %v1636 = vunpack.c.l.b16 %v685
        %v1637 = vunpack.c.h.b16 %v685
        %v1638 = vunpack.c.l.b16 %v686
        %v1639 = vunpack.c.h.b16 %v686
        %v1640 = vunpack.c.l.b16 %v687
        %v1641 = vunpack.c.h.b16 %v687
        %v1642 = vunpack.c.l.b16 %v688
        %v1643 = vunpack.c.h.b16 %v688
        %v1644 = vunpack.c.l.b16 %v689
        %v1645 = vunpack.c.h.b16 %v689
        %v1646 = vunpack.c.l.b16 %v690
        %v1647 = vunpack.c.h.b16 %v690
        %v1648 = vunpack.c.l.b16 %v691
        %v1649 = vunpack.c.h.b16 %v691
        %v1650 = vunpack.c.l.b16 %v692
        %v1651 = vunpack.c.h.b16 %v692
        %v1652 = vunpack.c.l.b16 %v693
        %v1653 = vunpack.c.h.b16 %v693
        %v1654 = vunpack.c.l.b16 %v694
        %v1655 = vunpack.c.h.b16 %v694
        %v1656 = vunpack.c.l.b16 %v695
        %v1657 = vunpack.c.h.b16 %v695
        %v1658 = vunpack.c.l.b16 %v696
        %v1659 = vunpack.c.h.b16 %v696
        %v1660 = vunpack.c.l.b16 %v697
        %v1661 = vunpack.c.h.b16 %v697
        %v1662 = vunpack.c.l.b16 %v698
        %v1663 = vunpack.c.h.b16 %v698
        %v1664 = vunpack.c.l.b16 %v699
        %v1665 = vunpack.c.h.b16 %v699
        %v1666 = vunpack.c.l.b16 %v700
        %v1667 = vunpack.c.h.b16 %v700
        %v1668 = vunpack.c.l.b16 %v701
        %v1669 = vunpack.c.h.b16 %v701
        %v1670 = vunpack.c.l.b16 %v702
        %v1671 = vunpack.c.h.b16 %v702
        %v1672 = vunpack.c.l.b16 %v703
        %v1673 = vunpack.c.h.b16 %v703
        %v1674 = vunpack.c.l.b16 %v704
        %v1675 = vunpack.c.h.b16 %v704
        %v1676 = vunpack.c.l.b16 %v705
        %v1677 = vunpack.c.h.b16 %v705
        %v1678 = vunpack.c.l.b16 %v706
        %v1679 = vunpack.c.h.b16 %v706
        %v1680 = vunpack.c.l.b16 %v707
        %v1681 = vunpack.c.h.b16 %v707
        %v1682 = vunpack.c.l.b16 %v708
        %v1683 = vunpack.c.h.b16 %v708
        %v1684 = vunpack.c.l.b16 %v709
        %v1685 = vunpack.c.h.b16 %v709
        %v1686 = vunpack.c.l.b16 %v710
        %v1687 = vunpack.c.h.b16 %v710
        %v1688 = vunpack.c.l.b16 %v711
        %v1689 = vunpack.c.h.b16 %v711
        %v1690 = vunpack.c.l.b16 %v712
        %v1691 = vunpack.c.h.b16 %v712
        %v1692 = vunpack.c.l.b16 %v713
        %v1693 = vunpack.c.h.b16 %v713
        %v1694 = vunpack.c.l.b16 %v714
        %v1695 = vunpack.c.h.b16 %v714
        %v1696 = vunpack.c.l.b16 %v715
        %v1697 = vunpack.c.h.b16 %v715
        %v1698 = vpack.c.b16 %v1062, %v1058
        %v1699 = vpack.c.b16 %v1063, %v1059
        %v1700 = vpack.c.b16 %v1064, %v1060
        %v1701 = vpack.c.b16 %v1065, %v1061
        %v1702 = vpack.c.b16 %v1070, %v1066
        %v1703 = vpack.c.b16 %v1071, %v1067
        %v1704 = vpack.c.b16 %v1072, %v1068
        %v1705 = vpack.c.b16 %v1073, %v1069
        %v1706 = vpack.c.b16 %v1078, %v1074
        %v1707 = vpack.c.b16 %v1079, %v1075
        %v1708 = vpack.c.b16 %v1080, %v1076
        %v1709 = vpack.c.b16 %v1081, %v1077
        %v1710 = vpack.c.b16 %v1086, %v1082
        %v1711 = vpack.c.b16 %v1087, %v1083
        %v1712 = vpack.c.b16 %v1088, %v1084
        %v1713 = vpack.c.b16 %v1089, %v1085
        %v1714 = vpack.c.b16 %v1094, %v1090
        %v1715 = vpack.c.b16 %v1095, %v1091
        %v1716 = vpack.c.b16 %v1096, %v1092
        %v1717 = vpack.c.b16 %v1097, %v1093
        %v1718 = vpack.c.b16 %v1102, %v1098
        %v1719 = vpack.c.b16 %v1103, %v1099
        %v1720 = vpack.c.b16 %v1104, %v1100
        %v1721 = vpack.c.b16 %v1105, %v1101
        %v1722 = vpack.c.b16 %v1110, %v1106
        %v1723 = vpack.c.b16 %v1111, %v1107
        %v1724 = vpack.c.b16 %v1112, %v1108
        %v1725 = vpack.c.b16 %v1113, %v1109
        %v1726 = vpack.c.b16 %v1118, %v1114
        %v1727 = vpack.c.b16 %v1119, %v1115
        %v1728 = vpack.c.b16 %v1120, %v1116
        %v1729 = vpack.c.b16 %v1121, %v1117
        %v1730 = vpack.c.b16 %v1126, %v1122
        %v1731 = vpack.c.b16 %v1127, %v1123
        %v1732 = vpack.c.b16 %v1128, %v1124
        %v1733 = vpack.c.b16 %v1129, %v1125
        %v1734 = vpack.c.b16 %v1134, %v1130
        %v1735 = vpack.c.b16 %v1135, %v1131
        %v1736 = vpack.c.b16 %v1136, %v1132
        %v1737 = vpack.c.b16 %v1137, %v1133
        %v1738 = vpack.c.b16 %v1142, %v1138
        %v1739 = vpack.c.b16 %v1143, %v1139
        %v1740 = vpack.c.b16 %v1144, %v1140
        %v1741 = vpack.c.b16 %v1145, %v1141
        %v1742 = vpack.c.b16 %v1150, %v1146
        %v1743 = vpack.c.b16 %v1151, %v1147
        %v1744 = vpack.c.b16 %v1152, %v1148
        %v1745 = vpack.c.b16 %v1153, %v1149
        %v1746 = vpack.c.b16 %v1158, %v1154
        %v1747 = vpack.c.b16 %v1159, %v1155
        %v1748 = vpack.c.b16 %v1160, %v1156
        %v1749 = vpack.c.b16 %v1161, %v1157
        %v1750 = vpack.c.b16 %v1166, %v1162
        %v1751 = vpack.c.b16 %v1167, %v1163
        %v1752 = vpack.c.b16 %v1168, %v1164
        %v1753 = vpack.c.b16 %v1169, %v1165
        %v1754 = vpack.c.b16 %v1174, %v1170
        %v1755 = vpack.c.b16 %v1175, %v1171
        %v1756 = vpack.c.b16 %v1176, %v1172
        %v1757 = vpack.c.b16 %v1177, %v1173
        %v1758 = vpack.c.b16 %v1182, %v1178
        %v1759 = vpack.c.b16 %v1183, %v1179
        %v1760 = vpack.c.b16 %v1184, %v1180
        %v1761 = vpack.c.b16 %v1185, %v1181
        %v1762 = vpack.c.b16 %v1190, %v1186
        %v1763 = vpack.c.b16 %v1191, %v1187
        %v1764 = vpack.c.b16 %v1192, %v1188
        %v1765 = vpack.c.b16 %v1193, %v1189
        %v1766 = vpack.c.b16 %v1198, %v1194
        %v1767 = vpack.c.b16 %v1199, %v1195
        %v1768 = vpack.c.b16 %v1200, %v1196
        %v1769 = vpack.c.b16 %v1201, %v1197
        %v1770 = vpack.c.b16 %v1206, %v1202
        %v1771 = vpack.c.b16 %v1207, %v1203
        %v1772 = vpack.c.b16 %v1208, %v1204
        %v1773 = vpack.c.b16 %v1209, %v1205
        %v1774 = vpack.c.b16 %v1214, %v1210
        %v1775 = vpack.c.b16 %v1215, %v1211
        %v1776 = vpack.c.b16 %v1216, %v1212
        %v1777 = vpack.c.b16 %v1217, %v1213
        %v1778 = vpack.c.b16 %v1222, %v1218
        %v1779 = vpack.c.b16 %v1223, %v1219
        %v1780 = vpack.c.b16 %v1224, %v1220
        %v1781 = vpack.c.b16 %v1225, %v1221
        %v1782 = vpack.c.b16 %v1230, %v1226
        %v1783 = vpack.c.b16 %v1231, %v1227
        %v1784 = vpack.c.b16 %v1232, %v1228
        %v1785 = vpack.c.b16 %v1233, %v1229
        %v1786 = vpack.c.b16 %v1238, %v1234
        %v1787 = vpack.c.b16 %v1239, %v1235
        %v1788 = vpack.c.b16 %v1240, %v1236
        %v1789 = vpack.c.b16 %v1241, %v1237
        %v1790 = vpack.c.b16 %v1246, %v1242
        %v1791 = vpack.c.b16 %v1247, %v1243
        %v1792 = vpack.c.b16 %v1248, %v1244
        %v1793 = vpack.c.b16 %v1249, %v1245
        %v1794 = vpack.c.b16 %v1254, %v1250
        %v1795 = vpack.c.b16 %v1255, %v1251
        %v1796 = vpack.c.b16 %v1256, %v1252
        %v1797 = vpack.c.b16 %v1257, %v1253
        %v1798 = vpack.c.b16 %v1262, %v1258
        %v1799 = vpack.c.b16 %v1263, %v1259
        %v1800 = vpack.c.b16 %v1264, %v1260
        %v1801 = vpack.c.b16 %v1265, %v1261
        %v1802 = vpack.c.b16 %v1270, %v1266
        %v1803 = vpack.c.b16 %v1271, %v1267
        %v1804 = vpack.c.b16 %v1272, %v1268
        %v1805 = vpack.c.b16 %v1273, %v1269
        %v1806 = vpack.c.b16 %v1278, %v1274
        %v1807 = vpack.c.b16 %v1279, %v1275
        %v1808 = vpack.c.b16 %v1280, %v1276
        %v1809 = vpack.c.b16 %v1281, %v1277
        %v1810 = vpack.c.b16 %v1286, %v1282
        %v1811 = vpack.c.b16 %v1287, %v1283
        %v1812 = vpack.c.b16 %v1288, %v1284
        %v1813 = vpack.c.b16 %v1289, %v1285
        %v1814 = vpack.c.b16 %v1294, %v1290
        %v1815 = vpack.c.b16 %v1295, %v1291
        %v1816 = vpack.c.b16 %v1296, %v1292
        %v1817 = vpack.c.b16 %v1297, %v1293
        %v1818 = vpack.c.b16 %v1302, %v1298
        %v1819 = vpack.c.b16 %v1303, %v1299
        %v1820 = vpack.c.b16 %v1304, %v1300
        %v1821 = vpack.c.b16 %v1305, %v1301
        %v1822 = vpack.c.b16 %v1310, %v1306
        %v1823 = vpack.c.b16 %v1311, %v1307
        %v1824 = vpack.c.b16 %v1312, %v1308
        %v1825 = vpack.c.b16 %v1313, %v1309
        %v1826 = vpack.c.b16 %v1318, %v1314
        %v1827 = vpack.c.b16 %v1319, %v1315
        %v1828 = vpack.c.b16 %v1320, %v1316
        %v1829 = vpack.c.b16 %v1321, %v1317
        %v1830 = vpack.c.b16 %v1326, %v1322
        %v1831 = vpack.c.b16 %v1327, %v1323
        %v1832 = vpack.c.b16 %v1328, %v1324
        %v1833 = vpack.c.b16 %v1329, %v1325
        %v1834 = vpack.c.b16 %v1334, %v1330
        %v1835 = vpack.c.b16 %v1335, %v1331
        %v1836 = vpack.c.b16 %v1336, %v1332
        %v1837 = vpack.c.b16 %v1337, %v1333
        %v1838 = vpack.c.b16 %v1342, %v1338
        %v1839 = vpack.c.b16 %v1343, %v1339
        %v1840 = vpack.c.b16 %v1344, %v1340
        %v1841 = vpack.c.b16 %v1345, %v1341
        %v1842 = vpack.c.b16 %v1350, %v1346
        %v1843 = vpack.c.b16 %v1351, %v1347
        %v1844 = vpack.c.b16 %v1352, %v1348
        %v1845 = vpack.c.b16 %v1353, %v1349
        %v1846 = vpack.c.b16 %v1358, %v1354
        %v1847 = vpack.c.b16 %v1359, %v1355
        %v1848 = vpack.c.b16 %v1360, %v1356
        %v1849 = vpack.c.b16 %v1361, %v1357
        %v1850 = vpack.c.b16 %v1366, %v1362
        %v1851 = vpack.c.b16 %v1367, %v1363
        %v1852 = vpack.c.b16 %v1368, %v1364
        %v1853 = vpack.c.b16 %v1369, %v1365
        %v1854 = vpack.c.b16 %v1374, %v1370
        %v1855 = vpack.c.b16 %v1375, %v1371
        %v1856 = vpack.c.b16 %v1376, %v1372
        %v1857 = vpack.c.b16 %v1377, %v1373
        %v1858 = vpack.c.b16 %v1382, %v1378
        %v1859 = vpack.c.b16 %v1383, %v1379
        %v1860 = vpack.c.b16 %v1384, %v1380
        %v1861 = vpack.c.b16 %v1385, %v1381
        %v1862 = vpack.c.b16 %v1390, %v1386
        %v1863 = vpack.c.b16 %v1391, %v1387
        %v1864 = vpack.c.b16 %v1392, %v1388
        %v1865 = vpack.c.b16 %v1393, %v1389
        %v1866 = vpack.c.b16 %v1398, %v1394
        %v1867 = vpack.c.b16 %v1399, %v1395
        %v1868 = vpack.c.b16 %v1400, %v1396
        %v1869 = vpack.c.b16 %v1401, %v1397
        %v1870 = vpack.c.b16 %v1406, %v1402
        %v1871 = vpack.c.b16 %v1407, %v1403
        %v1872 = vpack.c.b16 %v1408, %v1404
        %v1873 = vpack.c.b16 %v1409, %v1405
        %v1874 = vpack.c.b16 %v1414, %v1410
        %v1875 = vpack.c.b16 %v1415, %v1411
        %v1876 = vpack.c.b16 %v1416, %v1412
        %v1877 = vpack.c.b16 %v1417, %v1413
        %v1878 = vpack.c.b16 %v1422, %v1418
        %v1879 = vpack.c.b16 %v1423, %v1419
        %v1880 = vpack.c.b16 %v1424, %v1420
        %v1881 = vpack.c.b16 %v1425, %v1421
        %v1882 = vpack.c.b16 %v1430, %v1426
        %v1883 = vpack.c.b16 %v1431, %v1427
        %v1884 = vpack.c.b16 %v1432, %v1428
        %v1885 = vpack.c.b16 %v1433, %v1429
        %v1886 = vpack.c.b16 %v1438, %v1434
        %v1887 = vpack.c.b16 %v1439, %v1435
        %v1888 = vpack.c.b16 %v1440, %v1436
        %v1889 = vpack.c.b16 %v1441, %v1437
        %v1890 = vpack.c.b16 %v1446, %v1442
        %v1891 = vpack.c.b16 %v1447, %v1443
        %v1892 = vpack.c.b16 %v1448, %v1444
        %v1893 = vpack.c.b16 %v1449, %v1445
        %v1894 = vpack.c.b16 %v1454, %v1450
        %v1895 = vpack.c.b16 %v1455, %v1451
        %v1896 = vpack.c.b16 %v1456, %v1452
        %v1897 = vpack.c.b16 %v1457, %v1453
        %v1898 = vpack.c.b16 %v1462, %v1458
        %v1899 = vpack.c.b16 %v1463, %v1459
        %v1900 = vpack.c.b16 %v1464, %v1460
        %v1901 = vpack.c.b16 %v1465, %v1461
        %v1902 = vpack.c.b16 %v1470, %v1466
        %v1903 = vpack.c.b16 %v1471, %v1467
        %v1904 = vpack.c.b16 %v1472, %v1468
        %v1905 = vpack.c.b16 %v1473, %v1469
        %v1906 = vpack.c.b16 %v1478, %v1474
        %v1907 = vpack.c.b16 %v1479, %v1475
        %v1908 = vpack.c.b16 %v1480, %v1476
        %v1909 = vpack.c.b16 %v1481, %v1477
        %v1910 = vpack.c.b16 %v1486, %v1482
        %v1911 = vpack.c.b16 %v1487, %v1483
        %v1912 = vpack.c.b16 %v1488, %v1484
        %v1913 = vpack.c.b16 %v1489, %v1485
        %v1914 = vpack.c.b16 %v1494, %v1490
        %v1915 = vpack.c.b16 %v1495, %v1491
        %v1916 = vpack.c.b16 %v1496, %v1492
        %v1917 = vpack.c.b16 %v1497, %v1493
        %v1918 = vpack.c.b16 %v1502, %v1498
        %v1919 = vpack.c.b16 %v1503, %v1499
        %v1920 = vpack.c.b16 %v1504, %v1500
        %v1921 = vpack.c.b16 %v1505, %v1501
        %v1922 = vpack.c.b16 %v1510, %v1506
        %v1923 = vpack.c.b16 %v1511, %v1507
        %v1924 = vpack.c.b16 %v1512, %v1508
        %v1925 = vpack.c.b16 %v1513, %v1509
        %v1926 = vpack.c.b16 %v1518, %v1514
        %v1927 = vpack.c.b16 %v1519, %v1515
        %v1928 = vpack.c.b16 %v1520, %v1516
        %v1929 = vpack.c.b16 %v1521, %v1517
        %v1930 = vpack.c.b16 %v1526, %v1522
        %v1931 = vpack.c.b16 %v1527, %v1523
        %v1932 = vpack.c.b16 %v1528, %v1524
        %v1933 = vpack.c.b16 %v1529, %v1525
        %v1934 = vpack.c.b16 %v1534, %v1530
        %v1935 = vpack.c.b16 %v1535, %v1531
        %v1936 = vpack.c.b16 %v1536, %v1532
        %v1937 = vpack.c.b16 %v1537, %v1533
        %v1938 = vpack.c.b16 %v1542, %v1538
        %v1939 = vpack.c.b16 %v1543, %v1539
        %v1940 = vpack.c.b16 %v1544, %v1540
        %v1941 = vpack.c.b16 %v1545, %v1541
        %v1942 = vpack.c.b16 %v1550, %v1546
        %v1943 = vpack.c.b16 %v1551, %v1547
        %v1944 = vpack.c.b16 %v1552, %v1548
        %v1945 = vpack.c.b16 %v1553, %v1549
        %v1946 = vpack.c.b16 %v1558, %v1554
        %v1947 = vpack.c.b16 %v1559, %v1555
        %v1948 = vpack.c.b16 %v1560, %v1556
        %v1949 = vpack.c.b16 %v1561, %v1557
        %v1950 = vpack.c.b16 %v1566, %v1562
        %v1951 = vpack.c.b16 %v1567, %v1563
        %v1952 = vpack.c.b16 %v1568, %v1564
        %v1953 = vpack.c.b16 %v1569, %v1565
        %v1954 = vpack.c.b16 %v1574, %v1570
        %v1955 = vpack.c.b16 %v1575, %v1571
        %v1956 = vpack.c.b16 %v1576, %v1572
        %v1957 = vpack.c.b16 %v1577, %v1573
        %v1958 = vpack.c.b16 %v1582, %v1578
        %v1959 = vpack.c.b16 %v1583, %v1579
        %v1960 = vpack.c.b16 %v1584, %v1580
        %v1961 = vpack.c.b16 %v1585, %v1581
        %v1962 = vpack.c.b16 %v1590, %v1586
        %v1963 = vpack.c.b16 %v1591, %v1587
        %v1964 = vpack.c.b16 %v1592, %v1588
        %v1965 = vpack.c.b16 %v1593, %v1589
        %v1966 = vpack.c.b16 %v1598, %v1594
        %v1967 = vpack.c.b16 %v1599, %v1595
        %v1968 = vpack.c.b16 %v1600, %v1596
        %v1969 = vpack.c.b16 %v1601, %v1597
        %v1970 = vpack.c.b16 %v1606, %v1602
        %v1971 = vpack.c.b16 %v1607, %v1603
        %v1972 = vpack.c.b16 %v1608, %v1604
        %v1973 = vpack.c.b16 %v1609, %v1605
        %v1974 = vpack.c.b16 %v1614, %v1610
        %v1975 = vpack.c.b16 %v1615, %v1611
        %v1976 = vpack.c.b16 %v1616, %v1612
        %v1977 = vpack.c.b16 %v1617, %v1613
        %v1978 = vpack.c.b16 %v1622, %v1618
        %v1979 = vpack.c.b16 %v1623, %v1619
        %v1980 = vpack.c.b16 %v1624, %v1620
        %v1981 = vpack.c.b16 %v1625, %v1621
        %v1982 = vpack.c.b16 %v1630, %v1626
        %v1983 = vpack.c.b16 %v1631, %v1627
        %v1984 = vpack.c.b16 %v1632, %v1628
        %v1985 = vpack.c.b16 %v1633, %v1629
        %v1986 = vpack.c.b16 %v1638, %v1634
        %v1987 = vpack.c.b16 %v1639, %v1635
        %v1988 = vpack.c.b16 %v1640, %v1636
        %v1989 = vpack.c.b16 %v1641, %v1637
        %v1990 = vpack.c.b16 %v1646, %v1642
        %v1991 = vpack.c.b16 %v1647, %v1643
        %v1992 = vpack.c.b16 %v1648, %v1644
        %v1993 = vpack.c.b16 %v1649, %v1645
        %v1994 = vpack.c.b16 %v1654, %v1650
        %v1995 = vpack.c.b16 %v1655, %v1651
        %v1996 = vpack.c.b16 %v1656, %v1652
        %v1997 = vpack.c.b16 %v1657, %v1653
        %v1998 = vpack.c.b16 %v1662, %v1658
        %v1999 = vpack.c.b16 %v1663, %v1659
        %v2000 = vpack.c.b16 %v1664, %v1660
        %v2001 = vpack.c.b16 %v1665, %v1661
        %v2002 = vpack.c.b16 %v1670, %v1666
        %v2003 = vpack.c.b16 %v1671, %v1667
        %v2004 = vpack.c.b16 %v1672, %v1668
        %v2005 = vpack.c.b16 %v1673, %v1669
        %v2006 = vpack.c.b16 %v1678, %v1674
        %v2007 = vpack.c.b16 %v1679, %v1675
        %v2008 = vpack.c.b16 %v1680, %v1676
        %v2009 = vpack.c.b16 %v1681, %v1677
        %v2010 = vpack.c.b16 %v1686, %v1682
        %v2011 = vpack.c.b16 %v1687, %v1683
        %v2012 = vpack.c.b16 %v1688, %v1684
        %v2013 = vpack.c.b16 %v1689, %v1685
        %v2014 = vpack.c.b16 %v1694, %v1690
        %v2015 = vpack.c.b16 %v1695, %v1691
        %v2016 = vpack.c.b16 %v1696, %v1692
        %v2017 = vpack.c.b16 %v1697, %v1693
        %2338 = vmatprep.subr.bf16.mxu0 %v1699
        %2339 = vmatpush1.bf16.msra.mxu0 %v1698
        %2340 = vmatprep.subr.bf16.mxu0 %v1703
        %2341 = vmatpush1.bf16.msra.mxu0 %v1702
        %2342 = vmatprep.subr.bf16.mxu0 %v1707
        %2343 = vmatpush1.bf16.msra.mxu0 %v1706
        %2344 = vmatprep.subr.bf16.mxu0 %v1711
        %2345 = vmatpush1.bf16.msra.mxu0 %v1710
        %2346 = vmatprep.subr.bf16.mxu0 %v1715
        %2347 = vmatpush1.bf16.msra.mxu0 %v1714
        %2348 = vmatprep.subr.bf16.mxu0 %v1719
        %2349 = vmatpush1.bf16.msra.mxu0 %v1718
        %2350 = vmatprep.subr.bf16.mxu0 %v1723
        %2351 = vmatpush1.bf16.msra.mxu0 %v1722
        %2352 = vmatprep.subr.bf16.mxu0 %v1727
        %2353 = vmatpush1.bf16.msra.mxu0 %v1726
        %2354 = vmatprep.subr.bf16.mxu0 %v1731
        %2355 = vmatpush1.bf16.msra.mxu0 %v1730
        %2356 = vmatprep.subr.bf16.mxu0 %v1735
        %2357 = vmatpush1.bf16.msra.mxu0 %v1734
        %2358 = vmatprep.subr.bf16.mxu0 %v1739
        %2359 = vmatpush1.bf16.msra.mxu0 %v1738
        %2360 = vmatprep.subr.bf16.mxu0 %v1743
        %2361 = vmatpush1.bf16.msra.mxu0 %v1742
        %2362 = vmatprep.subr.bf16.mxu0 %v1747
        %2363 = vmatpush1.bf16.msra.mxu0 %v1746
        %2364 = vmatprep.subr.bf16.mxu0 %v1751
        %2365 = vmatpush1.bf16.msra.mxu0 %v1750
        %2366 = vmatprep.subr.bf16.mxu0 %v1755
        %2367 = vmatpush1.bf16.msra.mxu0 %v1754
        %2368 = vmatprep.subr.bf16.mxu0 %v1759
        %2369 = vmatpush1.bf16.msra.mxu0 %v1758
        %2370 = vmatprep.mubr.bf16.mxu0 %v387
        %2371 = vmatmul.mubr.bf16.gmra.mrb[0].mxu0 %v386
        %v2372 = vpop.f32.mrb[0].mxu0
        %v2373 = vadd.f32 %v721, %v2372
        %v2374 = vpop.f32.mrb[0].mxu0
        %v2375 = vadd.f32 %v725, %v2374
        %v2376 = vpop.f32.mrb[0].mxu0
        %v2377 = vpop.f32.mrb[0].mxu0
        %2378 = vdwg.mxu0
        %2379 = vmatprep.subr.bf16.mxu0 %v1763
        %2380 = vmatpush1.bf16.msra.mxu0 %v1762
        %2381 = vmatprep.subr.bf16.mxu0 %v1767
        %2382 = vmatpush1.bf16.msra.mxu0 %v1766
        %2383 = vmatprep.subr.bf16.mxu0 %v1771
        %2384 = vmatpush1.bf16.msra.mxu0 %v1770
        %2385 = vmatprep.subr.bf16.mxu0 %v1775
        %2386 = vmatpush1.bf16.msra.mxu0 %v1774
        %2387 = vmatprep.subr.bf16.mxu0 %v1779
        %2388 = vmatpush1.bf16.msra.mxu0 %v1778
        %2389 = vmatprep.subr.bf16.mxu0 %v1783
        %2390 = vmatpush1.bf16.msra.mxu0 %v1782
        %2391 = vmatprep.subr.bf16.mxu0 %v1787
        %2392 = vmatpush1.bf16.msra.mxu0 %v1786
        %2393 = vmatprep.subr.bf16.mxu0 %v1791
        %2394 = vmatpush1.bf16.msra.mxu0 %v1790
        %2395 = vmatprep.subr.bf16.mxu0 %v1795
        %2396 = vmatpush1.bf16.msra.mxu0 %v1794
        %2397 = vmatprep.subr.bf16.mxu0 %v1799
        %2398 = vmatpush1.bf16.msra.mxu0 %v1798
        %2399 = vmatprep.subr.bf16.mxu0 %v1803
        %2400 = vmatpush1.bf16.msra.mxu0 %v1802
        %2401 = vmatprep.subr.bf16.mxu0 %v1807
        %2402 = vmatpush1.bf16.msra.mxu0 %v1806
        %2403 = vmatprep.subr.bf16.mxu0 %v1811
        %2404 = vmatpush1.bf16.msra.mxu0 %v1810
        %2405 = vmatprep.subr.bf16.mxu0 %v1815
        %2406 = vmatpush1.bf16.msra.mxu0 %v1814
        %2407 = vmatprep.subr.bf16.mxu0 %v1819
        %2408 = vmatpush1.bf16.msra.mxu0 %v1818
        %2409 = vmatprep.subr.bf16.mxu0 %v1823
        %2410 = vmatpush1.bf16.msra.mxu0 %v1822
        %2411 = vmatprep.mubr.bf16.mxu0 %v389
        %2412 = vmatmul.mubr.bf16.gmra.mrb[0].mxu0 %v388
        %v2413 = vpop.f32.mrb[0].mxu0
        %v2414 = vadd.f32 %v2373, %v2413
        %v2415 = vpop.f32.mrb[0].mxu0
        %v2416 = vadd.f32 %v2375, %v2415
        %v2417 = vpop.f32.mrb[0].mxu0
        %v2418 = vpop.f32.mrb[0].mxu0
        %2419 = vdwg.mxu0
        %2420 = vmatprep.subr.bf16.mxu0 %v1827
        %2421 = vmatpush1.bf16.msra.mxu0 %v1826
        %2422 = vmatprep.subr.bf16.mxu0 %v1831
        %2423 = vmatpush1.bf16.msra.mxu0 %v1830
        %2424 = vmatprep.subr.bf16.mxu0 %v1835
        %2425 = vmatpush1.bf16.msra.mxu0 %v1834
        %2426 = vmatprep.subr.bf16.mxu0 %v1839
        %2427 = vmatpush1.bf16.msra.mxu0 %v1838
        %2428 = vmatprep.subr.bf16.mxu0 %v1843
        %2429 = vmatpush1.bf16.msra.mxu0 %v1842
        %2430 = vmatprep.subr.bf16.mxu0 %v1847
        %2431 = vmatpush1.bf16.msra.mxu0 %v1846
        %2432 = vmatprep.subr.bf16.mxu0 %v1851
        %2433 = vmatpush1.bf16.msra.mxu0 %v1850
        %2434 = vmatprep.subr.bf16.mxu0 %v1855
        %2435 = vmatpush1.bf16.msra.mxu0 %v1854
        %2436 = vmatprep.subr.bf16.mxu0 %v1859
        %2437 = vmatpush1.bf16.msra.mxu0 %v1858
        %2438 = vmatprep.subr.bf16.mxu0 %v1863
        %2439 = vmatpush1.bf16.msra.mxu0 %v1862
        %2440 = vmatprep.subr.bf16.mxu0 %v1867
        %2441 = vmatpush1.bf16.msra.mxu0 %v1866
        %2442 = vmatprep.subr.bf16.mxu0 %v1871
        %2443 = vmatpush1.bf16.msra.mxu0 %v1870
        %2444 = vmatprep.subr.bf16.mxu0 %v1875
        %2445 = vmatpush1.bf16.msra.mxu0 %v1874
        %2446 = vmatprep.subr.bf16.mxu0 %v1879
        %2447 = vmatpush1.bf16.msra.mxu0 %v1878
        %2448 = vmatprep.subr.bf16.mxu0 %v1883
        %2449 = vmatpush1.bf16.msra.mxu0 %v1882
        %2450 = vmatprep.subr.bf16.mxu0 %v1887
        %2451 = vmatpush1.bf16.msra.mxu0 %v1886
        %2452 = vmatprep.mubr.bf16.mxu0 %v391
        %2453 = vmatmul.mubr.bf16.gmra.mrb[0].mxu0 %v390
        %v2454 = vpop.f32.mrb[0].mxu0
        %v2455 = vadd.f32 %v2414, %v2454
        %v2456 = vpop.f32.mrb[0].mxu0
        %v2457 = vadd.f32 %v2416, %v2456
        %v2458 = vpop.f32.mrb[0].mxu0
        %v2459 = vpop.f32.mrb[0].mxu0
        %2460 = vdwg.mxu0
        %2461 = vmatprep.subr.bf16.mxu0 %v1891
        %2462 = vmatpush1.bf16.msra.mxu0 %v1890
        %2463 = vmatprep.subr.bf16.mxu0 %v1895
        %2464 = vmatpush1.bf16.msra.mxu0 %v1894
        %2465 = vmatprep.subr.bf16.mxu0 %v1899
        %2466 = vmatpush1.bf16.msra.mxu0 %v1898
        %2467 = vmatprep.subr.bf16.mxu0 %v1903
        %2468 = vmatpush1.bf16.msra.mxu0 %v1902
        %2469 = vmatprep.subr.bf16.mxu0 %v1907
        %2470 = vmatpush1.bf16.msra.mxu0 %v1906
        %2471 = vmatprep.subr.bf16.mxu0 %v1911
        %2472 = vmatpush1.bf16.msra.mxu0 %v1910
        %2473 = vmatprep.subr.bf16.mxu0 %v1915
        %2474 = vmatpush1.bf16.msra.mxu0 %v1914
        %2475 = vmatprep.subr.bf16.mxu0 %v1919
        %2476 = vmatpush1.bf16.msra.mxu0 %v1918
        %2477 = vmatprep.subr.bf16.mxu0 %v1923
        %2478 = vmatpush1.bf16.msra.mxu0 %v1922
        %2479 = vmatprep.subr.bf16.mxu0 %v1927
        %2480 = vmatpush1.bf16.msra.mxu0 %v1926
        %2481 = vmatprep.subr.bf16.mxu0 %v1931
        %2482 = vmatpush1.bf16.msra.mxu0 %v1930
        %2483 = vmatprep.subr.bf16.mxu0 %v1935
        %2484 = vmatpush1.bf16.msra.mxu0 %v1934
        %2485 = vmatprep.subr.bf16.mxu0 %v1939
        %2486 = vmatpush1.bf16.msra.mxu0 %v1938
        %2487 = vmatprep.subr.bf16.mxu0 %v1943
        %2488 = vmatpush1.bf16.msra.mxu0 %v1942
        %2489 = vmatprep.subr.bf16.mxu0 %v1947
        %2490 = vmatpush1.bf16.msra.mxu0 %v1946
        %2491 = vmatprep.subr.bf16.mxu0 %v1951
        %2492 = vmatpush1.bf16.msra.mxu0 %v1950
        %2493 = vmatprep.mubr.bf16.mxu0 %v393
        %2494 = vmatmul.mubr.bf16.gmra.mrb[0].mxu0 %v392
        %v2495 = vpop.f32.mrb[0].mxu0
        %v2496 = vadd.f32 %v2455, %v2495
        %v2497 = vpop.f32.mrb[0].mxu0
        %v2498 = vadd.f32 %v2457, %v2497
        %v2499 = vpop.f32.mrb[0].mxu0
        %v2500 = vpop.f32.mrb[0].mxu0
        %2501 = vdwg.mxu0
        %2502 = vmatprep.subr.bf16.mxu0 %v1955
        %2503 = vmatpush1.bf16.msra.mxu0 %v1954
        %2504 = vmatprep.subr.bf16.mxu0 %v1959
        %2505 = vmatpush1.bf16.msra.mxu0 %v1958
        %2506 = vmatprep.subr.bf16.mxu0 %v1963
        %2507 = vmatpush1.bf16.msra.mxu0 %v1962
        %2508 = vmatprep.subr.bf16.mxu0 %v1967
        %2509 = vmatpush1.bf16.msra.mxu0 %v1966
        %2510 = vmatprep.subr.bf16.mxu0 %v1971
        %2511 = vmatpush1.bf16.msra.mxu0 %v1970
        %2512 = vmatprep.subr.bf16.mxu0 %v1975
        %2513 = vmatpush1.bf16.msra.mxu0 %v1974
        %2514 = vmatprep.subr.bf16.mxu0 %v1979
        %2515 = vmatpush1.bf16.msra.mxu0 %v1978
        %2516 = vmatprep.subr.bf16.mxu0 %v1983
        %2517 = vmatpush1.bf16.msra.mxu0 %v1982
        %2518 = vmatprep.subr.bf16.mxu0 %v1987
        %2519 = vmatpush1.bf16.msra.mxu0 %v1986
        %2520 = vmatprep.subr.bf16.mxu0 %v1991
        %2521 = vmatpush1.bf16.msra.mxu0 %v1990
        %2522 = vmatprep.subr.bf16.mxu0 %v1995
        %2523 = vmatpush1.bf16.msra.mxu0 %v1994
        %2524 = vmatprep.subr.bf16.mxu0 %v1999
        %2525 = vmatpush1.bf16.msra.mxu0 %v1998
        %2526 = vmatprep.subr.bf16.mxu0 %v2003
        %2527 = vmatpush1.bf16.msra.mxu0 %v2002
        %2528 = vmatprep.subr.bf16.mxu0 %v2007
        %2529 = vmatpush1.bf16.msra.mxu0 %v2006
        %2530 = vmatprep.subr.bf16.mxu0 %v2011
        %2531 = vmatpush1.bf16.msra.mxu0 %v2010
        %2532 = vmatprep.subr.bf16.mxu0 %v2015
        %2533 = vmatpush1.bf16.msra.mxu0 %v2014
        %2534 = vmatprep.mubr.bf16.mxu0 %v395
        %2535 = vmatmul.mubr.bf16.gmra.mrb[0].mxu0 %v394
        %v2536 = vpop.f32.mrb[0].mxu0
        %v2537 = vadd.f32 %v2496, %v2536
        %v2538 = vpop.f32.mrb[0].mxu0
        %v2539 = vadd.f32 %v2498, %v2538
        %v2540 = vpop.f32.mrb[0].mxu0
        %v2541 = vpop.f32.mrb[0].mxu0
        %2542 = vdwg.mxu0
        %2543 = vmatprep.subr.bf16.mxu0 %v1701
        %2544 = vmatpush1.bf16.msra.mxu0 %v1700
        %2545 = vmatprep.subr.bf16.mxu0 %v1705
        %2546 = vmatpush1.bf16.msra.mxu0 %v1704
        %2547 = vmatprep.subr.bf16.mxu0 %v1709
        %2548 = vmatpush1.bf16.msra.mxu0 %v1708
        %2549 = vmatprep.subr.bf16.mxu0 %v1713
        %2550 = vmatpush1.bf16.msra.mxu0 %v1712
        %2551 = vmatprep.subr.bf16.mxu0 %v1717
        %2552 = vmatpush1.bf16.msra.mxu0 %v1716
        %2553 = vmatprep.subr.bf16.mxu0 %v1721
        %2554 = vmatpush1.bf16.msra.mxu0 %v1720
        %2555 = vmatprep.subr.bf16.mxu0 %v1725
        %2556 = vmatpush1.bf16.msra.mxu0 %v1724
        %2557 = vmatprep.subr.bf16.mxu0 %v1729
        %2558 = vmatpush1.bf16.msra.mxu0 %v1728
        %2559 = vmatprep.subr.bf16.mxu0 %v1733
        %2560 = vmatpush1.bf16.msra.mxu0 %v1732
        %2561 = vmatprep.subr.bf16.mxu0 %v1737
        %2562 = vmatpush1.bf16.msra.mxu0 %v1736
        %2563 = vmatprep.subr.bf16.mxu0 %v1741
        %2564 = vmatpush1.bf16.msra.mxu0 %v1740
        %2565 = vmatprep.subr.bf16.mxu0 %v1745
        %2566 = vmatpush1.bf16.msra.mxu0 %v1744
        %2567 = vmatprep.subr.bf16.mxu0 %v1749
        %2568 = vmatpush1.bf16.msra.mxu0 %v1748
        %2569 = vmatprep.subr.bf16.mxu0 %v1753
        %2570 = vmatpush1.bf16.msra.mxu0 %v1752
        %2571 = vmatprep.subr.bf16.mxu0 %v1757
        %2572 = vmatpush1.bf16.msra.mxu0 %v1756
        %2573 = vmatprep.subr.bf16.mxu0 %v1761
        %2574 = vmatpush1.bf16.msra.mxu0 %v1760
        %2575 = vmatprep.mubr.bf16.mxu0 %v387
        %2576 = vmatmul.mubr.bf16.gmra.mrb[0].mxu0 %v386
        %v2577 = vpop.f32.mrb[0].mxu0
        %v2578 = vadd.f32 %v729, %v2577
        %v2579 = vpop.f32.mrb[0].mxu0
        %v2580 = vadd.f32 %v733, %v2579
        %v2581 = vpop.f32.mrb[0].mxu0
        %v2582 = vpop.f32.mrb[0].mxu0
        %2583 = vdwg.mxu0
        %2584 = vmatprep.subr.bf16.mxu0 %v1765
        %2585 = vmatpush1.bf16.msra.mxu0 %v1764
        %2586 = vmatprep.subr.bf16.mxu0 %v1769
        %2587 = vmatpush1.bf16.msra.mxu0 %v1768
        %2588 = vmatprep.subr.bf16.mxu0 %v1773
        %2589 = vmatpush1.bf16.msra.mxu0 %v1772
        %2590 = vmatprep.subr.bf16.mxu0 %v1777
        %2591 = vmatpush1.bf16.msra.mxu0 %v1776
        %2592 = vmatprep.subr.bf16.mxu0 %v1781
        %2593 = vmatpush1.bf16.msra.mxu0 %v1780
        %2594 = vmatprep.subr.bf16.mxu0 %v1785
        %2595 = vmatpush1.bf16.msra.mxu0 %v1784
        %2596 = vmatprep.subr.bf16.mxu0 %v1789
        %2597 = vmatpush1.bf16.msra.mxu0 %v1788
        %2598 = vmatprep.subr.bf16.mxu0 %v1793
        %2599 = vmatpush1.bf16.msra.mxu0 %v1792
        %2600 = vmatprep.subr.bf16.mxu0 %v1797
        %2601 = vmatpush1.bf16.msra.mxu0 %v1796
        %2602 = vmatprep.subr.bf16.mxu0 %v1801
        %2603 = vmatpush1.bf16.msra.mxu0 %v1800
        %2604 = vmatprep.subr.bf16.mxu0 %v1805
        %2605 = vmatpush1.bf16.msra.mxu0 %v1804
        %2606 = vmatprep.subr.bf16.mxu0 %v1809
        %2607 = vmatpush1.bf16.msra.mxu0 %v1808
        %2608 = vmatprep.subr.bf16.mxu0 %v1813
        %2609 = vmatpush1.bf16.msra.mxu0 %v1812
        %2610 = vmatprep.subr.bf16.mxu0 %v1817
        %2611 = vmatpush1.bf16.msra.mxu0 %v1816
        %2612 = vmatprep.subr.bf16.mxu0 %v1821
        %2613 = vmatpush1.bf16.msra.mxu0 %v1820
        %2614 = vmatprep.subr.bf16.mxu0 %v1825
        %2615 = vmatpush1.bf16.msra.mxu0 %v1824
        %2616 = vmatprep.mubr.bf16.mxu0 %v389
        %2617 = vmatmul.mubr.bf16.gmra.mrb[0].mxu0 %v388
        %v2618 = vpop.f32.mrb[0].mxu0
        %v2619 = vadd.f32 %v2578, %v2618
        %v2620 = vpop.f32.mrb[0].mxu0
        %v2621 = vadd.f32 %v2580, %v2620
        %v2622 = vpop.f32.mrb[0].mxu0
        %v2623 = vpop.f32.mrb[0].mxu0
        %2624 = vdwg.mxu0
        %2625 = vmatprep.subr.bf16.mxu0 %v1829
        %2626 = vmatpush1.bf16.msra.mxu0 %v1828
        %2627 = vmatprep.subr.bf16.mxu0 %v1833
        %2628 = vmatpush1.bf16.msra.mxu0 %v1832
        %2629 = vmatprep.subr.bf16.mxu0 %v1837
        %2630 = vmatpush1.bf16.msra.mxu0 %v1836
        %2631 = vmatprep.subr.bf16.mxu0 %v1841
        %2632 = vmatpush1.bf16.msra.mxu0 %v1840
        %2633 = vmatprep.subr.bf16.mxu0 %v1845
        %2634 = vmatpush1.bf16.msra.mxu0 %v1844
        %2635 = vmatprep.subr.bf16.mxu0 %v1849
        %2636 = vmatpush1.bf16.msra.mxu0 %v1848
        %2637 = vmatprep.subr.bf16.mxu0 %v1853
        %2638 = vmatpush1.bf16.msra.mxu0 %v1852
        %2639 = vmatprep.subr.bf16.mxu0 %v1857
        %2640 = vmatpush1.bf16.msra.mxu0 %v1856
        %2641 = vmatprep.subr.bf16.mxu0 %v1861
        %2642 = vmatpush1.bf16.msra.mxu0 %v1860
        %2643 = vmatprep.subr.bf16.mxu0 %v1865
        %2644 = vmatpush1.bf16.msra.mxu0 %v1864
        %2645 = vmatprep.subr.bf16.mxu0 %v1869
        %2646 = vmatpush1.bf16.msra.mxu0 %v1868
        %2647 = vmatprep.subr.bf16.mxu0 %v1873
        %2648 = vmatpush1.bf16.msra.mxu0 %v1872
        %2649 = vmatprep.subr.bf16.mxu0 %v1877
        %2650 = vmatpush1.bf16.msra.mxu0 %v1876
        %2651 = vmatprep.subr.bf16.mxu0 %v1881
        %2652 = vmatpush1.bf16.msra.mxu0 %v1880
        %2653 = vmatprep.subr.bf16.mxu0 %v1885
        %2654 = vmatpush1.bf16.msra.mxu0 %v1884
        %2655 = vmatprep.subr.bf16.mxu0 %v1889
        %2656 = vmatpush1.bf16.msra.mxu0 %v1888
        %2657 = vmatprep.mubr.bf16.mxu0 %v391
        %2658 = vmatmul.mubr.bf16.gmra.mrb[0].mxu0 %v390
        %v2659 = vpop.f32.mrb[0].mxu0
        %v2660 = vadd.f32 %v2619, %v2659
        %v2661 = vpop.f32.mrb[0].mxu0
        %v2662 = vadd.f32 %v2621, %v2661
        %v2663 = vpop.f32.mrb[0].mxu0
        %v2664 = vpop.f32.mrb[0].mxu0
        %2665 = vdwg.mxu0
        %2666 = vmatprep.subr.bf16.mxu0 %v1893
        %2667 = vmatpush1.bf16.msra.mxu0 %v1892
        %2668 = vmatprep.subr.bf16.mxu0 %v1897
        %2669 = vmatpush1.bf16.msra.mxu0 %v1896
        %2670 = vmatprep.subr.bf16.mxu0 %v1901
        %2671 = vmatpush1.bf16.msra.mxu0 %v1900
        %2672 = vmatprep.subr.bf16.mxu0 %v1905
        %2673 = vmatpush1.bf16.msra.mxu0 %v1904
        %2674 = vmatprep.subr.bf16.mxu0 %v1909
        %2675 = vmatpush1.bf16.msra.mxu0 %v1908
        %2676 = vmatprep.subr.bf16.mxu0 %v1913
        %2677 = vmatpush1.bf16.msra.mxu0 %v1912
        %2678 = vmatprep.subr.bf16.mxu0 %v1917
        %2679 = vmatpush1.bf16.msra.mxu0 %v1916
        %2680 = vmatprep.subr.bf16.mxu0 %v1921
        %2681 = vmatpush1.bf16.msra.mxu0 %v1920
        %2682 = vmatprep.subr.bf16.mxu0 %v1925
        %2683 = vmatpush1.bf16.msra.mxu0 %v1924
        %2684 = vmatprep.subr.bf16.mxu0 %v1929
        %2685 = vmatpush1.bf16.msra.mxu0 %v1928
        %2686 = vmatprep.subr.bf16.mxu0 %v1933
        %2687 = vmatpush1.bf16.msra.mxu0 %v1932
        %2688 = vmatprep.subr.bf16.mxu0 %v1937
        %2689 = vmatpush1.bf16.msra.mxu0 %v1936
        %2690 = vmatprep.subr.bf16.mxu0 %v1941
        %2691 = vmatpush1.bf16.msra.mxu0 %v1940
        %2692 = vmatprep.subr.bf16.mxu0 %v1945
        %2693 = vmatpush1.bf16.msra.mxu0 %v1944
        %2694 = vmatprep.subr.bf16.mxu0 %v1949
        %2695 = vmatpush1.bf16.msra.mxu0 %v1948
        %2696 = vmatprep.subr.bf16.mxu0 %v1953
        %2697 = vmatpush1.bf16.msra.mxu0 %v1952
        %2698 = vmatprep.mubr.bf16.mxu0 %v393
        %2699 = vmatmul.mubr.bf16.gmra.mrb[0].mxu0 %v392
        %v2700 = vpop.f32.mrb[0].mxu0
        %v2701 = vadd.f32 %v2660, %v2700
        %v2702 = vpop.f32.mrb[0].mxu0
        %v2703 = vadd.f32 %v2662, %v2702
        %v2704 = vpop.f32.mrb[0].mxu0
        %v2705 = vpop.f32.mrb[0].mxu0
        %2706 = vdwg.mxu0
        %2707 = vmatprep.subr.bf16.mxu0 %v1957
        %2708 = vmatpush1.bf16.msra.mxu0 %v1956
        %2709 = vmatprep.subr.bf16.mxu0 %v1961
        %2710 = vmatpush1.bf16.msra.mxu0 %v1960
        %2711 = vmatprep.subr.bf16.mxu0 %v1965
        %2712 = vmatpush1.bf16.msra.mxu0 %v1964
        %2713 = vmatprep.subr.bf16.mxu0 %v1969
        %2714 = vmatpush1.bf16.msra.mxu0 %v1968
        %2715 = vmatprep.subr.bf16.mxu0 %v1973
        %2716 = vmatpush1.bf16.msra.mxu0 %v1972
        %2717 = vmatprep.subr.bf16.mxu0 %v1977
        %2718 = vmatpush1.bf16.msra.mxu0 %v1976
        %2719 = vmatprep.subr.bf16.mxu0 %v1981
        %2720 = vmatpush1.bf16.msra.mxu0 %v1980
        %2721 = vmatprep.subr.bf16.mxu0 %v1985
        %2722 = vmatpush1.bf16.msra.mxu0 %v1984
        %2723 = vmatprep.subr.bf16.mxu0 %v1989
        %2724 = vmatpush1.bf16.msra.mxu0 %v1988
        %2725 = vmatprep.subr.bf16.mxu0 %v1993
        %2726 = vmatpush1.bf16.msra.mxu0 %v1992
        %2727 = vmatprep.subr.bf16.mxu0 %v1997
        %2728 = vmatpush1.bf16.msra.mxu0 %v1996
        %2729 = vmatprep.subr.bf16.mxu0 %v2001
        %2730 = vmatpush1.bf16.msra.mxu0 %v2000
        %2731 = vmatprep.subr.bf16.mxu0 %v2005
        %2732 = vmatpush1.bf16.msra.mxu0 %v2004
        %2733 = vmatprep.subr.bf16.mxu0 %v2009
        %2734 = vmatpush1.bf16.msra.mxu0 %v2008
        %2735 = vmatprep.subr.bf16.mxu0 %v2013
        %2736 = vmatpush1.bf16.msra.mxu0 %v2012
        %2737 = vmatprep.subr.bf16.mxu0 %v2017
        %2738 = vmatpush1.bf16.msra.mxu0 %v2016
        %2739 = vmatprep.mubr.bf16.mxu0 %v395
        %2740 = vmatmul.mubr.bf16.gmra.mrb[0].mxu0 %v394
        %v2741 = vpop.f32.mrb[0].mxu0
        %v2742 = vadd.f32 %v2701, %v2741
        %v2743 = vpop.f32.mrb[0].mxu0
        %v2744 = vadd.f32 %v2703, %v2743
        %v2745 = vpop.f32.mrb[0].mxu0
        %v2746 = vpop.f32.mrb[0].mxu0
        %2747 = vdwg.mxu0
        %v2748 = vmul.f32 %v2537, %v2537
        %v2749 = vmul.f32 %v2539, %v2539
        %v2750 = vmul.f32 %v2742, %v2742
        %v2751 = vmul.f32 %v2744, %v2744
        %v2752 = vmul.f32 %v2748, %v2537
        %v2753 = vmul.f32 %v2749, %v2539
        %v2754 = vmul.f32 %v2750, %v2742
        %v2755 = vmul.f32 %v2751, %v2744
        %v2756 = vmul.f32 %v2537, 0.5
        %v2757 = vmul.f32 %v2539, 0.5
        %v2758 = vmul.f32 %v2742, 0.5
        %v2759 = vmul.f32 %v2744, 0.5
        %v2760 = vmul.f32 %v2752, 0.044715
        %v2761 = vmul.f32 %v2753, 0.044715
        %v2762 = vmul.f32 %v2754, 0.044715
        %v2763 = vmul.f32 %v2755, 0.044715
        %v2764 = vadd.f32 %v2537, %v2760
        %v2765 = vadd.f32 %v2539, %v2761
        %v2766 = vadd.f32 %v2742, %v2762
        %v2767 = vadd.f32 %v2744, %v2763
        %v2768 = vmul.f32 %v2764, 0.7978846
        %v2769 = vmul.f32 %v2765, 0.7978846
        %v2770 = vmul.f32 %v2766, 0.7978846
        %v2771 = vmul.f32 %v2767, 0.7978846
        %v2772 = vtanh.pop %v2768
        %v2773 = vtanh.pop %v2769
        %v2774 = vtanh.pop %v2770
        %v2775 = vtanh.pop %v2771
        %v2776 = vadd.f32 %v2772, 1.0
        %v2777 = vadd.f32 %v2773, 1.0
        %v2778 = vadd.f32 %v2774, 1.0
        %v2779 = vadd.f32 %v2775, 1.0
        %v2780 = vmul.f32 %v2756, %v2776
        %v2781 = vmul.f32 %v2757, %v2777
        %v2782 = vmul.f32 %v2758, %v2778
        %v2783 = vmul.f32 %v2759, %v2779
        %v2784 = vpack.c.bf16 %v2780, %v2780
        %v2785 = vpack.c.bf16 %v2781, %v2781
        %v2786 = vpack.c.bf16 %v2782, %v2782
        %v2787 = vpack.c.bf16 %v2783, %v2783
        %v2788 = vld [vmem:[#allocation8] sm:$0xff]
        %v2789 = vld [vmem:[#allocation8 + $0x8] sm:$0xff]
        %v2790 = vld [vmem:[#allocation8 + $0x10] sm:$0xff]
        %v2791 = vld [vmem:[#allocation8 + $0x18] sm:$0xff]
        %v2792 = vld [vmem:[#allocation8 + $0x20] sm:$0xff]
        %v2793 = vld [vmem:[#allocation8 + $0x28] sm:$0xff]
        %v2794 = vld [vmem:[#allocation8 + $0x30] sm:$0xff]
        %v2795 = vld [vmem:[#allocation8 + $0x38] sm:$0xff]
        %v2796 = vld [vmem:[#allocation8 + $0x40] sm:$0xff]
        %v2797 = vld [vmem:[#allocation8 + $0x48] sm:$0xff]
        %v2798 = vld [vmem:[#allocation8 + $0x50] sm:$0xff]
        %v2799 = vld [vmem:[#allocation8 + $0x58] sm:$0xff]
        %v2800 = vld [vmem:[#allocation8 + $0x60] sm:$0xff]
        %v2801 = vld [vmem:[#allocation8 + $0x68] sm:$0xff]
        %v2802 = vld [vmem:[#allocation8 + $0x70] sm:$0xff]
        %v2803 = vld [vmem:[#allocation8 + $0x78] sm:$0xff]
        %v2804 = vld [vmem:[#allocation8 + $0x80] sm:$0xff]
        %v2805 = vld [vmem:[#allocation8 + $0x88] sm:$0xff]
        %v2806 = vld [vmem:[#allocation8 + $0x90] sm:$0xff]
        %v2807 = vld [vmem:[#allocation8 + $0x98] sm:$0xff]
        %v2808 = vld [vmem:[#allocation8 + $0xa0] sm:$0xff]
        %v2809 = vld [vmem:[#allocation8 + $0xa8] sm:$0xff]
        %v2810 = vld [vmem:[#allocation8 + $0xb0] sm:$0xff]
        %v2811 = vld [vmem:[#allocation8 + $0xb8] sm:$0xff]
        %v2812 = vld [vmem:[#allocation8 + $0xc0] sm:$0xff]
        %v2813 = vld [vmem:[#allocation8 + $0xc8] sm:$0xff]
        %v2814 = vld [vmem:[#allocation8 + $0xd0] sm:$0xff]
        %v2815 = vld [vmem:[#allocation8 + $0xd8] sm:$0xff]
        %v2816 = vld [vmem:[#allocation8 + $0xe0] sm:$0xff]
        %v2817 = vld [vmem:[#allocation8 + $0xe8] sm:$0xff]
        %v2818 = vld [vmem:[#allocation8 + $0xf0] sm:$0xff]
        %v2819 = vld [vmem:[#allocation8 + $0xf8] sm:$0xff]
        %v2820 = vld [vmem:[#allocation8 + $0x100] sm:$0xff]
        %v2821 = vld [vmem:[#allocation8 + $0x108] sm:$0xff]
        %v2822 = vld [vmem:[#allocation8 + $0x110] sm:$0xff]
        %v2823 = vld [vmem:[#allocation8 + $0x118] sm:$0xff]
        %v2824 = vld [vmem:[#allocation8 + $0x120] sm:$0xff]
        %v2825 = vld [vmem:[#allocation8 + $0x128] sm:$0xff]
        %v2826 = vld [vmem:[#allocation8 + $0x130] sm:$0xff]
        %v2827 = vld [vmem:[#allocation8 + $0x138] sm:$0xff]
        %v2828 = vld [vmem:[#allocation8 + $0x140] sm:$0xff]
        %v2829 = vld [vmem:[#allocation8 + $0x148] sm:$0xff]
        %v2830 = vld [vmem:[#allocation8 + $0x150] sm:$0xff]
        %v2831 = vld [vmem:[#allocation8 + $0x158] sm:$0xff]
        %v2832 = vld [vmem:[#allocation8 + $0x160] sm:$0xff]
        %v2833 = vld [vmem:[#allocation8 + $0x168] sm:$0xff]
        %v2834 = vld [vmem:[#allocation8 + $0x170] sm:$0xff]
        %v2835 = vld [vmem:[#allocation8 + $0x178] sm:$0xff]
        %v2836 = vld [vmem:[#allocation8 + $0x180] sm:$0xff]
        %v2837 = vld [vmem:[#allocation8 + $0x188] sm:$0xff]
        %v2838 = vld [vmem:[#allocation8 + $0x190] sm:$0xff]
        %v2839 = vld [vmem:[#allocation8 + $0x198] sm:$0xff]
        %v2840 = vld [vmem:[#allocation8 + $0x1a0] sm:$0xff]
        %v2841 = vld [vmem:[#allocation8 + $0x1a8] sm:$0xff]
        %v2842 = vld [vmem:[#allocation8 + $0x1b0] sm:$0xff]
        %v2843 = vld [vmem:[#allocation8 + $0x1b8] sm:$0xff]
        %v2844 = vld [vmem:[#allocation8 + $0x1c0] sm:$0xff]
        %v2845 = vld [vmem:[#allocation8 + $0x1c8] sm:$0xff]
        %v2846 = vld [vmem:[#allocation8 + $0x1d0] sm:$0xff]
        %v2847 = vld [vmem:[#allocation8 + $0x1d8] sm:$0xff]
        %v2848 = vld [vmem:[#allocation8 + $0x1e0] sm:$0xff]
        %v2849 = vld [vmem:[#allocation8 + $0x1e8] sm:$0xff]
        %v2850 = vld [vmem:[#allocation8 + $0x1f0] sm:$0xff]
        %v2851 = vld [vmem:[#allocation8 + $0x1f8] sm:$0xff]
        %v2852 = vld [vmem:[#allocation8 + $0x200] sm:$0xff]
        %v2853 = vld [vmem:[#allocation8 + $0x208] sm:$0xff]
        %v2854 = vld [vmem:[#allocation8 + $0x210] sm:$0xff]
        %v2855 = vld [vmem:[#allocation8 + $0x218] sm:$0xff]
        %v2856 = vld [vmem:[#allocation8 + $0x220] sm:$0xff]
        %v2857 = vld [vmem:[#allocation8 + $0x228] sm:$0xff]
        %v2858 = vld [vmem:[#allocation8 + $0x230] sm:$0xff]
        %v2859 = vld [vmem:[#allocation8 + $0x238] sm:$0xff]
        %v2860 = vld [vmem:[#allocation8 + $0x240] sm:$0xff]
        %v2861 = vld [vmem:[#allocation8 + $0x248] sm:$0xff]
        %v2862 = vld [vmem:[#allocation8 + $0x250] sm:$0xff]
        %v2863 = vld [vmem:[#allocation8 + $0x258] sm:$0xff]
        %v2864 = vld [vmem:[#allocation8 + $0x260] sm:$0xff]
        %v2865 = vld [vmem:[#allocation8 + $0x268] sm:$0xff]
        %v2866 = vld [vmem:[#allocation8 + $0x270] sm:$0xff]
        %v2867 = vld [vmem:[#allocation8 + $0x278] sm:$0xff]
        %v2868 = vld [vmem:[#allocation8 + $0x280] sm:$0xff]
        %v2869 = vld [vmem:[#allocation8 + $0x288] sm:$0xff]
        %v2870 = vld [vmem:[#allocation8 + $0x290] sm:$0xff]
        %v2871 = vld [vmem:[#allocation8 + $0x298] sm:$0xff]
        %v2872 = vld [vmem:[#allocation8 + $0x2a0] sm:$0xff]
        %v2873 = vld [vmem:[#allocation8 + $0x2a8] sm:$0xff]
        %v2874 = vld [vmem:[#allocation8 + $0x2b0] sm:$0xff]
        %v2875 = vld [vmem:[#allocation8 + $0x2b8] sm:$0xff]
        %v2876 = vld [vmem:[#allocation8 + $0x2c0] sm:$0xff]
        %v2877 = vld [vmem:[#allocation8 + $0x2c8] sm:$0xff]
        %v2878 = vld [vmem:[#allocation8 + $0x2d0] sm:$0xff]
        %v2879 = vld [vmem:[#allocation8 + $0x2d8] sm:$0xff]
        %v2880 = vld [vmem:[#allocation8 + $0x2e0] sm:$0xff]
        %v2881 = vld [vmem:[#allocation8 + $0x2e8] sm:$0xff]
        %v2882 = vld [vmem:[#allocation8 + $0x2f0] sm:$0xff]
        %v2883 = vld [vmem:[#allocation8 + $0x2f8] sm:$0xff]
        %v2884 = vld [vmem:[#allocation8 + $0x300] sm:$0xff]
        %v2885 = vld [vmem:[#allocation8 + $0x308] sm:$0xff]
        %v2886 = vld [vmem:[#allocation8 + $0x310] sm:$0xff]
        %v2887 = vld [vmem:[#allocation8 + $0x318] sm:$0xff]
        %v2888 = vld [vmem:[#allocation8 + $0x320] sm:$0xff]
        %v2889 = vld [vmem:[#allocation8 + $0x328] sm:$0xff]
        %v2890 = vld [vmem:[#allocation8 + $0x330] sm:$0xff]
        %v2891 = vld [vmem:[#allocation8 + $0x338] sm:$0xff]
        %v2892 = vld [vmem:[#allocation8 + $0x340] sm:$0xff]
        %v2893 = vld [vmem:[#allocation8 + $0x348] sm:$0xff]
        %v2894 = vld [vmem:[#allocation8 + $0x350] sm:$0xff]
        %v2895 = vld [vmem:[#allocation8 + $0x358] sm:$0xff]
        %v2896 = vld [vmem:[#allocation8 + $0x360] sm:$0xff]
        %v2897 = vld [vmem:[#allocation8 + $0x368] sm:$0xff]
        %v2898 = vld [vmem:[#allocation8 + $0x370] sm:$0xff]
        %v2899 = vld [vmem:[#allocation8 + $0x378] sm:$0xff]
        %v2900 = vld [vmem:[#allocation8 + $0x380] sm:$0xff]
        %v2901 = vld [vmem:[#allocation8 + $0x388] sm:$0xff]
        %v2902 = vld [vmem:[#allocation8 + $0x390] sm:$0xff]
        %v2903 = vld [vmem:[#allocation8 + $0x398] sm:$0xff]
        %v2904 = vld [vmem:[#allocation8 + $0x3a0] sm:$0xff]
        %v2905 = vld [vmem:[#allocation8 + $0x3a8] sm:$0xff]
        %v2906 = vld [vmem:[#allocation8 + $0x3b0] sm:$0xff]
        %v2907 = vld [vmem:[#allocation8 + $0x3b8] sm:$0xff]
        %v2908 = vld [vmem:[#allocation8 + $0x3c0] sm:$0xff]
        %v2909 = vld [vmem:[#allocation8 + $0x3c8] sm:$0xff]
        %v2910 = vld [vmem:[#allocation8 + $0x3d0] sm:$0xff]
        %v2911 = vld [vmem:[#allocation8 + $0x3d8] sm:$0xff]
        %v2912 = vld [vmem:[#allocation8 + $0x3e0] sm:$0xff]
        %v2913 = vld [vmem:[#allocation8 + $0x3e8] sm:$0xff]
        %v2914 = vld [vmem:[#allocation8 + $0x3f0] sm:$0xff]
        %v2915 = vld [vmem:[#allocation8 + $0x3f8] sm:$0xff]
        %v2916 = vld [vmem:[#allocation10] sm:$0xf]
        %v2918 = vlaneseq
        %v2919 = vshrl.u32 %v2918, 7
        %v2920 = vsub.s32 0, %v2919
        %v2921 = vrot.slane %v2916, %v2920
        %v2922 = vlaneseq
        %v2923 = vshrl.u32 %v2922, 7
        %v2924 = vsub.s32 1, %v2923
        %v2925 = vrot.slane %v2916, %v2924
        %v2926 = vlaneseq
        %v2927 = vshrl.u32 %v2926, 7
        %v2928 = vsub.s32 2, %v2927
        %v2929 = vrot.slane %v2916, %v2928
        %v2930 = vlaneseq
        %v2931 = vshrl.u32 %v2930, 7
        %v2932 = vsub.s32 3, %v2931
        %v2933 = vrot.slane %v2916, %v2932
        %v3066 = vunpack.c.l.b16 %v2788
        %v3067 = vunpack.c.h.b16 %v2788
        %v3068 = vunpack.c.l.b16 %v2789
        %v3069 = vunpack.c.h.b16 %v2789
        %v3070 = vunpack.c.l.b16 %v2790
        %v3071 = vunpack.c.h.b16 %v2790
        %v3072 = vunpack.c.l.b16 %v2791
        %v3073 = vunpack.c.h.b16 %v2791
        %v3074 = vunpack.c.l.b16 %v2792
        %v3075 = vunpack.c.h.b16 %v2792
        %v3076 = vunpack.c.l.b16 %v2793
        %v3077 = vunpack.c.h.b16 %v2793
        %v3078 = vunpack.c.l.b16 %v2794
        %v3079 = vunpack.c.h.b16 %v2794
        %v3080 = vunpack.c.l.b16 %v2795
        %v3081 = vunpack.c.h.b16 %v2795
        %v3082 = vunpack.c.l.b16 %v2796
        %v3083 = vunpack.c.h.b16 %v2796
        %v3084 = vunpack.c.l.b16 %v2797
        %v3085 = vunpack.c.h.b16 %v2797
        %v3086 = vunpack.c.l.b16 %v2798
        %v3087 = vunpack.c.h.b16 %v2798
        %v3088 = vunpack.c.l.b16 %v2799
        %v3089 = vunpack.c.h.b16 %v2799
        %v3090 = vunpack.c.l.b16 %v2800
        %v3091 = vunpack.c.h.b16 %v2800
        %v3092 = vunpack.c.l.b16 %v2801
        %v3093 = vunpack.c.h.b16 %v2801
        %v3094 = vunpack.c.l.b16 %v2802
        %v3095 = vunpack.c.h.b16 %v2802
        %v3096 = vunpack.c.l.b16 %v2803
        %v3097 = vunpack.c.h.b16 %v2803
        %v3098 = vunpack.c.l.b16 %v2804
        %v3099 = vunpack.c.h.b16 %v2804
        %v3100 = vunpack.c.l.b16 %v2805
        %v3101 = vunpack.c.h.b16 %v2805
        %v3102 = vunpack.c.l.b16 %v2806
        %v3103 = vunpack.c.h.b16 %v2806
        %v3104 = vunpack.c.l.b16 %v2807
        %v3105 = vunpack.c.h.b16 %v2807
        %v3106 = vunpack.c.l.b16 %v2808
        %v3107 = vunpack.c.h.b16 %v2808
        %v3108 = vunpack.c.l.b16 %v2809
        %v3109 = vunpack.c.h.b16 %v2809
        %v3110 = vunpack.c.l.b16 %v2810
        %v3111 = vunpack.c.h.b16 %v2810
        %v3112 = vunpack.c.l.b16 %v2811
        %v3113 = vunpack.c.h.b16 %v2811
        %v3114 = vunpack.c.l.b16 %v2812
        %v3115 = vunpack.c.h.b16 %v2812
        %v3116 = vunpack.c.l.b16 %v2813
        %v3117 = vunpack.c.h.b16 %v2813
        %v3118 = vunpack.c.l.b16 %v2814
        %v3119 = vunpack.c.h.b16 %v2814
        %v3120 = vunpack.c.l.b16 %v2815
        %v3121 = vunpack.c.h.b16 %v2815
        %v3122 = vunpack.c.l.b16 %v2816
        %v3123 = vunpack.c.h.b16 %v2816
        %v3124 = vunpack.c.l.b16 %v2817
        %v3125 = vunpack.c.h.b16 %v2817
        %v3126 = vunpack.c.l.b16 %v2818
        %v3127 = vunpack.c.h.b16 %v2818
        %v3128 = vunpack.c.l.b16 %v2819
        %v3129 = vunpack.c.h.b16 %v2819
        %v3130 = vunpack.c.l.b16 %v2820
        %v3131 = vunpack.c.h.b16 %v2820
        %v3132 = vunpack.c.l.b16 %v2821
        %v3133 = vunpack.c.h.b16 %v2821
        %v3134 = vunpack.c.l.b16 %v2822
        %v3135 = vunpack.c.h.b16 %v2822
        %v3136 = vunpack.c.l.b16 %v2823
        %v3137 = vunpack.c.h.b16 %v2823
        %v3138 = vunpack.c.l.b16 %v2824
        %v3139 = vunpack.c.h.b16 %v2824
        %v3140 = vunpack.c.l.b16 %v2825
        %v3141 = vunpack.c.h.b16 %v2825
        %v3142 = vunpack.c.l.b16 %v2826
        %v3143 = vunpack.c.h.b16 %v2826
        %v3144 = vunpack.c.l.b16 %v2827
        %v3145 = vunpack.c.h.b16 %v2827
        %v3146 = vunpack.c.l.b16 %v2828
        %v3147 = vunpack.c.h.b16 %v2828
        %v3148 = vunpack.c.l.b16 %v2829
        %v3149 = vunpack.c.h.b16 %v2829
        %v3150 = vunpack.c.l.b16 %v2830
        %v3151 = vunpack.c.h.b16 %v2830
        %v3152 = vunpack.c.l.b16 %v2831
        %v3153 = vunpack.c.h.b16 %v2831
        %v3154 = vunpack.c.l.b16 %v2832
        %v3155 = vunpack.c.h.b16 %v2832
        %v3156 = vunpack.c.l.b16 %v2833
        %v3157 = vunpack.c.h.b16 %v2833
        %v3158 = vunpack.c.l.b16 %v2834
        %v3159 = vunpack.c.h.b16 %v2834
        %v3160 = vunpack.c.l.b16 %v2835
        %v3161 = vunpack.c.h.b16 %v2835
        %v3162 = vunpack.c.l.b16 %v2836
        %v3163 = vunpack.c.h.b16 %v2836
        %v3164 = vunpack.c.l.b16 %v2837
        %v3165 = vunpack.c.h.b16 %v2837
        %v3166 = vunpack.c.l.b16 %v2838
        %v3167 = vunpack.c.h.b16 %v2838
        %v3168 = vunpack.c.l.b16 %v2839
        %v3169 = vunpack.c.h.b16 %v2839
        %v3170 = vunpack.c.l.b16 %v2840
        %v3171 = vunpack.c.h.b16 %v2840
        %v3172 = vunpack.c.l.b16 %v2841
        %v3173 = vunpack.c.h.b16 %v2841
        %v3174 = vunpack.c.l.b16 %v2842
        %v3175 = vunpack.c.h.b16 %v2842
        %v3176 = vunpack.c.l.b16 %v2843
        %v3177 = vunpack.c.h.b16 %v2843
        %v3178 = vunpack.c.l.b16 %v2844
        %v3179 = vunpack.c.h.b16 %v2844
        %v3180 = vunpack.c.l.b16 %v2845
        %v3181 = vunpack.c.h.b16 %v2845
        %v3182 = vunpack.c.l.b16 %v2846
        %v3183 = vunpack.c.h.b16 %v2846
        %v3184 = vunpack.c.l.b16 %v2847
        %v3185 = vunpack.c.h.b16 %v2847
        %v3186 = vunpack.c.l.b16 %v2848
        %v3187 = vunpack.c.h.b16 %v2848
        %v3188 = vunpack.c.l.b16 %v2849
        %v3189 = vunpack.c.h.b16 %v2849
        %v3190 = vunpack.c.l.b16 %v2850
        %v3191 = vunpack.c.h.b16 %v2850
        %v3192 = vunpack.c.l.b16 %v2851
        %v3193 = vunpack.c.h.b16 %v2851
        %v3194 = vunpack.c.l.b16 %v2852
        %v3195 = vunpack.c.h.b16 %v2852
        %v3196 = vunpack.c.l.b16 %v2853
        %v3197 = vunpack.c.h.b16 %v2853
        %v3198 = vunpack.c.l.b16 %v2854
        %v3199 = vunpack.c.h.b16 %v2854
        %v3200 = vunpack.c.l.b16 %v2855
        %v3201 = vunpack.c.h.b16 %v2855
        %v3202 = vunpack.c.l.b16 %v2856
        %v3203 = vunpack.c.h.b16 %v2856
        %v3204 = vunpack.c.l.b16 %v2857
        %v3205 = vunpack.c.h.b16 %v2857
        %v3206 = vunpack.c.l.b16 %v2858
        %v3207 = vunpack.c.h.b16 %v2858
        %v3208 = vunpack.c.l.b16 %v2859
        %v3209 = vunpack.c.h.b16 %v2859
        %v3210 = vunpack.c.l.b16 %v2860
        %v3211 = vunpack.c.h.b16 %v2860
        %v3212 = vunpack.c.l.b16 %v2861
        %v3213 = vunpack.c.h.b16 %v2861
        %v3214 = vunpack.c.l.b16 %v2862
        %v3215 = vunpack.c.h.b16 %v2862
        %v3216 = vunpack.c.l.b16 %v2863
        %v3217 = vunpack.c.h.b16 %v2863
        %v3218 = vunpack.c.l.b16 %v2864
        %v3219 = vunpack.c.h.b16 %v2864
        %v3220 = vunpack.c.l.b16 %v2865
        %v3221 = vunpack.c.h.b16 %v2865
        %v3222 = vunpack.c.l.b16 %v2866
        %v3223 = vunpack.c.h.b16 %v2866
        %v3224 = vunpack.c.l.b16 %v2867
        %v3225 = vunpack.c.h.b16 %v2867
        %v3226 = vunpack.c.l.b16 %v2868
        %v3227 = vunpack.c.h.b16 %v2868
        %v3228 = vunpack.c.l.b16 %v2869
        %v3229 = vunpack.c.h.b16 %v2869
        %v3230 = vunpack.c.l.b16 %v2870
        %v3231 = vunpack.c.h.b16 %v2870
        %v3232 = vunpack.c.l.b16 %v2871
        %v3233 = vunpack.c.h.b16 %v2871
        %v3234 = vunpack.c.l.b16 %v2872
        %v3235 = vunpack.c.h.b16 %v2872
        %v3236 = vunpack.c.l.b16 %v2873
        %v3237 = vunpack.c.h.b16 %v2873
        %v3238 = vunpack.c.l.b16 %v2874
        %v3239 = vunpack.c.h.b16 %v2874
        %v3240 = vunpack.c.l.b16 %v2875
        %v3241 = vunpack.c.h.b16 %v2875
        %v3242 = vunpack.c.l.b16 %v2876
        %v3243 = vunpack.c.h.b16 %v2876
        %v3244 = vunpack.c.l.b16 %v2877
        %v3245 = vunpack.c.h.b16 %v2877
        %v3246 = vunpack.c.l.b16 %v2878
        %v3247 = vunpack.c.h.b16 %v2878
        %v3248 = vunpack.c.l.b16 %v2879
        %v3249 = vunpack.c.h.b16 %v2879
        %v3250 = vunpack.c.l.b16 %v2880
        %v3251 = vunpack.c.h.b16 %v2880
        %v3252 = vunpack.c.l.b16 %v2881
        %v3253 = vunpack.c.h.b16 %v2881
        %v3254 = vunpack.c.l.b16 %v2882
        %v3255 = vunpack.c.h.b16 %v2882
        %v3256 = vunpack.c.l.b16 %v2883
        %v3257 = vunpack.c.h.b16 %v2883
        %v3258 = vunpack.c.l.b16 %v2884
        %v3259 = vunpack.c.h.b16 %v2884
        %v3260 = vunpack.c.l.b16 %v2885
        %v3261 = vunpack.c.h.b16 %v2885
        %v3262 = vunpack.c.l.b16 %v2886
        %v3263 = vunpack.c.h.b16 %v2886
        %v3264 = vunpack.c.l.b16 %v2887
        %v3265 = vunpack.c.h.b16 %v2887
        %v3266 = vunpack.c.l.b16 %v2888
        %v3267 = vunpack.c.h.b16 %v2888
        %v3268 = vunpack.c.l.b16 %v2889
        %v3269 = vunpack.c.h.b16 %v2889
        %v3270 = vunpack.c.l.b16 %v2890
        %v3271 = vunpack.c.h.b16 %v2890
        %v3272 = vunpack.c.l.b16 %v2891
        %v3273 = vunpack.c.h.b16 %v2891
        %v3274 = vunpack.c.l.b16 %v2892
        %v3275 = vunpack.c.h.b16 %v2892
        %v3276 = vunpack.c.l.b16 %v2893
        %v3277 = vunpack.c.h.b16 %v2893
        %v3278 = vunpack.c.l.b16 %v2894
        %v3279 = vunpack.c.h.b16 %v2894
        %v3280 = vunpack.c.l.b16 %v2895
        %v3281 = vunpack.c.h.b16 %v2895
        %v3282 = vunpack.c.l.b16 %v2896
        %v3283 = vunpack.c.h.b16 %v2896
        %v3284 = vunpack.c.l.b16 %v2897
        %v3285 = vunpack.c.h.b16 %v2897
        %v3286 = vunpack.c.l.b16 %v2898
        %v3287 = vunpack.c.h.b16 %v2898
        %v3288 = vunpack.c.l.b16 %v2899
        %v3289 = vunpack.c.h.b16 %v2899
        %v3290 = vunpack.c.l.b16 %v2900
        %v3291 = vunpack.c.h.b16 %v2900
        %v3292 = vunpack.c.l.b16 %v2901
        %v3293 = vunpack.c.h.b16 %v2901
        %v3294 = vunpack.c.l.b16 %v2902
        %v3295 = vunpack.c.h.b16 %v2902
        %v3296 = vunpack.c.l.b16 %v2903
        %v3297 = vunpack.c.h.b16 %v2903
        %v3298 = vunpack.c.l.b16 %v2904
        %v3299 = vunpack.c.h.b16 %v2904
        %v3300 = vunpack.c.l.b16 %v2905
        %v3301 = vunpack.c.h.b16 %v2905
        %v3302 = vunpack.c.l.b16 %v2906
        %v3303 = vunpack.c.h.b16 %v2906
        %v3304 = vunpack.c.l.b16 %v2907
        %v3305 = vunpack.c.h.b16 %v2907
        %v3306 = vunpack.c.l.b16 %v2908
        %v3307 = vunpack.c.h.b16 %v2908
        %v3308 = vunpack.c.l.b16 %v2909
        %v3309 = vunpack.c.h.b16 %v2909
        %v3310 = vunpack.c.l.b16 %v2910
        %v3311 = vunpack.c.h.b16 %v2910
        %v3312 = vunpack.c.l.b16 %v2911
        %v3313 = vunpack.c.h.b16 %v2911
        %v3314 = vunpack.c.l.b16 %v2912
        %v3315 = vunpack.c.h.b16 %v2912
        %v3316 = vunpack.c.l.b16 %v2913
        %v3317 = vunpack.c.h.b16 %v2913
        %v3318 = vunpack.c.l.b16 %v2914
        %v3319 = vunpack.c.h.b16 %v2914
        %v3320 = vunpack.c.l.b16 %v2915
        %v3321 = vunpack.c.h.b16 %v2915
        %v3322 = vpack.c.b16 %v3070, %v3066
        %v3323 = vpack.c.b16 %v3071, %v3067
        %v3324 = vpack.c.b16 %v3072, %v3068
        %v3325 = vpack.c.b16 %v3073, %v3069
        %v3326 = vpack.c.b16 %v3078, %v3074
        %v3327 = vpack.c.b16 %v3079, %v3075
        %v3328 = vpack.c.b16 %v3080, %v3076
        %v3329 = vpack.c.b16 %v3081, %v3077
        %v3330 = vpack.c.b16 %v3086, %v3082
        %v3331 = vpack.c.b16 %v3087, %v3083
        %v3332 = vpack.c.b16 %v3088, %v3084
        %v3333 = vpack.c.b16 %v3089, %v3085
        %v3334 = vpack.c.b16 %v3094, %v3090
        %v3335 = vpack.c.b16 %v3095, %v3091
        %v3336 = vpack.c.b16 %v3096, %v3092
        %v3337 = vpack.c.b16 %v3097, %v3093
        %v3338 = vpack.c.b16 %v3102, %v3098
        %v3339 = vpack.c.b16 %v3103, %v3099
        %v3340 = vpack.c.b16 %v3104, %v3100
        %v3341 = vpack.c.b16 %v3105, %v3101
        %v3342 = vpack.c.b16 %v3110, %v3106
        %v3343 = vpack.c.b16 %v3111, %v3107
        %v3344 = vpack.c.b16 %v3112, %v3108
        %v3345 = vpack.c.b16 %v3113, %v3109
        %v3346 = vpack.c.b16 %v3118, %v3114
        %v3347 = vpack.c.b16 %v3119, %v3115
        %v3348 = vpack.c.b16 %v3120, %v3116
        %v3349 = vpack.c.b16 %v3121, %v3117
        %v3350 = vpack.c.b16 %v3126, %v3122
        %v3351 = vpack.c.b16 %v3127, %v3123
        %v3352 = vpack.c.b16 %v3128, %v3124
        %v3353 = vpack.c.b16 %v3129, %v3125
        %v3354 = vpack.c.b16 %v3134, %v3130
        %v3355 = vpack.c.b16 %v3135, %v3131
        %v3356 = vpack.c.b16 %v3136, %v3132
        %v3357 = vpack.c.b16 %v3137, %v3133
        %v3358 = vpack.c.b16 %v3142, %v3138
        %v3359 = vpack.c.b16 %v3143, %v3139
        %v3360 = vpack.c.b16 %v3144, %v3140
        %v3361 = vpack.c.b16 %v3145, %v3141
        %v3362 = vpack.c.b16 %v3150, %v3146
        %v3363 = vpack.c.b16 %v3151, %v3147
        %v3364 = vpack.c.b16 %v3152, %v3148
        %v3365 = vpack.c.b16 %v3153, %v3149
        %v3366 = vpack.c.b16 %v3158, %v3154
        %v3367 = vpack.c.b16 %v3159, %v3155
        %v3368 = vpack.c.b16 %v3160, %v3156
        %v3369 = vpack.c.b16 %v3161, %v3157
        %v3370 = vpack.c.b16 %v3166, %v3162
        %v3371 = vpack.c.b16 %v3167, %v3163
        %v3372 = vpack.c.b16 %v3168, %v3164
        %v3373 = vpack.c.b16 %v3169, %v3165
        %v3374 = vpack.c.b16 %v3174, %v3170
        %v3375 = vpack.c.b16 %v3175, %v3171
        %v3376 = vpack.c.b16 %v3176, %v3172
        %v3377 = vpack.c.b16 %v3177, %v3173
        %v3378 = vpack.c.b16 %v3182, %v3178
        %v3379 = vpack.c.b16 %v3183, %v3179
        %v3380 = vpack.c.b16 %v3184, %v3180
        %v3381 = vpack.c.b16 %v3185, %v3181
        %v3382 = vpack.c.b16 %v3190, %v3186
        %v3383 = vpack.c.b16 %v3191, %v3187
        %v3384 = vpack.c.b16 %v3192, %v3188
        %v3385 = vpack.c.b16 %v3193, %v3189
        %v3386 = vpack.c.b16 %v3198, %v3194
        %v3387 = vpack.c.b16 %v3199, %v3195
        %v3388 = vpack.c.b16 %v3200, %v3196
        %v3389 = vpack.c.b16 %v3201, %v3197
        %v3390 = vpack.c.b16 %v3206, %v3202
        %v3391 = vpack.c.b16 %v3207, %v3203
        %v3392 = vpack.c.b16 %v3208, %v3204
        %v3393 = vpack.c.b16 %v3209, %v3205
        %v3394 = vpack.c.b16 %v3214, %v3210
        %v3395 = vpack.c.b16 %v3215, %v3211
        %v3396 = vpack.c.b16 %v3216, %v3212
        %v3397 = vpack.c.b16 %v3217, %v3213
        %v3398 = vpack.c.b16 %v3222, %v3218
        %v3399 = vpack.c.b16 %v3223, %v3219
        %v3400 = vpack.c.b16 %v3224, %v3220
        %v3401 = vpack.c.b16 %v3225, %v3221
        %v3402 = vpack.c.b16 %v3230, %v3226
        %v3403 = vpack.c.b16 %v3231, %v3227
        %v3404 = vpack.c.b16 %v3232, %v3228
        %v3405 = vpack.c.b16 %v3233, %v3229
        %v3406 = vpack.c.b16 %v3238, %v3234
        %v3407 = vpack.c.b16 %v3239, %v3235
        %v3408 = vpack.c.b16 %v3240, %v3236
        %v3409 = vpack.c.b16 %v3241, %v3237
        %v3410 = vpack.c.b16 %v3246, %v3242
        %v3411 = vpack.c.b16 %v3247, %v3243
        %v3412 = vpack.c.b16 %v3248, %v3244
        %v3413 = vpack.c.b16 %v3249, %v3245
        %v3414 = vpack.c.b16 %v3254, %v3250
        %v3415 = vpack.c.b16 %v3255, %v3251
        %v3416 = vpack.c.b16 %v3256, %v3252
        %v3417 = vpack.c.b16 %v3257, %v3253
        %v3418 = vpack.c.b16 %v3262, %v3258
        %v3419 = vpack.c.b16 %v3263, %v3259
        %v3420 = vpack.c.b16 %v3264, %v3260
        %v3421 = vpack.c.b16 %v3265, %v3261
        %v3422 = vpack.c.b16 %v3270, %v3266
        %v3423 = vpack.c.b16 %v3271, %v3267
        %v3424 = vpack.c.b16 %v3272, %v3268
        %v3425 = vpack.c.b16 %v3273, %v3269
        %v3426 = vpack.c.b16 %v3278, %v3274
        %v3427 = vpack.c.b16 %v3279, %v3275
        %v3428 = vpack.c.b16 %v3280, %v3276
        %v3429 = vpack.c.b16 %v3281, %v3277
        %v3430 = vpack.c.b16 %v3286, %v3282
        %v3431 = vpack.c.b16 %v3287, %v3283
        %v3432 = vpack.c.b16 %v3288, %v3284
        %v3433 = vpack.c.b16 %v3289, %v3285
        %v3434 = vpack.c.b16 %v3294, %v3290
        %v3435 = vpack.c.b16 %v3295, %v3291
        %v3436 = vpack.c.b16 %v3296, %v3292
        %v3437 = vpack.c.b16 %v3297, %v3293
        %v3438 = vpack.c.b16 %v3302, %v3298
        %v3439 = vpack.c.b16 %v3303, %v3299
        %v3440 = vpack.c.b16 %v3304, %v3300
        %v3441 = vpack.c.b16 %v3305, %v3301
        %v3442 = vpack.c.b16 %v3310, %v3306
        %v3443 = vpack.c.b16 %v3311, %v3307
        %v3444 = vpack.c.b16 %v3312, %v3308
        %v3445 = vpack.c.b16 %v3313, %v3309
        %v3446 = vpack.c.b16 %v3318, %v3314
        %v3447 = vpack.c.b16 %v3319, %v3315
        %v3448 = vpack.c.b16 %v3320, %v3316
        %v3449 = vpack.c.b16 %v3321, %v3317
        %3578 = vmatprep.subr.bf16.mxu0 %v3323
        %3579 = vmatpush1.bf16.msra.mxu0 %v3322
        %3580 = vmatprep.subr.bf16.mxu0 %v3327
        %3581 = vmatpush1.bf16.msra.mxu0 %v3326
        %3582 = vmatprep.subr.bf16.mxu0 %v3331
        %3583 = vmatpush1.bf16.msra.mxu0 %v3330
        %3584 = vmatprep.subr.bf16.mxu0 %v3335
        %3585 = vmatpush1.bf16.msra.mxu0 %v3334
        %3586 = vmatprep.subr.bf16.mxu0 %v3339
        %3587 = vmatpush1.bf16.msra.mxu0 %v3338
        %3588 = vmatprep.subr.bf16.mxu0 %v3343
        %3589 = vmatpush1.bf16.msra.mxu0 %v3342
        %3590 = vmatprep.subr.bf16.mxu0 %v3347
        %3591 = vmatpush1.bf16.msra.mxu0 %v3346
        %3592 = vmatprep.subr.bf16.mxu0 %v3351
        %3593 = vmatpush1.bf16.msra.mxu0 %v3350
        %3594 = vmatprep.subr.bf16.mxu0 %v3355
        %3595 = vmatpush1.bf16.msra.mxu0 %v3354
        %3596 = vmatprep.subr.bf16.mxu0 %v3359
        %3597 = vmatpush1.bf16.msra.mxu0 %v3358
        %3598 = vmatprep.subr.bf16.mxu0 %v3363
        %3599 = vmatpush1.bf16.msra.mxu0 %v3362
        %3600 = vmatprep.subr.bf16.mxu0 %v3367
        %3601 = vmatpush1.bf16.msra.mxu0 %v3366
        %3602 = vmatprep.subr.bf16.mxu0 %v3371
        %3603 = vmatpush1.bf16.msra.mxu0 %v3370
        %3604 = vmatprep.subr.bf16.mxu0 %v3375
        %3605 = vmatpush1.bf16.msra.mxu0 %v3374
        %3606 = vmatprep.subr.bf16.mxu0 %v3379
        %3607 = vmatpush1.bf16.msra.mxu0 %v3378
        %3608 = vmatprep.subr.bf16.mxu0 %v3383
        %3609 = vmatpush1.bf16.msra.mxu0 %v3382
        %3610 = vmatprep.mubr.bf16.mxu0 %v2785
        %3611 = vmatmul.mubr.bf16.gmra.mrb[0].mxu0 %v2784
        %v3612 = vpop.f32.mrb[0].mxu0
        %v3613 = vadd.f32 %v2921, %v3612
        %v3614 = vpop.f32.mrb[0].mxu0
        %v3615 = vadd.f32 %v2925, %v3614
        %v3616 = vpop.f32.mrb[0].mxu0
        %v3617 = vpop.f32.mrb[0].mxu0
        %3618 = vdwg.mxu0
        %3619 = vmatprep.subr.bf16.mxu0 %v3387
        %3620 = vmatpush1.bf16.msra.mxu0 %v3386
        %3621 = vmatprep.subr.bf16.mxu0 %v3391
        %3622 = vmatpush1.bf16.msra.mxu0 %v3390
        %3623 = vmatprep.subr.bf16.mxu0 %v3395
        %3624 = vmatpush1.bf16.msra.mxu0 %v3394
        %3625 = vmatprep.subr.bf16.mxu0 %v3399
        %3626 = vmatpush1.bf16.msra.mxu0 %v3398
        %3627 = vmatprep.subr.bf16.mxu0 %v3403
        %3628 = vmatpush1.bf16.msra.mxu0 %v3402
        %3629 = vmatprep.subr.bf16.mxu0 %v3407
        %3630 = vmatpush1.bf16.msra.mxu0 %v3406
        %3631 = vmatprep.subr.bf16.mxu0 %v3411
        %3632 = vmatpush1.bf16.msra.mxu0 %v3410
        %3633 = vmatprep.subr.bf16.mxu0 %v3415
        %3634 = vmatpush1.bf16.msra.mxu0 %v3414
        %3635 = vmatprep.subr.bf16.mxu0 %v3419
        %3636 = vmatpush1.bf16.msra.mxu0 %v3418
        %3637 = vmatprep.subr.bf16.mxu0 %v3423
        %3638 = vmatpush1.bf16.msra.mxu0 %v3422
        %3639 = vmatprep.subr.bf16.mxu0 %v3427
        %3640 = vmatpush1.bf16.msra.mxu0 %v3426
        %3641 = vmatprep.subr.bf16.mxu0 %v3431
        %3642 = vmatpush1.bf16.msra.mxu0 %v3430
        %3643 = vmatprep.subr.bf16.mxu0 %v3435
        %3644 = vmatpush1.bf16.msra.mxu0 %v3434
        %3645 = vmatprep.subr.bf16.mxu0 %v3439
        %3646 = vmatpush1.bf16.msra.mxu0 %v3438
        %3647 = vmatprep.subr.bf16.mxu0 %v3443
        %3648 = vmatpush1.bf16.msra.mxu0 %v3442
        %3649 = vmatprep.subr.bf16.mxu0 %v3447
        %3650 = vmatpush1.bf16.msra.mxu0 %v3446
        %3651 = vmatprep.mubr.bf16.mxu0 %v2787
        %3652 = vmatmul.mubr.bf16.gmra.mrb[0].mxu0 %v2786
        %v3653 = vpop.f32.mrb[0].mxu0
        %v3654 = vadd.f32 %v3613, %v3653
        %v3655 = vpop.f32.mrb[0].mxu0
        %v3656 = vadd.f32 %v3615, %v3655
        %v3657 = vpop.f32.mrb[0].mxu0
        %v3658 = vpop.f32.mrb[0].mxu0
        %3659 = vdwg.mxu0
        %3660 = vmatprep.subr.bf16.mxu0 %v3325
        %3661 = vmatpush1.bf16.msra.mxu0 %v3324
        %3662 = vmatprep.subr.bf16.mxu0 %v3329
        %3663 = vmatpush1.bf16.msra.mxu0 %v3328
        %3664 = vmatprep.subr.bf16.mxu0 %v3333
        %3665 = vmatpush1.bf16.msra.mxu0 %v3332
        %3666 = vmatprep.subr.bf16.mxu0 %v3337
        %3667 = vmatpush1.bf16.msra.mxu0 %v3336
        %3668 = vmatprep.subr.bf16.mxu0 %v3341
        %3669 = vmatpush1.bf16.msra.mxu0 %v3340
        %3670 = vmatprep.subr.bf16.mxu0 %v3345
        %3671 = vmatpush1.bf16.msra.mxu0 %v3344
        %3672 = vmatprep.subr.bf16.mxu0 %v3349
        %3673 = vmatpush1.bf16.msra.mxu0 %v3348
        %3674 = vmatprep.subr.bf16.mxu0 %v3353
        %3675 = vmatpush1.bf16.msra.mxu0 %v3352
        %3676 = vmatprep.subr.bf16.mxu0 %v3357
        %3677 = vmatpush1.bf16.msra.mxu0 %v3356
        %3678 = vmatprep.subr.bf16.mxu0 %v3361
        %3679 = vmatpush1.bf16.msra.mxu0 %v3360
        %3680 = vmatprep.subr.bf16.mxu0 %v3365
        %3681 = vmatpush1.bf16.msra.mxu0 %v3364
        %3682 = vmatprep.subr.bf16.mxu0 %v3369
        %3683 = vmatpush1.bf16.msra.mxu0 %v3368
        %3684 = vmatprep.subr.bf16.mxu0 %v3373
        %3685 = vmatpush1.bf16.msra.mxu0 %v3372
        %3686 = vmatprep.subr.bf16.mxu0 %v3377
        %3687 = vmatpush1.bf16.msra.mxu0 %v3376
        %3688 = vmatprep.subr.bf16.mxu0 %v3381
        %3689 = vmatpush1.bf16.msra.mxu0 %v3380
        %3690 = vmatprep.subr.bf16.mxu0 %v3385
        %3691 = vmatpush1.bf16.msra.mxu0 %v3384
        %3692 = vmatprep.mubr.bf16.mxu0 %v2785
        %3693 = vmatmul.mubr.bf16.gmra.mrb[0].mxu0 %v2784
        %v3694 = vpop.f32.mrb[0].mxu0
        %v3695 = vadd.f32 %v2929, %v3694
        %v3696 = vpop.f32.mrb[0].mxu0
        %v3697 = vadd.f32 %v2933, %v3696
        %v3698 = vpop.f32.mrb[0].mxu0
        %v3699 = vpop.f32.mrb[0].mxu0
        %3700 = vdwg.mxu0
        %3701 = vmatprep.subr.bf16.mxu0 %v3389
        %3702 = vmatpush1.bf16.msra.mxu0 %v3388
        %3703 = vmatprep.subr.bf16.mxu0 %v3393
        %3704 = vmatpush1.bf16.msra.mxu0 %v3392
        %3705 = vmatprep.subr.bf16.mxu0 %v3397
        %3706 = vmatpush1.bf16.msra.mxu0 %v3396
        %3707 = vmatprep.subr.bf16.mxu0 %v3401
        %3708 = vmatpush1.bf16.msra.mxu0 %v3400
        %3709 = vmatprep.subr.bf16.mxu0 %v3405
        %3710 = vmatpush1.bf16.msra.mxu0 %v3404
        %3711 = vmatprep.subr.bf16.mxu0 %v3409
        %3712 = vmatpush1.bf16.msra.mxu0 %v3408
        %3713 = vmatprep.subr.bf16.mxu0 %v3413
        %3714 = vmatpush1.bf16.msra.mxu0 %v3412
        %3715 = vmatprep.subr.bf16.mxu0 %v3417
        %3716 = vmatpush1.bf16.msra.mxu0 %v3416
        %3717 = vmatprep.subr.bf16.mxu0 %v3421
        %3718 = vmatpush1.bf16.msra.mxu0 %v3420
        %3719 = vmatprep.subr.bf16.mxu0 %v3425
        %3720 = vmatpush1.bf16.msra.mxu0 %v3424
        %3721 = vmatprep.subr.bf16.mxu0 %v3429
        %3722 = vmatpush1.bf16.msra.mxu0 %v3428
        %3723 = vmatprep.subr.bf16.mxu0 %v3433
        %3724 = vmatpush1.bf16.msra.mxu0 %v3432
        %3725 = vmatprep.subr.bf16.mxu0 %v3437
        %3726 = vmatpush1.bf16.msra.mxu0 %v3436
        %3727 = vmatprep.subr.bf16.mxu0 %v3441
        %3728 = vmatpush1.bf16.msra.mxu0 %v3440
        %3729 = vmatprep.subr.bf16.mxu0 %v3445
        %3730 = vmatpush1.bf16.msra.mxu0 %v3444
        %3731 = vmatprep.subr.bf16.mxu0 %v3449
        %3732 = vmatpush1.bf16.msra.mxu0 %v3448
        %3733 = vmatprep.mubr.bf16.mxu0 %v2787
        %3734 = vmatmul.mubr.bf16.gmra.mrb[0].mxu0 %v2786
        %v3735 = vpop.f32.mrb[0].mxu0
        %v3736 = vadd.f32 %v3695, %v3735
        %v3737 = vpop.f32.mrb[0].mxu0
        %v3738 = vadd.f32 %v3697, %v3737
        %v3739 = vpop.f32.mrb[0].mxu0
        %v3740 = vpop.f32.mrb[0].mxu0
        %3741 = vdwg.mxu0
        %v3742 = vmul.f32 %v3654, %v3654
        %v3743 = vmul.f32 %v3656, %v3656
        %v3744 = vmul.f32 %v3736, %v3736
        %v3745 = vmul.f32 %v3738, %v3738
        %v3746 = vmul.f32 %v3742, %v3654
        %v3747 = vmul.f32 %v3743, %v3656
        %v3748 = vmul.f32 %v3744, %v3736
        %v3749 = vmul.f32 %v3745, %v3738
        %v3750 = vmul.f32 %v3654, 0.5
        %v3751 = vmul.f32 %v3656, 0.5
        %v3752 = vmul.f32 %v3736, 0.5
        %v3753 = vmul.f32 %v3738, 0.5
        %v3754 = vmul.f32 %v3746, 0.044715
        %v3755 = vmul.f32 %v3747, 0.044715
        %v3756 = vmul.f32 %v3748, 0.044715
        %v3757 = vmul.f32 %v3749, 0.044715
        %v3758 = vadd.f32 %v3654, %v3754
        %v3759 = vadd.f32 %v3656, %v3755
        %v3760 = vadd.f32 %v3736, %v3756
        %v3761 = vadd.f32 %v3738, %v3757
        %v3762 = vmul.f32 %v3758, 0.7978846
        %v3763 = vmul.f32 %v3759, 0.7978846
        %v3764 = vmul.f32 %v3760, 0.7978846
        %v3765 = vmul.f32 %v3761, 0.7978846
        %v3766 = vtanh.pop %v3762
        %v3767 = vtanh.pop %v3763
        %v3768 = vtanh.pop %v3764
        %v3769 = vtanh.pop %v3765
        %v3770 = vadd.f32 %v3766, 1.0
        %v3771 = vadd.f32 %v3767, 1.0
        %v3772 = vadd.f32 %v3768, 1.0
        %v3773 = vadd.f32 %v3769, 1.0
        %v3774 = vmul.f32 %v3750, %v3770
        %v3775 = vmul.f32 %v3751, %v3771
        %v3776 = vmul.f32 %v3752, %v3772
        %v3777 = vmul.f32 %v3753, %v3773
        %v3778 = vpack.c.bf16 %v3774, %v3774
        %v3779 = vpack.c.bf16 %v3775, %v3775
        %v3780 = vpack.c.bf16 %v3776, %v3776
        %v3781 = vpack.c.bf16 %v3777, %v3777
        %v3782 = vld [vmem:[#allocation11] sm:$0xff]
        %v3783 = vld [vmem:[#allocation11 + $0x8] sm:$0xff]
        %v3784 = vld [vmem:[#allocation11 + $0x10] sm:$0xff]
        %v3785 = vld [vmem:[#allocation11 + $0x18] sm:$0xff]
        %v3786 = vld [vmem:[#allocation11 + $0x20] sm:$0xff]
        %v3787 = vld [vmem:[#allocation11 + $0x28] sm:$0xff]
        %v3788 = vld [vmem:[#allocation11 + $0x30] sm:$0xff]
        %v3789 = vld [vmem:[#allocation11 + $0x38] sm:$0xff]
        %v3790 = vld [vmem:[#allocation11 + $0x40] sm:$0xff]
        %v3791 = vld [vmem:[#allocation11 + $0x48] sm:$0xff]
        %v3792 = vld [vmem:[#allocation11 + $0x50] sm:$0xff]
        %v3793 = vld [vmem:[#allocation11 + $0x58] sm:$0xff]
        %v3794 = vld [vmem:[#allocation11 + $0x60] sm:$0xff]
        %v3795 = vld [vmem:[#allocation11 + $0x68] sm:$0xff]
        %v3796 = vld [vmem:[#allocation11 + $0x70] sm:$0xff]
        %v3797 = vld [vmem:[#allocation11 + $0x78] sm:$0xff]
        %v3798 = vld [vmem:[#allocation11 + $0x80] sm:$0xff]
        %v3799 = vld [vmem:[#allocation11 + $0x88] sm:$0xff]
        %v3800 = vld [vmem:[#allocation11 + $0x90] sm:$0xff]
        %v3801 = vld [vmem:[#allocation11 + $0x98] sm:$0xff]
        %v3802 = vld [vmem:[#allocation11 + $0xa0] sm:$0xff]
        %v3803 = vld [vmem:[#allocation11 + $0xa8] sm:$0xff]
        %v3804 = vld [vmem:[#allocation11 + $0xb0] sm:$0xff]
        %v3805 = vld [vmem:[#allocation11 + $0xb8] sm:$0xff]
        %v3806 = vld [vmem:[#allocation11 + $0xc0] sm:$0xff]
        %v3807 = vld [vmem:[#allocation11 + $0xc8] sm:$0xff]
        %v3808 = vld [vmem:[#allocation11 + $0xd0] sm:$0xff]
        %v3809 = vld [vmem:[#allocation11 + $0xd8] sm:$0xff]
        %v3810 = vld [vmem:[#allocation11 + $0xe0] sm:$0xff]
        %v3811 = vld [vmem:[#allocation11 + $0xe8] sm:$0xff]
        %v3812 = vld [vmem:[#allocation11 + $0xf0] sm:$0xff]
        %v3813 = vld [vmem:[#allocation11 + $0xf8] sm:$0xff]
        %v3814 = vld [vmem:[#allocation11 + $0x100] sm:$0xff]
        %v3815 = vld [vmem:[#allocation11 + $0x108] sm:$0xff]
        %v3816 = vld [vmem:[#allocation11 + $0x110] sm:$0xff]
        %v3817 = vld [vmem:[#allocation11 + $0x118] sm:$0xff]
        %v3818 = vld [vmem:[#allocation11 + $0x120] sm:$0xff]
        %v3819 = vld [vmem:[#allocation11 + $0x128] sm:$0xff]
        %v3820 = vld [vmem:[#allocation11 + $0x130] sm:$0xff]
        %v3821 = vld [vmem:[#allocation11 + $0x138] sm:$0xff]
        %v3822 = vld [vmem:[#allocation11 + $0x140] sm:$0xff]
        %v3823 = vld [vmem:[#allocation11 + $0x148] sm:$0xff]
        %v3824 = vld [vmem:[#allocation11 + $0x150] sm:$0xff]
        %v3825 = vld [vmem:[#allocation11 + $0x158] sm:$0xff]
        %v3826 = vld [vmem:[#allocation11 + $0x160] sm:$0xff]
        %v3827 = vld [vmem:[#allocation11 + $0x168] sm:$0xff]
        %v3828 = vld [vmem:[#allocation11 + $0x170] sm:$0xff]
        %v3829 = vld [vmem:[#allocation11 + $0x178] sm:$0xff]
        %v3830 = vld [vmem:[#allocation11 + $0x180] sm:$0xff]
        %v3831 = vld [vmem:[#allocation11 + $0x188] sm:$0xff]
        %v3832 = vld [vmem:[#allocation11 + $0x190] sm:$0xff]
        %v3833 = vld [vmem:[#allocation11 + $0x198] sm:$0xff]
        %v3834 = vld [vmem:[#allocation11 + $0x1a0] sm:$0xff]
        %v3835 = vld [vmem:[#allocation11 + $0x1a8] sm:$0xff]
        %v3836 = vld [vmem:[#allocation11 + $0x1b0] sm:$0xff]
        %v3837 = vld [vmem:[#allocation11 + $0x1b8] sm:$0xff]
        %v3838 = vld [vmem:[#allocation11 + $0x1c0] sm:$0xff]
        %v3839 = vld [vmem:[#allocation11 + $0x1c8] sm:$0xff]
        %v3840 = vld [vmem:[#allocation11 + $0x1d0] sm:$0xff]
        %v3841 = vld [vmem:[#allocation11 + $0x1d8] sm:$0xff]
        %v3842 = vld [vmem:[#allocation11 + $0x1e0] sm:$0xff]
        %v3843 = vld [vmem:[#allocation11 + $0x1e8] sm:$0xff]
        %v3844 = vld [vmem:[#allocation11 + $0x1f0] sm:$0xff]
        %v3845 = vld [vmem:[#allocation11 + $0x1f8] sm:$0xff]
        %v3846 = vld [vmem:[#allocation13] sm:$0x3]
        %v3848 = vlaneseq
        %v3849 = vshrl.u32 %v3848, 7
        %v3850 = vsub.s32 0, %v3849
        %v3851 = vrot.slane %v3846, %v3850
        %v3852 = vlaneseq
        %v3853 = vshrl.u32 %v3852, 7
        %v3854 = vsub.s32 1, %v3853
        %v3855 = vrot.slane %v3846, %v3854
        %v3922 = vunpack.c.l.b16 %v3782
        %v3923 = vunpack.c.h.b16 %v3782
        %v3924 = vunpack.c.l.b16 %v3783
        %v3925 = vunpack.c.h.b16 %v3783
        %v3926 = vunpack.c.l.b16 %v3784
        %v3927 = vunpack.c.h.b16 %v3784
        %v3928 = vunpack.c.l.b16 %v3785
        %v3929 = vunpack.c.h.b16 %v3785
        %v3930 = vunpack.c.l.b16 %v3786
        %v3931 = vunpack.c.h.b16 %v3786
        %v3932 = vunpack.c.l.b16 %v3787
        %v3933 = vunpack.c.h.b16 %v3787
        %v3934 = vunpack.c.l.b16 %v3788
        %v3935 = vunpack.c.h.b16 %v3788
        %v3936 = vunpack.c.l.b16 %v3789
        %v3937 = vunpack.c.h.b16 %v3789
        %v3938 = vunpack.c.l.b16 %v3790
        %v3939 = vunpack.c.h.b16 %v3790
        %v3940 = vunpack.c.l.b16 %v3791
        %v3941 = vunpack.c.h.b16 %v3791
        %v3942 = vunpack.c.l.b16 %v3792
        %v3943 = vunpack.c.h.b16 %v3792
        %v3944 = vunpack.c.l.b16 %v3793
        %v3945 = vunpack.c.h.b16 %v3793
        %v3946 = vunpack.c.l.b16 %v3794
        %v3947 = vunpack.c.h.b16 %v3794
        %v3948 = vunpack.c.l.b16 %v3795
        %v3949 = vunpack.c.h.b16 %v3795
        %v3950 = vunpack.c.l.b16 %v3796
        %v3951 = vunpack.c.h.b16 %v3796
        %v3952 = vunpack.c.l.b16 %v3797
        %v3953 = vunpack.c.h.b16 %v3797
        %v3954 = vunpack.c.l.b16 %v3798
        %v3955 = vunpack.c.h.b16 %v3798
        %v3956 = vunpack.c.l.b16 %v3799
        %v3957 = vunpack.c.h.b16 %v3799
        %v3958 = vunpack.c.l.b16 %v3800
        %v3959 = vunpack.c.h.b16 %v3800
        %v3960 = vunpack.c.l.b16 %v3801
        %v3961 = vunpack.c.h.b16 %v3801
        %v3962 = vunpack.c.l.b16 %v3802
        %v3963 = vunpack.c.h.b16 %v3802
        %v3964 = vunpack.c.l.b16 %v3803
        %v3965 = vunpack.c.h.b16 %v3803
        %v3966 = vunpack.c.l.b16 %v3804
        %v3967 = vunpack.c.h.b16 %v3804
        %v3968 = vunpack.c.l.b16 %v3805
        %v3969 = vunpack.c.h.b16 %v3805
        %v3970 = vunpack.c.l.b16 %v3806
        %v3971 = vunpack.c.h.b16 %v3806
        %v3972 = vunpack.c.l.b16 %v3807
        %v3973 = vunpack.c.h.b16 %v3807
        %v3974 = vunpack.c.l.b16 %v3808
        %v3975 = vunpack.c.h.b16 %v3808
        %v3976 = vunpack.c.l.b16 %v3809
        %v3977 = vunpack.c.h.b16 %v3809
        %v3978 = vunpack.c.l.b16 %v3810
        %v3979 = vunpack.c.h.b16 %v3810
        %v3980 = vunpack.c.l.b16 %v3811
        %v3981 = vunpack.c.h.b16 %v3811
        %v3982 = vunpack.c.l.b16 %v3812
        %v3983 = vunpack.c.h.b16 %v3812
        %v3984 = vunpack.c.l.b16 %v3813
        %v3985 = vunpack.c.h.b16 %v3813
        %v3986 = vunpack.c.l.b16 %v3814
        %v3987 = vunpack.c.h.b16 %v3814
        %v3988 = vunpack.c.l.b16 %v3815
        %v3989 = vunpack.c.h.b16 %v3815
        %v3990 = vunpack.c.l.b16 %v3816
        %v3991 = vunpack.c.h.b16 %v3816
        %v3992 = vunpack.c.l.b16 %v3817
        %v3993 = vunpack.c.h.b16 %v3817
        %v3994 = vunpack.c.l.b16 %v3818
        %v3995 = vunpack.c.h.b16 %v3818
        %v3996 = vunpack.c.l.b16 %v3819
        %v3997 = vunpack.c.h.b16 %v3819
        %v3998 = vunpack.c.l.b16 %v3820
        %v3999 = vunpack.c.h.b16 %v3820
        %v4000 = vunpack.c.l.b16 %v3821
        %v4001 = vunpack.c.h.b16 %v3821
        %v4002 = vunpack.c.l.b16 %v3822
        %v4003 = vunpack.c.h.b16 %v3822
        %v4004 = vunpack.c.l.b16 %v3823
        %v4005 = vunpack.c.h.b16 %v3823
        %v4006 = vunpack.c.l.b16 %v3824
        %v4007 = vunpack.c.h.b16 %v3824
        %v4008 = vunpack.c.l.b16 %v3825
        %v4009 = vunpack.c.h.b16 %v3825
        %v4010 = vunpack.c.l.b16 %v3826
        %v4011 = vunpack.c.h.b16 %v3826
        %v4012 = vunpack.c.l.b16 %v3827
        %v4013 = vunpack.c.h.b16 %v3827
        %v4014 = vunpack.c.l.b16 %v3828
        %v4015 = vunpack.c.h.b16 %v3828
        %v4016 = vunpack.c.l.b16 %v3829
        %v4017 = vunpack.c.h.b16 %v3829
        %v4018 = vunpack.c.l.b16 %v3830
        %v4019 = vunpack.c.h.b16 %v3830
        %v4020 = vunpack.c.l.b16 %v3831
        %v4021 = vunpack.c.h.b16 %v3831
        %v4022 = vunpack.c.l.b16 %v3832
        %v4023 = vunpack.c.h.b16 %v3832
        %v4024 = vunpack.c.l.b16 %v3833
        %v4025 = vunpack.c.h.b16 %v3833
        %v4026 = vunpack.c.l.b16 %v3834
        %v4027 = vunpack.c.h.b16 %v3834
        %v4028 = vunpack.c.l.b16 %v3835
        %v4029 = vunpack.c.h.b16 %v3835
        %v4030 = vunpack.c.l.b16 %v3836
        %v4031 = vunpack.c.h.b16 %v3836
        %v4032 = vunpack.c.l.b16 %v3837
        %v4033 = vunpack.c.h.b16 %v3837
        %v4034 = vunpack.c.l.b16 %v3838
        %v4035 = vunpack.c.h.b16 %v3838
        %v4036 = vunpack.c.l.b16 %v3839
        %v4037 = vunpack.c.h.b16 %v3839
        %v4038 = vunpack.c.l.b16 %v3840
        %v4039 = vunpack.c.h.b16 %v3840
        %v4040 = vunpack.c.l.b16 %v3841
        %v4041 = vunpack.c.h.b16 %v3841
        %v4042 = vunpack.c.l.b16 %v3842
        %v4043 = vunpack.c.h.b16 %v3842
        %v4044 = vunpack.c.l.b16 %v3843
        %v4045 = vunpack.c.h.b16 %v3843
        %v4046 = vunpack.c.l.b16 %v3844
        %v4047 = vunpack.c.h.b16 %v3844
        %v4048 = vunpack.c.l.b16 %v3845
        %v4049 = vunpack.c.h.b16 %v3845
        %v4050 = vpack.c.b16 %v3924, %v3922
        %v4051 = vpack.c.b16 %v3925, %v3923
        %v4052 = vpack.c.b16 %v3928, %v3926
        %v4053 = vpack.c.b16 %v3929, %v3927
        %v4054 = vpack.c.b16 %v3932, %v3930
        %v4055 = vpack.c.b16 %v3933, %v3931
        %v4056 = vpack.c.b16 %v3936, %v3934
        %v4057 = vpack.c.b16 %v3937, %v3935
        %v4058 = vpack.c.b16 %v3940, %v3938
        %v4059 = vpack.c.b16 %v3941, %v3939
        %v4060 = vpack.c.b16 %v3944, %v3942
        %v4061 = vpack.c.b16 %v3945, %v3943
        %v4062 = vpack.c.b16 %v3948, %v3946
        %v4063 = vpack.c.b16 %v3949, %v3947
        %v4064 = vpack.c.b16 %v3952, %v3950
        %v4065 = vpack.c.b16 %v3953, %v3951
        %v4066 = vpack.c.b16 %v3956, %v3954
        %v4067 = vpack.c.b16 %v3957, %v3955
        %v4068 = vpack.c.b16 %v3960, %v3958
        %v4069 = vpack.c.b16 %v3961, %v3959
        %v4070 = vpack.c.b16 %v3964, %v3962
        %v4071 = vpack.c.b16 %v3965, %v3963
        %v4072 = vpack.c.b16 %v3968, %v3966
        %v4073 = vpack.c.b16 %v3969, %v3967
        %v4074 = vpack.c.b16 %v3972, %v3970
        %v4075 = vpack.c.b16 %v3973, %v3971
        %v4076 = vpack.c.b16 %v3976, %v3974
        %v4077 = vpack.c.b16 %v3977, %v3975
        %v4078 = vpack.c.b16 %v3980, %v3978
        %v4079 = vpack.c.b16 %v3981, %v3979
        %v4080 = vpack.c.b16 %v3984, %v3982
        %v4081 = vpack.c.b16 %v3985, %v3983
        %v4082 = vpack.c.b16 %v3988, %v3986
        %v4083 = vpack.c.b16 %v3989, %v3987
        %v4084 = vpack.c.b16 %v3992, %v3990
        %v4085 = vpack.c.b16 %v3993, %v3991
        %v4086 = vpack.c.b16 %v3996, %v3994
        %v4087 = vpack.c.b16 %v3997, %v3995
        %v4088 = vpack.c.b16 %v4000, %v3998
        %v4089 = vpack.c.b16 %v4001, %v3999
        %v4090 = vpack.c.b16 %v4004, %v4002
        %v4091 = vpack.c.b16 %v4005, %v4003
        %v4092 = vpack.c.b16 %v4008, %v4006
        %v4093 = vpack.c.b16 %v4009, %v4007
        %v4094 = vpack.c.b16 %v4012, %v4010
        %v4095 = vpack.c.b16 %v4013, %v4011
        %v4096 = vpack.c.b16 %v4016, %v4014
        %v4097 = vpack.c.b16 %v4017, %v4015
        %v4098 = vpack.c.b16 %v4020, %v4018
        %v4099 = vpack.c.b16 %v4021, %v4019
        %v4100 = vpack.c.b16 %v4024, %v4022
        %v4101 = vpack.c.b16 %v4025, %v4023
        %v4102 = vpack.c.b16 %v4028, %v4026
        %v4103 = vpack.c.b16 %v4029, %v4027
        %v4104 = vpack.c.b16 %v4032, %v4030
        %v4105 = vpack.c.b16 %v4033, %v4031
        %v4106 = vpack.c.b16 %v4036, %v4034
        %v4107 = vpack.c.b16 %v4037, %v4035
        %v4108 = vpack.c.b16 %v4040, %v4038
        %v4109 = vpack.c.b16 %v4041, %v4039
        %v4110 = vpack.c.b16 %v4044, %v4042
        %v4111 = vpack.c.b16 %v4045, %v4043
        %v4112 = vpack.c.b16 %v4048, %v4046
        %v4113 = vpack.c.b16 %v4049, %v4047
        %4178 = vmatprep.subr.bf16.mxu0 %v4051
        %4179 = vmatpush1.bf16.msra.mxu0 %v4050
        %4180 = vmatprep.subr.bf16.mxu0 %v4053
        %4181 = vmatpush1.bf16.msra.mxu0 %v4052
        %4182 = vmatprep.subr.bf16.mxu0 %v4055
        %4183 = vmatpush1.bf16.msra.mxu0 %v4054
        %4184 = vmatprep.subr.bf16.mxu0 %v4057
        %4185 = vmatpush1.bf16.msra.mxu0 %v4056
        %4186 = vmatprep.subr.bf16.mxu0 %v4059
        %4187 = vmatpush1.bf16.msra.mxu0 %v4058
        %4188 = vmatprep.subr.bf16.mxu0 %v4061
        %4189 = vmatpush1.bf16.msra.mxu0 %v4060
        %4190 = vmatprep.subr.bf16.mxu0 %v4063
        %4191 = vmatpush1.bf16.msra.mxu0 %v4062
        %4192 = vmatprep.subr.bf16.mxu0 %v4065
        %4193 = vmatpush1.bf16.msra.mxu0 %v4064
        %4194 = vmatprep.subr.bf16.mxu0 %v4067
        %4195 = vmatpush1.bf16.msra.mxu0 %v4066
        %4196 = vmatprep.subr.bf16.mxu0 %v4069
        %4197 = vmatpush1.bf16.msra.mxu0 %v4068
        %4198 = vmatprep.subr.bf16.mxu0 %v4071
        %4199 = vmatpush1.bf16.msra.mxu0 %v4070
        %4200 = vmatprep.subr.bf16.mxu0 %v4073
        %4201 = vmatpush1.bf16.msra.mxu0 %v4072
        %4202 = vmatprep.subr.bf16.mxu0 %v4075
        %4203 = vmatpush1.bf16.msra.mxu0 %v4074
        %4204 = vmatprep.subr.bf16.mxu0 %v4077
        %4205 = vmatpush1.bf16.msra.mxu0 %v4076
        %4206 = vmatprep.subr.bf16.mxu0 %v4079
        %4207 = vmatpush1.bf16.msra.mxu0 %v4078
        %4208 = vmatprep.subr.bf16.mxu0 %v4081
        %4209 = vmatpush1.bf16.msra.mxu0 %v4080
        %4210 = vmatprep.mubr.bf16.mxu0 %v3779
        %4211 = vmatmul.mubr.bf16.gmra.mrb[0].mxu0 %v3778
        %v4212 = vpop.f32.mrb[0].mxu0
        %v4213 = vadd.f32 %v3851, %v4212
        %v4214 = vpop.f32.mrb[0].mxu0
        %v4215 = vadd.f32 %v3855, %v4214
        %v4216 = vpop.f32.mrb[0].mxu0
        %v4217 = vpop.f32.mrb[0].mxu0
        %4218 = vdwg.mxu0
        %4219 = vmatprep.subr.bf16.mxu0 %v4083
        %4220 = vmatpush1.bf16.msra.mxu0 %v4082
        %4221 = vmatprep.subr.bf16.mxu0 %v4085
        %4222 = vmatpush1.bf16.msra.mxu0 %v4084
        %4223 = vmatprep.subr.bf16.mxu0 %v4087
        %4224 = vmatpush1.bf16.msra.mxu0 %v4086
        %4225 = vmatprep.subr.bf16.mxu0 %v4089
        %4226 = vmatpush1.bf16.msra.mxu0 %v4088
        %4227 = vmatprep.subr.bf16.mxu0 %v4091
        %4228 = vmatpush1.bf16.msra.mxu0 %v4090
        %4229 = vmatprep.subr.bf16.mxu0 %v4093
        %4230 = vmatpush1.bf16.msra.mxu0 %v4092
        %4231 = vmatprep.subr.bf16.mxu0 %v4095
        %4232 = vmatpush1.bf16.msra.mxu0 %v4094
        %4233 = vmatprep.subr.bf16.mxu0 %v4097
        %4234 = vmatpush1.bf16.msra.mxu0 %v4096
        %4235 = vmatprep.subr.bf16.mxu0 %v4099
        %4236 = vmatpush1.bf16.msra.mxu0 %v4098
        %4237 = vmatprep.subr.bf16.mxu0 %v4101
        %4238 = vmatpush1.bf16.msra.mxu0 %v4100
        %4239 = vmatprep.subr.bf16.mxu0 %v4103
        %4240 = vmatpush1.bf16.msra.mxu0 %v4102
        %4241 = vmatprep.subr.bf16.mxu0 %v4105
        %4242 = vmatpush1.bf16.msra.mxu0 %v4104
        %4243 = vmatprep.subr.bf16.mxu0 %v4107
        %4244 = vmatpush1.bf16.msra.mxu0 %v4106
        %4245 = vmatprep.subr.bf16.mxu0 %v4109
        %4246 = vmatpush1.bf16.msra.mxu0 %v4108
        %4247 = vmatprep.subr.bf16.mxu0 %v4111
        %4248 = vmatpush1.bf16.msra.mxu0 %v4110
        %4249 = vmatprep.subr.bf16.mxu0 %v4113
        %4250 = vmatpush1.bf16.msra.mxu0 %v4112
        %4251 = vmatprep.mubr.bf16.mxu0 %v3781
        %4252 = vmatmul.mubr.bf16.gmra.mrb[0].mxu0 %v3780
        %v4253 = vpop.f32.mrb[0].mxu0
        %v4254 = vadd.f32 %v4213, %v4253
        %v4255 = vpop.f32.mrb[0].mxu0
        %v4256 = vadd.f32 %v4215, %v4255
        %v4257 = vpop.f32.mrb[0].mxu0
        %v4258 = vpop.f32.mrb[0].mxu0
        %4259 = vdwg.mxu0
        %v4260 = vmul.f32 %v4254, %v4254
        %v4261 = vmul.f32 %v4256, %v4256
        %v4262 = vadd.f32 %v4260, %v4261
        %4263 = vadd.xlane.f32.xlu0 %v4262
        %v4264 = vpop.xlane.xlu0 %4263
        %v4265 = vmax.f32 %v4264, 1e-24
        %v4266 = vrsqrt.pop %v4265
        %v4267 = vmul.f32 %v4254, %v4266
        %v4268 = vmul.f32 %v4256, %v4266
        %4269 = vst [vmem:[%s375] sm:$0xff] %v4267
        %4270 = vst [vmem:[%s375 + $0x8] sm:$0xff] %v4268
        %s4271 = sand.u32 %s187, 1
        %s4272 = scalar_lea.sflag [#allocation4], %s4271
        %s4273 = sand.u32 %s187, 1
        %s4274 = smul.addr %s4273, 16
        %s4275 = scalar_lea.vmem [#allocation14], %s4274
        // Predicated region
        $region77: #{net_embed_mlp.1} parent=47 // pred_check
          %p4276 = pneg %p197
        $region78: #{net_embed_mlp.1} parent=47 // pred_check_branch
          %4278 = sbr.rel (%p4276) target = $region80
        $region79: #{net_embed_mlp.1} parent=47 // pred_region
          %s4280 = ssub.s32 256, 256
          %4281 = vsyncadd %s4272, %s4280
          %s4282 = smul.addr %s27, 2
          %s4283 = smul.addr %s4282, 128
          %s4284 = scalar_lea.hbm %s7, %s4283
          %s4286 = sshll.u32 %s4275, 4
          %s4287 = int_to_ptr.vmem [resolvable:$true] %s4286
          %4289 = dma.vmem_to_hbm [thread:$0]  %s4287, 256, %s4284, %s4272
        $region80: #{net_embed_mlp.1} parent=47 // pred_fallthru
          _
      $region48: #{net_embed_mlp.1} parent=5 // pred_fallthru
        _
      %p4290 = scmp.le.s32.totalorder 2, %s22
      // Predicated region
      $region81: #{net_embed_mlp.1} parent=5 // pred_check
        %p4291 = pneg %p4290
      $region82: #{net_embed_mlp.1} parent=5 // pred_check_branch
        %4293 = sbr.rel (%p4291) target = $region84
      $region83: #{net_embed_mlp.1} parent=5 // pred_region
        %s4294 = ssub.s32 %s22, 2
        // Predicated region
        $region85: #{net_embed_mlp.1} parent=83 // pred_check
          %p4295 = pneg %p203
        $region86: #{net_embed_mlp.1} parent=83 // pred_check_branch
          %4297 = sbr.rel (%p4295) target = $region88
        $region87: #{net_embed_mlp.1} parent=83 // pred_region
          %s4298 = sand.u32 %s188, 1
          %s4299 = scalar_lea.sflag [#allocation4], %s4298
          %s4300 = sand.u32 %s188, 1
          %s4301 = smul.addr %s4300, 16
          %s4302 = scalar_lea.vmem [#allocation14], %s4301
          %4303 = dma.done %s4299, 256
        $region88: #{net_embed_mlp.1} parent=83 // pred_fallthru
          _
      $region84: #{net_embed_mlp.1} parent=5 // pred_fallthru
        _
    $region6: #{net_embed_mlp.1} parent=1 // loop_footer
      %s26 = sadd.s32 1, %s22
    $region7: #{net_embed_mlp.1} parent=1 // loop_footer_branch
      %21 = sbr.rel target = $region3
    $region8: #{net_embed_mlp.1} parent=1 // loop_exit
      _
    %4304 = vsyncpa [#allocation3], 1
    %s4305 = scalar_lea.sflag [#allocation3], 1
    %4306 = vsyncpa %s4305, 1
    %4307 = vsyncpa [#allocation6], 1
    %4308 = vsyncpa [#allocation9], 1
    %4309 = vsyncpa [#allocation12], 1
    %4310 = vsyncpa [#allocation4], 1
    %s4311 = scalar_lea.sflag [#allocation4], 1
    %4312 = vsyncpa %s4311, 1

</llo_original>
